<compile_context>
chip_gen: v5e
topology: v5e:2x2
jax: 0.10.0
libtpu: 0.0.40
codegen_flags: <defaults>
</compile_context>

<pallas_src>
import functools

import jax
import jax.numpy as jnp
from jax.experimental import pallas as pl
from jax.experimental.pallas import tpu as pltpu


# ---------------------------------------------------------------------------
# Kernel 1: pre-encode feed-forward (Linear+ReLU) fused with the encoder
# BiLSTM input-gate projection.  Row-tiled over the flattened (T*B) axis.
#   g = relu(x @ W1 + b1) @ Wx_enc + b_enc, split into fwd / bwd gate halves.
# ---------------------------------------------------------------------------
def _ffn_gates_kernel(x_ref, w1_ref, b1_ref, wx_ref, bx_ref, gf_ref, gb_ref):
    h = jnp.dot(x_ref[...], w1_ref[...],
                preferred_element_type=jnp.float32) + b1_ref[...]
    h = jnp.maximum(h, 0.0)
    g = jnp.dot(h, wx_ref[...], preferred_element_type=jnp.float32) + bx_ref[...]
    half = gf_ref.shape[-1]
    gf_ref[...] = g[:, :half].astype(gf_ref.dtype)
    gb_ref[...] = g[:, half:].astype(gb_ref.dtype)


# ---------------------------------------------------------------------------
# Kernel 2: masked bidirectional LSTM recurrence (input gates precomputed).
# Per-direction gate column layout (width H blocks): [i, f, o, g].
# Forward consumes gxf[t], backward consumes gxb[T-1-t]; no selects, no output
# read-modify-write.  Masked state updates reproduce packed-sequence semantics
# for right padding (padded steps emit exact zeros and do not update h/c; the
# reverse direction effectively starts at each sequence's last real token).
# ---------------------------------------------------------------------------
def _bilstm_kernel(gxf_ref, gxb_ref, m_ref, whf_ref, whb_ref, out_ref,
                   hf_ref, hb_ref, cf_ref, cb_ref):
    T = gxf_ref.shape[0]
    H = hf_ref.shape[1]

    hf_ref[...] = jnp.zeros_like(hf_ref)
    hb_ref[...] = jnp.zeros_like(hb_ref)
    cf_ref[...] = jnp.zeros_like(cf_ref)
    cb_ref[...] = jnp.zeros_like(cb_ref)

    # loop-invariant weights, hoisted out of the recurrence
    whf = whf_ref[...]                                   # (H, 4H)
    whb = whb_ref[...]                                   # (H, 4H)

    def lstm_step(gx_row, m_row, h_prev, c_prev, whh):
        gates = gx_row.astype(jnp.float32) + jnp.dot(
            h_prev, whh, preferred_element_type=jnp.float32)      # (Bc, 4H)
        sig = jax.nn.sigmoid(gates[:, 0:3 * H])                   # [i, f, o]
        g = jnp.tanh(gates[:, 3 * H:4 * H])
        c_new = sig[:, H:2 * H] * c_prev + sig[:, 0:H] * g
        h_new = sig[:, 2 * H:3 * H] * jnp.tanh(c_new)
        h_m = m_row * h_new                        # exact zeros at padded steps
        h_keep = h_m + (1.0 - m_row) * h_prev
        c_keep = m_row * c_new + (1.0 - m_row) * c_prev
        return h_m, h_keep, c_keep

    @pl.loop(0, T)
    def _(t):
        rt = T - 1 - t
        hf_m, hf_new, cf_new = lstm_step(gxf_ref[t], m_ref[t],
                                         hf_ref[...], cf_ref[...], whf)
        hb_m, hb_new, cb_new = lstm_step(gxb_ref[rt], m_ref[rt],
                                         hb_ref[...], cb_ref[...], whb)
        hf_ref[...] = hf_new
        cf_ref[...] = cf_new
        hb_ref[...] = hb_new
        cb_ref[...] = cb_new
        # contiguous half-row stores (no load of out_ref, no selects)
        out_ref[t, :, 0:H] = hf_m
        out_ref[rt, :, H:2 * H] = hb_m


# ---------------------------------------------------------------------------
# Kernel 3: biattention fused with the integrator input-gate projection.
# Grid over (batch-chunk, query-tile); per batch element:
#   logits = enc_q @ enc^T ; w = masked_softmax(logits) ; ctx = w @ enc
#   gates  = [enc_q, enc_q - ctx, enc_q * ctx] @ Wx_int + b_int
# Never materializes (B,T,T) logits; per-batch results stored directly.
# ---------------------------------------------------------------------------
def _biatt_gates_kernel(q_ref, k_ref, mask_ref, wint_ref, bint_ref,
                        gf_ref, gb_ref):
    Bc = q_ref.shape[1]
    half = gf_ref.shape[-1]                               # 4 * Hi

    wint = wint_ref[...]                                  # (3D, 8Hi)
    bint = bint_ref[...]                                  # (1, 8Hi)

    for b in range(Bc):
        qb = q_ref[:, b, :]                               # (tq, D)
        kb = k_ref[:, b, :]                               # (T, D)
        mrow = mask_ref[b:b + 1, :]                       # (1, T)

        # NT matmul (attention QK^T form) -- Mosaic lowers this natively.
        logits = jax.lax.dot_general(
            qb, kb, (((1,), (1,)), ((), ())),
            preferred_element_type=jnp.float32)           # (tq, T)
        # AllenNLP masked_softmax: softmax(v * m) * m / (sum + 1e-13)
        ml = logits * mrow
        e = jnp.exp(ml - jnp.max(ml, axis=-1, keepdims=True))
        w = e * pl.reciprocal(jnp.sum(e, axis=-1, keepdims=True), approx=True)
        w = w * mrow
        w = w * pl.reciprocal(jnp.sum(w, axis=-1, keepdims=True) + 1e-13,
                              approx=True)
        ctx = jnp.dot(w, kb, preferred_element_type=jnp.float32)  # (tq, D)

        # single deep-K MXU push instead of three K=D pushes
        feats = jnp.concatenate([qb, qb - ctx, qb * ctx], axis=-1)  # (tq, 3D)
        g = jnp.dot(feats, wint, preferred_element_type=jnp.float32) + bint
        gf_ref[:, b, :] = g[:, :half].astype(gf_ref.dtype)
        gb_ref[:, b, :] = g[:, half:].astype(gb_ref.dtype)


# ---------------------------------------------------------------------------
# Kernel 4: max/min/mean/self-attentive pooling + Maxout output + softmax.
# Maxout weights pre-permuted pool-major so the max is a reduction over
# pool_size contiguous (B, num_classes) slices.
# ---------------------------------------------------------------------------
def _pool_maxout_kernel(x_ref, m_ref, watt_ref, batt_ref, wout_ref, bout_ref,
                        logits_ref, probs_ref, *, num_classes, pool_size):
    x = x_ref[...]                                        # (T, Bc, D)
    m3 = m_ref[...]                                       # (T, Bc, 1)
    big = 1.0e7
    keep = m3 > 0.5

    max_pool = jnp.max(jnp.where(keep, x, -big), axis=0)            # (Bc, D)
    min_pool = jnp.min(jnp.where(keep, x, big), axis=0)
    # relies on the BiLSTM writing exact zeros at padded timesteps (it does)
    mean_pool = jnp.sum(x, axis=0) / jnp.sum(m3, axis=0)

    # self-attentive pooling: Linear(D,1) -> masked softmax over T -> sum
    att = (jnp.sum(x * watt_ref[...][None, :, :], axis=-1, keepdims=True)
           + batt_ref[0, 0])                                         # (T, Bc, 1)
    att_m = att * m3
    e = jnp.exp(att_m - jnp.max(att_m, axis=0, keepdims=True))
    w = e * pl.reciprocal(jnp.sum(e, axis=0, keepdims=True), approx=True)
    w = w * m3
    w = w * pl.reciprocal(jnp.sum(w, axis=0, keepdims=True) + 1e-13, approx=True)
    self_pool = jnp.sum(w * x, axis=0)                               # (Bc, D)

    pooled = jnp.concatenate([max_pool, min_pool, mean_pool, self_pool], axis=1)
    affine = (jnp.dot(pooled, wout_ref[...], preferred_element_type=jnp.float32)
              + bout_ref[...])                                       # (Bc, P*C)

    logits = affine[:, 0:num_classes]
    for p in range(1, pool_size):
        logits = jnp.maximum(
            logits, affine[:, p * num_classes:(p + 1) * num_classes])
    logits_ref[...] = logits

    lmax = jnp.max(logits, axis=-1, keepdims=True)
    ee = jnp.exp(logits - lmax)
    probs_ref[...] = ee / jnp.sum(ee, axis=-1, keepdims=True)


# ---------------------------------------------------------------------------
# Tiling helpers
# ---------------------------------------------------------------------------
def _round_up(n, m):
    return ((n + m - 1) // m) * m


def _pick_row_block(n, cap=1024):
    """Row block for the flattened (T*B) FFN grid (multiple of 16 when tiling)."""
    if n <= cap:
        return n
    base = cap - cap % 16
    cand = base
    while cand >= 16:
        if n % cand == 0:
            return cand
        cand -= 16
    return base            # caller pads n up to a multiple of the block


def _pick_time_tile(n, cap=128):
    t = min(n, cap)
    while n % t:
        t -= 1
    return t


def _pick_batch_chunks(b, max_chunks=8):
    """Chunk count nb with b % nb == 0 and (b // nb) % 8 == 0, else 1."""
    for nb in range(min(max_chunks, b), 1, -1):
        if b % nb == 0 and (b // nb) % 8 == 0:
            return nb
    return 1


# ---------------------------------------------------------------------------
# Forward wrapper
# ---------------------------------------------------------------------------
def bcn_forward(embedded_text, text_mask, params, *, num_classes, pool_size,
                gate_dtype=jnp.bfloat16):
    """embedded_text: (B, T, E) float32, text_mask: (B, T) float32."""
    B, T, E = embedded_text.shape
    P1 = params["ff_w"].shape[1]
    He = params["enc"]["whh_f"].shape[0]
    Hi = params["int"]["whh_f"].shape[0]
    D_enc, D_int = 2 * He, 2 * Hi

    # single layout change at the boundary: batch-major -> time-major
    x_tbe = jnp.transpose(embedded_text, (1, 0, 2))          # (T, B, E)
    m_tb1 = jnp.transpose(text_mask, (1, 0))[:, :, None]     # (T, B, 1)

    nb = _pick_batch_chunks(B)
    Bc = B // nb

    # ---- pre-encode FFN fused with encoder input-gate projection ----------
    N = T * B
    rb = _pick_row_block(N)
    n_pad = _round_up(N, rb)
    x_flat = x_tbe.reshape(N, E)
    if n_pad != N:
        x_flat = jnp.pad(x_flat, ((0, n_pad - N), (0, 0)))
    gxf_enc, gxb_enc = pl.pallas_call(
        _ffn_gates_kernel,
        out_shape=(jax.ShapeDtypeStruct((n_pad, 4 * He), gate_dtype),
                   jax.ShapeDtypeStruct((n_pad, 4 * He), gate_dtype)),
        grid=(n_pad // rb,),
        in_specs=[
            pl.BlockSpec((rb, E), lambda i: (i, 0)),
            pl.BlockSpec((E, P1), lambda i: (0, 0),
                         pipeline_mode=pl.Buffered(1)),
            pl.BlockSpec((1, P1), lambda i: (0, 0),
                         pipeline_mode=pl.Buffered(1)),
            pl.BlockSpec((P1, 8 * He), lambda i: (0, 0),
                         pipeline_mode=pl.Buffered(1)),
            pl.BlockSpec((1, 8 * He), lambda i: (0, 0),
                         pipeline_mode=pl.Buffered(1)),
        ],
        out_specs=(pl.BlockSpec((rb, 4 * He), lambda i: (i, 0)),
                   pl.BlockSpec((rb, 4 * He), lambda i: (i, 0))),
        compiler_params=pltpu.CompilerParams(dimension_semantics=("parallel",)),
    )(x_flat, params["ff_w"], params["ff_b"],
      params["enc"]["wx"], params["enc"]["b"])
    gxf_enc = gxf_enc[:N].reshape(T, B, 4 * He)
    gxb_enc = gxb_enc[:N].reshape(T, B, 4 * He)

    # ---- encoder BiLSTM (recurrence only), batch-chunk parallel ------------
    def _bilstm_call(gxf, gxb, whh_f, whh_b, h):
        return pl.pallas_call(
            _bilstm_kernel,
            out_shape=jax.ShapeDtypeStruct((T, B, 2 * h), jnp.float32),
            grid=(nb,),
            in_specs=[
                pl.BlockSpec((T, Bc, 4 * h), lambda j: (0, j, 0)),
                pl.BlockSpec((T, Bc, 4 * h), lambda j: (0, j, 0)),
                pl.BlockSpec((T, Bc, 1), lambda j: (0, j, 0)),
                pl.BlockSpec((h, 4 * h), lambda j: (0, 0),
                             pipeline_mode=pl.Buffered(1)),
                pl.BlockSpec((h, 4 * h), lambda j: (0, 0),
                             pipeline_mode=pl.Buffered(1)),
            ],
            out_specs=pl.BlockSpec((T, Bc, 2 * h), lambda j: (0, j, 0)),
            scratch_shapes=[pltpu.VMEM((Bc, h), jnp.float32)] * 4,
            compiler_params=pltpu.CompilerParams(
                dimension_semantics=("parallel",)),
        )(gxf, gxb, m_tb1, whh_f, whh_b)

    encoded = _bilstm_call(gxf_enc, gxb_enc,
                           params["enc"]["whh_f"], params["enc"]["whh_b"], He)

    # ---- biattention fused with integrator input-gate projection ----------
    tq = _pick_time_tile(T, 128)
    gxf_int, gxb_int = pl.pallas_call(
        _biatt_gates_kernel,
        out_shape=(jax.ShapeDtypeStruct((T, B, 4 * Hi), jnp.float32),
                   jax.ShapeDtypeStruct((T, B, 4 * Hi), jnp.float32)),
        grid=(nb, T // tq),
        in_specs=[
            pl.BlockSpec((tq, Bc, D_enc), lambda j, i: (i, j, 0)),
            pl.BlockSpec((T, Bc, D_enc), lambda j, i: (0, j, 0),
                         pipeline_mode=pl.Buffered(1)),
            pl.BlockSpec((Bc, T), lambda j, i: (j, 0),
                         pipeline_mode=pl.Buffered(1)),
            pl.BlockSpec((3 * D_enc, 8 * Hi), lambda j, i: (0, 0),
                         pipeline_mode=pl.Buffered(1)),
            pl.BlockSpec((1, 8 * Hi), lambda j, i: (0, 0),
                         pipeline_mode=pl.Buffered(1)),
        ],
        out_specs=(pl.BlockSpec((tq, Bc, 4 * Hi), lambda j, i: (i, j, 0)),
                   pl.BlockSpec((tq, Bc, 4 * Hi), lambda j, i: (i, j, 0))),
        compiler_params=pltpu.CompilerParams(
            dimension_semantics=("parallel", "parallel")),
    )(encoded, encoded, text_mask, params["int"]["wx"], params["int"]["b"])

    # ---- integrator BiLSTM --------------------------------------------------
    integrated = _bilstm_call(gxf_int, gxb_int,
                              params["int"]["whh_f"], params["int"]["whh_b"], Hi)

    # ---- pooling + Maxout output layer + softmax ----------------------------
    logits, probs = pl.pallas_call(
        functools.partial(_pool_maxout_kernel,
                          num_classes=num_classes, pool_size=pool_size),
        out_shape=(jax.ShapeDtypeStruct((B, num_classes), jnp.float32),
                   jax.ShapeDtypeStruct((B, num_classes), jnp.float32)),
        grid=(nb,),
        in_specs=[
            pl.BlockSpec((T, Bc, D_int), lambda j: (0, j, 0)),
            pl.BlockSpec((T, Bc, 1), lambda j: (0, j, 0)),
            pl.BlockSpec((1, D_int), lambda j: (0, 0),
                         pipeline_mode=pl.Buffered(1)),
            pl.BlockSpec((1, 1), lambda j: (0, 0),
                         pipeline_mode=pl.Buffered(1)),
            pl.BlockSpec((4 * D_int, pool_size * num_classes), lambda j: (0, 0),
                         pipeline_mode=pl.Buffered(1)),
            pl.BlockSpec((1, pool_size * num_classes), lambda j: (0, 0),
                         pipeline_mode=pl.Buffered(1)),
        ],
        out_specs=(pl.BlockSpec((Bc, num_classes), lambda j: (j, 0)),
                   pl.BlockSpec((Bc, num_classes), lambda j: (j, 0))),
        compiler_params=pltpu.CompilerParams(dimension_semantics=("parallel",)),
    )(integrated, m_tb1, params["watt"], params["batt"],
      params["wout"], params["bout"])

    return {"logits": logits, "class_probabilities": probs}


# ---------------------------------------------------------------------------
# Parameter construction (PyTorch conventions, then packed for the kernels)
# ---------------------------------------------------------------------------
def _reorder_ifgo_to_ifog(w, h):
    # columns [i, f, g, o] (PyTorch order) -> [i, f, o, g]
    return jnp.concatenate(
        [w[:, 0:2 * h], w[:, 3 * h:4 * h], w[:, 2 * h:3 * h]], axis=1)


def make_lstm_params(key, din, h):
    k = jax.random.split(key, 8)

    def r(kk, shape):
        return 0.1 * jax.random.normal(kk, shape, dtype=jnp.float32)

    # PyTorch shapes: W_ih (4h, din), W_hh (4h, h), gate rows [i, f, g, o]
    wih_f, whh_f = r(k[0], (4 * h, din)), r(k[1], (4 * h, h))
    bih_f, bhh_f = r(k[2], (4 * h,)), r(k[3], (4 * h,))
    wih_b, whh_b = r(k[4], (4 * h, din)), r(k[5], (4 * h, h))
    bih_b, bhh_b = r(k[6], (4 * h,)), r(k[7], (4 * h,))

    def prep(w):   # torch (4h, X) [i,f,g,o] rows -> (X, 4h) [i,f,o,g] cols
        return _reorder_ifgo_to_ifog(w.T, h)

    wx = jnp.concatenate([prep(wih_f), prep(wih_b)], axis=1)        # (din, 8h)
    b = jnp.concatenate(
        [_reorder_ifgo_to_ifog((bih_f + bhh_f)[None, :], h),
         _reorder_ifgo_to_ifog((bih_b + bhh_b)[None, :], h)], axis=1)  # (1, 8h)
    return {"wx": wx, "b": b, "whh_f": prep(whh_f), "whh_b": prep(whh_b)}


def _pack_maxout(w_torch, b_torch, num_classes, pool_size):
    # torch weight (C*P, Din) / bias (C*P,), flattened class-major (c*P + p)
    # -> right-multiplied (Din, P*C) pool-major columns (+ matching bias).
    din = w_torch.shape[1]
    w = w_torch.T.reshape(din, num_classes, pool_size)
    w = jnp.transpose(w, (0, 2, 1)).reshape(din, pool_size * num_classes)
    br = jnp.transpose(b_torch.reshape(num_classes, pool_size),
                       (1, 0)).reshape(1, pool_size * num_classes)
    return w, br


if __name__ == "__main__":
    B, T, E = 2, 16, 32          # batch, seq, embedding_dim (no input ELMo)
    PRE = 32                     # pre_encode_dim
    ENC = 16                     # encoder_dim     -> encoded width 2*ENC
    INT = 16                     # integrator_dim  -> integrated width 2*INT
    NUM_CLASSES, POOL = 4, 2     # output_dim, output_pool_size

    root = jax.random.PRNGKey(0)
    keys = jax.random.split(root, 8)

    ff_w = 0.1 * jax.random.normal(keys[0], (PRE, E), dtype=jnp.float32)
    ff_b = 0.1 * jax.random.normal(keys[1], (PRE,), dtype=jnp.float32)
    wout_t = 0.1 * jax.random.normal(keys[5], (NUM_CLASSES * POOL, 8 * INT),
                                     dtype=jnp.float32)
    bout_t = 0.1 * jax.random.normal(keys[6], (NUM_CLASSES * POOL,),
                                     dtype=jnp.float32)
    wout, bout = _pack_maxout(wout_t, bout_t, NUM_CLASSES, POOL)

    params = {
        "ff_w": ff_w.T,                                   # (E, PRE)
        "ff_b": ff_b[None, :],                            # (1, PRE)
        "enc": make_lstm_params(keys[2], PRE, ENC),
        "int": make_lstm_params(keys[3], 6 * ENC, INT),
        "watt": 0.1 * jax.random.normal(keys[4], (1, 2 * INT), dtype=jnp.float32),
        "batt": jnp.zeros((1, 1), jnp.float32),
        "wout": wout,                                     # (8*INT, POOL*C)
        "bout": bout,                                     # (1, POOL*C)
    }

    embedded_text = jax.random.normal(keys[7], (B, T, E), dtype=jnp.float32)
    # second sequence has length 11 (right padding) to exercise masking
    text_mask = jnp.ones((B, T), dtype=jnp.float32).at[1, 11:].set(0.0)

    fwd = jax.jit(functools.partial(bcn_forward,
                                    num_classes=NUM_CLASSES, pool_size=POOL))
    out = fwd(embedded_text, text_mask, params)
    jax.block_until_ready(out)
    print("KERNEL_OK")
</pallas_src>

<mosaic_0001>
module attributes {stable_mosaic.version = 11 : i64} {
  func.func @_bilstm_kernel(%arg0: i32, %arg1: memref<16x2x64xbf16, #tpu.memory_space<vmem>>, %arg2: memref<16x2x64xbf16, #tpu.memory_space<vmem>>, %arg3: memref<16x2x1xf32, #tpu.memory_space<vmem>>, %arg4: memref<16x64xf32, #tpu.memory_space<vmem>>, %arg5: memref<16x64xf32, #tpu.memory_space<vmem>>, %arg6: memref<16x2x32xf32, #tpu.memory_space<vmem>>, %arg7: memref<2x16xf32, #tpu.memory_space<vmem>>, %arg8: memref<2x16xf32, #tpu.memory_space<vmem>>, %arg9: memref<2x16xf32, #tpu.memory_space<vmem>>, %arg10: memref<2x16xf32, #tpu.memory_space<vmem>>) attributes {dimension_semantics = [#tpu.dimension_semantics<parallel>], iteration_bounds = array<i64: 1>, scalar_prefetch = 0 : i64, scratch_operands = 4 : i64, tpu.core_type = #tpu.core_type<tc>, window_params = [{transform_indices = @transform_0, window_bounds = array<i64: 16, 2, 64>}, {transform_indices = @transform_1, window_bounds = array<i64: 16, 2, 64>}, {transform_indices = @transform_2, window_bounds = array<i64: 16, 2, 1>}, {pipeline_mode = #tpu.pipeline_mode<synchronous>, transform_indices = @transform_3, window_bounds = array<i64: 16, 64>}, {pipeline_mode = #tpu.pipeline_mode<synchronous>, transform_indices = @transform_4, window_bounds = array<i64: 16, 64>}, {transform_indices = @transform_5, window_bounds = array<i64: 16, 2, 32>}]} {
    %cst = arith.constant 0.000000e+00 : f32
    %0 = vector.broadcast %cst : f32 to vector<2x16xf32>
    %c0 = arith.constant 0 : index
    %c0_0 = arith.constant 0 : index
    %1 = vector.load %arg7[%c0, %c0_0] : memref<2x16xf32, #tpu.memory_space<vmem>>, vector<2x16xf32>
    tpu.vector_store %arg7[%c0, %c0_0], %0 {strides = array<i32>} : memref<2x16xf32, #tpu.memory_space<vmem>>, vector<2x16xf32>,
    %cst_1 = arith.constant 0.000000e+00 : f32
    %2 = vector.broadcast %cst_1 : f32 to vector<2x16xf32>
    %c0_2 = arith.constant 0 : index
    %c0_3 = arith.constant 0 : index
    %3 = vector.load %arg8[%c0_2, %c0_3] : memref<2x16xf32, #tpu.memory_space<vmem>>, vector<2x16xf32>
    tpu.vector_store %arg8[%c0_2, %c0_3], %2 {strides = array<i32>} : memref<2x16xf32, #tpu.memory_space<vmem>>, vector<2x16xf32>,
    %cst_4 = arith.constant 0.000000e+00 : f32
    %4 = vector.broadcast %cst_4 : f32 to vector<2x16xf32>
    %c0_5 = arith.constant 0 : index
    %c0_6 = arith.constant 0 : index
    %5 = vector.load %arg9[%c0_5, %c0_6] : memref<2x16xf32, #tpu.memory_space<vmem>>, vector<2x16xf32>
    tpu.vector_store %arg9[%c0_5, %c0_6], %4 {strides = array<i32>} : memref<2x16xf32, #tpu.memory_space<vmem>>, vector<2x16xf32>,
    %cst_7 = arith.constant 0.000000e+00 : f32
    %6 = vector.broadcast %cst_7 : f32 to vector<2x16xf32>
    %c0_8 = arith.constant 0 : index
    %c0_9 = arith.constant 0 : index
    %7 = vector.load %arg10[%c0_8, %c0_9] : memref<2x16xf32, #tpu.memory_space<vmem>>, vector<2x16xf32>
    tpu.vector_store %arg10[%c0_8, %c0_9], %6 {strides = array<i32>} : memref<2x16xf32, #tpu.memory_space<vmem>>, vector<2x16xf32>,
    %c0_10 = arith.constant 0 : index
    %c0_11 = arith.constant 0 : index
    %8 = vector.load %arg4[%c0_10, %c0_11] : memref<16x64xf32, #tpu.memory_space<vmem>>, vector<16x64xf32>
    %c0_12 = arith.constant 0 : index
    %c0_13 = arith.constant 0 : index
    %9 = vector.load %arg5[%c0_12, %c0_13] : memref<16x64xf32, #tpu.memory_space<vmem>>, vector<16x64xf32>
    %c0_i32 = arith.constant 0 : i32
    %c16_i32 = arith.constant 16 : i32
    %10 = arith.addi %c0_i32, %c16_i32 : i32
    %c1_i32 = arith.constant 1 : i32
    scf.for %arg11 = %c0_i32 to %10 step %c1_i32  : i32 {
      %c1_i32_15 = arith.constant 1 : i32
      %11 = arith.muli %arg11, %c1_i32_15 : i32
      %c0_i32_16 = arith.constant 0 : i32
      %12 = arith.addi %c0_i32_16, %11 : i32
      %c15_i32 = arith.constant 15 : i32
      %13 = arith.subi %c15_i32, %12 : i32
      %14 = arith.index_cast %12 : i32 to index
      %c0_17 = arith.constant 0 : index
      %c0_18 = arith.constant 0 : index
      %15 = vector.load %arg1[%14, %c0_17, %c0_18] : memref<16x2x64xbf16, #tpu.memory_space<vmem>>, vector<1x2x64xbf16>
      %16 = vector.shape_cast %15 : vector<1x2x64xbf16> to vector<2x64xbf16>
      %17 = arith.index_cast %12 : i32 to index
      %c0_19 = arith.constant 0 : index
      %c0_20 = arith.constant 0 : index
      %18 = vector.load %arg3[%17, %c0_19, %c0_20] : memref<16x2x1xf32, #tpu.memory_space<vmem>>, vector<1x2x1xf32>
      %19 = vector.shape_cast %18 : vector<1x2x1xf32> to vector<2x1xf32>
      %c0_21 = arith.constant 0 : index
      %c0_22 = arith.constant 0 : index
      %20 = vector.load %arg7[%c0_21, %c0_22] : memref<2x16xf32, #tpu.memory_space<vmem>>, vector<2x16xf32>
      %c0_23 = arith.constant 0 : index
      %c0_24 = arith.constant 0 : index
      %21 = vector.load %arg9[%c0_23, %c0_24] : memref<2x16xf32, #tpu.memory_space<vmem>>, vector<2x16xf32>
      %22 = arith.extf %16 : vector<2x64xbf16> to vector<2x64xf32>
      %cst_25 = arith.constant dense<0.000000e+00> : vector<2x64xf32>
      %23 = tpu.matmul %20, %8, %cst_25 {dimension_numbers = #tpu.dot_dimension_numbers<[1], [0], [0], [1], [0, 0, 1, 1], [], []>} : vector<2x16xf32>, vector<16x64xf32>, vector<2x64xf32> -> vector<2x64xf32>
      %24 = arith.addf %22, %23 : vector<2x64xf32>
      %25 = vector.extract_strided_slice %24 {offsets = [0, 0], sizes = [2, 48], strides = [1, 1]} : vector<2x64xf32> to vector<2x48xf32>
      %26 = arith.negf %25 : vector<2x48xf32>
      %27 = math.exp %26 : vector<2x48xf32>
      %cst_26 = arith.constant 1.000000e+00 : f32
      %28 = vector.broadcast %cst_26 : f32 to vector<2x48xf32>
      %29 = arith.addf %28, %27 : vector<2x48xf32>
      %30 = arith.divf %28, %29 : vector<2x48xf32>
      %31 = vector.extract_strided_slice %24 {offsets = [0, 48], sizes = [2, 16], strides = [1, 1]} : vector<2x64xf32> to vector<2x16xf32>
      %32 = math.tanh %31 : vector<2x16xf32>
      %33 = vector.extract_strided_slice %30 {offsets = [0, 16], sizes = [2, 16], strides = [1, 1]} : vector<2x48xf32> to vector<2x16xf32>
      %34 = arith.mulf %33, %21 : vector<2x16xf32>
      %35 = vector.extract_strided_slice %30 {offsets = [0, 0], sizes = [2, 16], strides = [1, 1]} : vector<2x48xf32> to vector<2x16xf32>
      %36 = arith.mulf %35, %32 : vector<2x16xf32>
      %37 = arith.addf %34, %36 : vector<2x16xf32>
      %38 = vector.extract_strided_slice %30 {offsets = [0, 32], sizes = [2, 16], strides = [1, 1]} : vector<2x48xf32> to vector<2x16xf32>
      %39 = math.tanh %37 : vector<2x16xf32>
      %40 = arith.mulf %38, %39 : vector<2x16xf32>
      %41 = vector.broadcast %19 : vector<2x1xf32> to vector<2x16xf32>
      %42 = arith.mulf %41, %40 : vector<2x16xf32>
      %cst_27 = arith.constant 1.000000e+00 : f32
      %43 = vector.broadcast %cst_27 : f32 to vector<2x1xf32>
      %44 = arith.subf %43, %19 : vector<2x1xf32>
      %45 = vector.broadcast %44 : vector<2x1xf32> to vector<2x16xf32>
      %46 = arith.mulf %45, %20 : vector<2x16xf32>
      %47 = arith.addf %42, %46 : vector<2x16xf32>
      %48 = vector.broadcast %19 : vector<2x1xf32> to vector<2x16xf32>
      %49 = arith.mulf %48, %37 : vector<2x16xf32>
      %cst_28 = arith.constant 1.000000e+00 : f32
      %50 = vector.broadcast %cst_28 : f32 to vector<2x1xf32>
      %51 = arith.subf %50, %19 : vector<2x1xf32>
      %52 = vector.broadcast %51 : vector<2x1xf32> to vector<2x16xf32>
      %53 = arith.mulf %52, %21 : vector<2x16xf32>
      %54 = arith.addf %49, %53 : vector<2x16xf32>
      %55 = arith.index_cast %13 : i32 to index
      %c0_29 = arith.constant 0 : index
      %c0_30 = arith.constant 0 : index
      %56 = vector.load %arg2[%55, %c0_29, %c0_30] : memref<16x2x64xbf16, #tpu.memory_space<vmem>>, vector<1x2x64xbf16>
      %57 = vector.shape_cast %56 : vector<1x2x64xbf16> to vector<2x64xbf16>
      %58 = arith.index_cast %13 : i32 to index
      %c0_31 = arith.constant 0 : index
      %c0_32 = arith.constant 0 : index
      %59 = vector.load %arg3[%58, %c0_31, %c0_32] : memref<16x2x1xf32, #tpu.memory_space<vmem>>, vector<1x2x1xf32>
      %60 = vector.shape_cast %59 : vector<1x2x1xf32> to vector<2x1xf32>
      %c0_33 = arith.constant 0 : index
      %c0_34 = arith.constant 0 : index
      %61 = vector.load %arg8[%c0_33, %c0_34] : memref<2x16xf32, #tpu.memory_space<vmem>>, vector<2x16xf32>
      %c0_35 = arith.constant 0 : index
      %c0_36 = arith.constant 0 : index
      %62 = vector.load %arg10[%c0_35, %c0_36] : memref<2x16xf32, #tpu.memory_space<vmem>>, vector<2x16xf32>
      %63 = arith.extf %57 : vector<2x64xbf16> to vector<2x64xf32>
      %cst_37 = arith.constant dense<0.000000e+00> : vector<2x64xf32>
      %64 = tpu.matmul %61, %9, %cst_37 {dimension_numbers = #tpu.dot_dimension_numbers<[1], [0], [0], [1], [0, 0, 1, 1], [], []>} : vector<2x16xf32>, vector<16x64xf32>, vector<2x64xf32> -> vector<2x64xf32>
      %65 = arith.addf %63, %64 : vector<2x64xf32>
      %66 = vector.extract_strided_slice %65 {offsets = [0, 0], sizes = [2, 48], strides = [1, 1]} : vector<2x64xf32> to vector<2x48xf32>
      %67 = arith.negf %66 : vector<2x48xf32>
      %68 = math.exp %67 : vector<2x48xf32>
      %cst_38 = arith.constant 1.000000e+00 : f32
      %69 = vector.broadcast %cst_38 : f32 to vector<2x48xf32>
      %70 = arith.addf %69, %68 : vector<2x48xf32>
      %71 = arith.divf %69, %70 : vector<2x48xf32>
      %72 = vector.extract_strided_slice %65 {offsets = [0, 48], sizes = [2, 16], strides = [1, 1]} : vector<2x64xf32> to vector<2x16xf32>
      %73 = math.tanh %72 : vector<2x16xf32>
      %74 = vector.extract_strided_slice %71 {offsets = [0, 16], sizes = [2, 16], strides = [1, 1]} : vector<2x48xf32> to vector<2x16xf32>
      %75 = arith.mulf %74, %62 : vector<2x16xf32>
      %76 = vector.extract_strided_slice %71 {offsets = [0, 0], sizes = [2, 16], strides = [1, 1]} : vector<2x48xf32> to vector<2x16xf32>
      %77 = arith.mulf %76, %73 : vector<2x16xf32>
      %78 = arith.addf %75, %77 : vector<2x16xf32>
      %79 = vector.extract_strided_slice %71 {offsets = [0, 32], sizes = [2, 16], strides = [1, 1]} : vector<2x48xf32> to vector<2x16xf32>
      %80 = math.tanh %78 : vector<2x16xf32>
      %81 = arith.mulf %79, %80 : vector<2x16xf32>
      %82 = vector.broadcast %60 : vector<2x1xf32> to vector<2x16xf32>
      %83 = arith.mulf %82, %81 : vector<2x16xf32>
      %cst_39 = arith.constant 1.000000e+00 : f32
      %84 = vector.broadcast %cst_39 : f32 to vector<2x1xf32>
      %85 = arith.subf %84, %60 : vector<2x1xf32>
      %86 = vector.broadcast %85 : vector<2x1xf32> to vector<2x16xf32>
      %87 = arith.mulf %86, %61 : vector<2x16xf32>
      %88 = arith.addf %83, %87 : vector<2x16xf32>
      %89 = vector.broadcast %60 : vector<2x1xf32> to vector<2x16xf32>
      %90 = arith.mulf %89, %78 : vector<2x16xf32>
      %cst_40 = arith.constant 1.000000e+00 : f32
      %91 = vector.broadcast %cst_40 : f32 to vector<2x1xf32>
      %92 = arith.subf %91, %60 : vector<2x1xf32>
      %93 = vector.broadcast %92 : vector<2x1xf32> to vector<2x16xf32>
      %94 = arith.mulf %93, %62 : vector<2x16xf32>
      %95 = arith.addf %90, %94 : vector<2x16xf32>
      %c0_41 = arith.constant 0 : index
      %c0_42 = arith.constant 0 : index
      %96 = vector.load %arg7[%c0_41, %c0_42] : memref<2x16xf32, #tpu.memory_space<vmem>>, vector<2x16xf32>
      tpu.vector_store %arg7[%c0_41, %c0_42], %47 {strides = array<i32>} : memref<2x16xf32, #tpu.memory_space<vmem>>, vector<2x16xf32>,
      %c0_43 = arith.constant 0 : index
      %c0_44 = arith.constant 0 : index
      %97 = vector.load %arg9[%c0_43, %c0_44] : memref<2x16xf32, #tpu.memory_space<vmem>>, vector<2x16xf32>
      tpu.vector_store %arg9[%c0_43, %c0_44], %54 {strides = array<i32>} : memref<2x16xf32, #tpu.memory_space<vmem>>, vector<2x16xf32>,
      %c0_45 = arith.constant 0 : index
      %c0_46 = arith.constant 0 : index
      %98 = vector.load %arg8[%c0_45, %c0_46] : memref<2x16xf32, #tpu.memory_space<vmem>>, vector<2x16xf32>
      tpu.vector_store %arg8[%c0_45, %c0_46], %88 {strides = array<i32>} : memref<2x16xf32, #tpu.memory_space<vmem>>, vector<2x16xf32>,
      %c0_47 = arith.constant 0 : index
      %c0_48 = arith.constant 0 : index
      %99 = vector.load %arg10[%c0_47, %c0_48] : memref<2x16xf32, #tpu.memory_space<vmem>>, vector<2x16xf32>
      tpu.vector_store %arg10[%c0_47, %c0_48], %95 {strides = array<i32>} : memref<2x16xf32, #tpu.memory_space<vmem>>, vector<2x16xf32>,
      %100 = arith.index_cast %12 : i32 to index
      %c0_49 = arith.constant 0 : index
      %c0_50 = arith.constant 0 : index
      %101 = vector.load %arg6[%100, %c0_49, %c0_50] : memref<16x2x32xf32, #tpu.memory_space<vmem>>, vector<1x2x16xf32>
      %102 = vector.shape_cast %101 : vector<1x2x16xf32> to vector<2x16xf32>
      %103 = vector.shape_cast %42 : vector<2x16xf32> to vector<1x2x16xf32>
      tpu.vector_store %arg6[%100, %c0_49, %c0_50], %103 {strides = array<i32>} : memref<16x2x32xf32, #tpu.memory_space<vmem>>, vector<1x2x16xf32>,
      %104 = arith.index_cast %13 : i32 to index
      %c0_51 = arith.constant 0 : index
      %c16 = arith.constant 16 : index
      %105 = vector.load %arg6[%104, %c0_51, %c16] : memref<16x2x32xf32, #tpu.memory_space<vmem>>, vector<1x2x16xf32>
      %106 = vector.shape_cast %105 : vector<1x2x16xf32> to vector<2x16xf32>
      %107 = vector.shape_cast %83 : vector<2x16xf32> to vector<1x2x16xf32>
      tpu.vector_store %arg6[%104, %c0_51, %c16], %107 {strides = array<i32>} : memref<16x2x32xf32, #tpu.memory_space<vmem>>, vector<1x2x16xf32>,
    }
    %c16_i32_14 = arith.constant 16 : i32
    return
  }
  func.func @transform_0(%arg0: i32) -> (i32, i32, i32) {
    %c0_i32 = arith.constant 0 : i32
    %c0_i32_0 = arith.constant 0 : i32
    %c0_i32_1 = arith.constant 0 : i32
    return %c0_i32, %arg0, %c0_i32_0 : i32, i32, i32
  }
  func.func @transform_1(%arg0: i32) -> (i32, i32, i32) {
    %c0_i32 = arith.constant 0 : i32
    %c0_i32_0 = arith.constant 0 : i32
    %c0_i32_1 = arith.constant 0 : i32
    return %c0_i32, %arg0, %c0_i32_0 : i32, i32, i32
  }
  func.func @transform_2(%arg0: i32) -> (i32, i32, i32) {
    %c0_i32 = arith.constant 0 : i32
    %c0_i32_0 = arith.constant 0 : i32
    %c0_i32_1 = arith.constant 0 : i32
    return %c0_i32, %arg0, %c0_i32_0 : i32, i32, i32
  }
  func.func @transform_3(%arg0: i32) -> (i32, i32) {
    %c0_i32 = arith.constant 0 : i32
    %c0_i32_0 = arith.constant 0 : i32
    %c0_i32_1 = arith.constant 0 : i32
    return %c0_i32, %c0_i32_0 : i32, i32
  }
  func.func @transform_4(%arg0: i32) -> (i32, i32) {
    %c0_i32 = arith.constant 0 : i32
    %c0_i32_0 = arith.constant 0 : i32
    %c0_i32_1 = arith.constant 0 : i32
    return %c0_i32, %c0_i32_0 : i32, i32
  }
  func.func @transform_5(%arg0: i32) -> (i32, i32, i32) {
    %c0_i32 = arith.constant 0 : i32
    %c0_i32_0 = arith.constant 0 : i32
    %c0_i32_1 = arith.constant 0 : i32
    return %c0_i32, %arg0, %c0_i32_0 : i32, i32, i32
  }
}

module attributes {stable_mosaic.version = 11 : i64} {
  func.func @_ffn_gates_kernel(%arg0: i32, %arg1: memref<32x32xf32, #tpu.memory_space<vmem>>, %arg2: memref<32x32xf32, #tpu.memory_space<vmem>>, %arg3: memref<1x32xf32, #tpu.memory_space<vmem>>, %arg4: memref<32x128xf32, #tpu.memory_space<vmem>>, %arg5: memref<1x128xf32, #tpu.memory_space<vmem>>, %arg6: memref<32x64xbf16, #tpu.memory_space<vmem>>, %arg7: memref<32x64xbf16, #tpu.memory_space<vmem>>) attributes {dimension_semantics = [#tpu.dimension_semantics<parallel>], iteration_bounds = array<i64: 1>, scalar_prefetch = 0 : i64, scratch_operands = 0 : i64, tpu.core_type = #tpu.core_type<tc>, window_params = [{transform_indices = @transform_0, window_bounds = array<i64: 32, 32>}, {pipeline_mode = #tpu.pipeline_mode<synchronous>, transform_indices = @transform_1, window_bounds = array<i64: 32, 32>}, {pipeline_mode = #tpu.pipeline_mode<synchronous>, transform_indices = @transform_2, window_bounds = array<i64: 1, 32>}, {pipeline_mode = #tpu.pipeline_mode<synchronous>, transform_indices = @transform_3, window_bounds = array<i64: 32, 128>}, {pipeline_mode = #tpu.pipeline_mode<synchronous>, transform_indices = @transform_4, window_bounds = array<i64: 1, 128>}, {transform_indices = @transform_5, window_bounds = array<i64: 32, 64>}, {transform_indices = @transform_6, window_bounds = array<i64: 32, 64>}]} {
    %c0 = arith.constant 0 : index
    %c0_0 = arith.constant 0 : index
    %0 = vector.load %arg1[%c0, %c0_0] : memref<32x32xf32, #tpu.memory_space<vmem>>, vector<32x32xf32>
    %c0_1 = arith.constant 0 : index
    %c0_2 = arith.constant 0 : index
    %1 = vector.load %arg2[%c0_1, %c0_2] : memref<32x32xf32, #tpu.memory_space<vmem>>, vector<32x32xf32>
    %cst = arith.constant dense<0.000000e+00> : vector<32x32xf32>
    %2 = tpu.matmul %0, %1, %cst {dimension_numbers = #tpu.dot_dimension_numbers<[1], [0], [0], [1], [0, 0, 1, 1], [], []>} : vector<32x32xf32>, vector<32x32xf32>, vector<32x32xf32> -> vector<32x32xf32>
    %c0_3 = arith.constant 0 : index
    %c0_4 = arith.constant 0 : index
    %3 = vector.load %arg3[%c0_3, %c0_4] : memref<1x32xf32, #tpu.memory_space<vmem>>, vector<1x32xf32>
    %4 = vector.broadcast %3 : vector<1x32xf32> to vector<32x32xf32>
    %5 = arith.addf %2, %4 : vector<32x32xf32>
    %cst_5 = arith.constant 0.000000e+00 : f32
    %6 = vector.broadcast %cst_5 : f32 to vector<32x32xf32>
    %7 = arith.maximumf %5, %6 : vector<32x32xf32>
    %c0_6 = arith.constant 0 : index
    %c0_7 = arith.constant 0 : index
    %8 = vector.load %arg4[%c0_6, %c0_7] : memref<32x128xf32, #tpu.memory_space<vmem>>, vector<32x128xf32>
    %cst_8 = arith.constant dense<0.000000e+00> : vector<32x128xf32>
    %9 = tpu.matmul %7, %8, %cst_8 {dimension_numbers = #tpu.dot_dimension_numbers<[1], [0], [0], [1], [0, 0, 1, 1], [], []>} : vector<32x32xf32>, vector<32x128xf32>, vector<32x128xf32> -> vector<32x128xf32>
    %c0_9 = arith.constant 0 : index
    %c0_10 = arith.constant 0 : index
    %10 = vector.load %arg5[%c0_9, %c0_10] : memref<1x128xf32, #tpu.memory_space<vmem>>, vector<1x128xf32>
    %11 = vector.broadcast %10 : vector<1x128xf32> to vector<32x128xf32>
    %12 = arith.addf %9, %11 : vector<32x128xf32>
    %13 = vector.extract_strided_slice %12 {offsets = [0, 0], sizes = [32, 64], strides = [1, 1]} : vector<32x128xf32> to vector<32x64xf32>
    %14 = arith.truncf %13 : vector<32x64xf32> to vector<32x64xbf16>
    %c0_11 = arith.constant 0 : index
    %c0_12 = arith.constant 0 : index
    %15 = vector.load %arg6[%c0_11, %c0_12] : memref<32x64xbf16, #tpu.memory_space<vmem>>, vector<32x64xbf16>
    tpu.vector_store %arg6[%c0_11, %c0_12], %14 {strides = array<i32>} : memref<32x64xbf16, #tpu.memory_space<vmem>>, vector<32x64xbf16>,
    %16 = vector.extract_strided_slice %12 {offsets = [0, 64], sizes = [32, 64], strides = [1, 1]} : vector<32x128xf32> to vector<32x64xf32>
    %17 = arith.truncf %16 : vector<32x64xf32> to vector<32x64xbf16>
    %c0_13 = arith.constant 0 : index
    %c0_14 = arith.constant 0 : index
    %18 = vector.load %arg7[%c0_13, %c0_14] : memref<32x64xbf16, #tpu.memory_space<vmem>>, vector<32x64xbf16>
    tpu.vector_store %arg7[%c0_13, %c0_14], %17 {strides = array<i32>} : memref<32x64xbf16, #tpu.memory_space<vmem>>, vector<32x64xbf16>,
    return
  }
  func.func @transform_0(%arg0: i32) -> (i32, i32) {
    %c0_i32 = arith.constant 0 : i32
    %c0_i32_0 = arith.constant 0 : i32
    return %arg0, %c0_i32 : i32, i32
  }
  func.func @transform_1(%arg0: i32) -> (i32, i32) {
    %c0_i32 = arith.constant 0 : i32
    %c0_i32_0 = arith.constant 0 : i32
    %c0_i32_1 = arith.constant 0 : i32
    return %c0_i32, %c0_i32_0 : i32, i32
  }
  func.func @transform_2(%arg0: i32) -> (i32, i32) {
    %c0_i32 = arith.constant 0 : i32
    %c0_i32_0 = arith.constant 0 : i32
    %c0_i32_1 = arith.constant 0 : i32
    return %c0_i32, %c0_i32_0 : i32, i32
  }
  func.func @transform_3(%arg0: i32) -> (i32, i32) {
    %c0_i32 = arith.constant 0 : i32
    %c0_i32_0 = arith.constant 0 : i32
    %c0_i32_1 = arith.constant 0 : i32
    return %c0_i32, %c0_i32_0 : i32, i32
  }
  func.func @transform_4(%arg0: i32) -> (i32, i32) {
    %c0_i32 = arith.constant 0 : i32
    %c0_i32_0 = arith.constant 0 : i32
    %c0_i32_1 = arith.constant 0 : i32
    return %c0_i32, %c0_i32_0 : i32, i32
  }
  func.func @transform_5(%arg0: i32) -> (i32, i32) {
    %c0_i32 = arith.constant 0 : i32
    %c0_i32_0 = arith.constant 0 : i32
    return %arg0, %c0_i32 : i32, i32
  }
  func.func @transform_6(%arg0: i32) -> (i32, i32) {
    %c0_i32 = arith.constant 0 : i32
    %c0_i32_0 = arith.constant 0 : i32
    return %arg0, %c0_i32 : i32, i32
  }
}

module attributes {stable_mosaic.version = 11 : i64} {
  func.func @_biatt_gates_kernel(%arg0: i32, %arg1: i32, %arg2: memref<16x2x32xf32, #tpu.memory_space<vmem>>, %arg3: memref<16x2x32xf32, #tpu.memory_space<vmem>>, %arg4: memref<2x16xf32, #tpu.memory_space<vmem>>, %arg5: memref<96x128xf32, #tpu.memory_space<vmem>>, %arg6: memref<1x128xf32, #tpu.memory_space<vmem>>, %arg7: memref<16x2x64xf32, #tpu.memory_space<vmem>>, %arg8: memref<16x2x64xf32, #tpu.memory_space<vmem>>) attributes {dimension_semantics = [#tpu.dimension_semantics<parallel>, #tpu.dimension_semantics<parallel>], iteration_bounds = array<i64: 1, 1>, scalar_prefetch = 0 : i64, scratch_operands = 0 : i64, tpu.core_type = #tpu.core_type<tc>, window_params = [{transform_indices = @transform_0, window_bounds = array<i64: 16, 2, 32>}, {pipeline_mode = #tpu.pipeline_mode<synchronous>, transform_indices = @transform_1, window_bounds = array<i64: 16, 2, 32>}, {pipeline_mode = #tpu.pipeline_mode<synchronous>, transform_indices = @transform_2, window_bounds = array<i64: 2, 16>}, {pipeline_mode = #tpu.pipeline_mode<synchronous>, transform_indices = @transform_3, window_bounds = array<i64: 96, 128>}, {pipeline_mode = #tpu.pipeline_mode<synchronous>, transform_indices = @transform_4, window_bounds = array<i64: 1, 128>}, {transform_indices = @transform_5, window_bounds = array<i64: 16, 2, 64>}, {transform_indices = @transform_6, window_bounds = array<i64: 16, 2, 64>}]} {
    %c0 = arith.constant 0 : index
    %c0_0 = arith.constant 0 : index
    %0 = vector.load %arg5[%c0, %c0_0] : memref<96x128xf32, #tpu.memory_space<vmem>>, vector<96x128xf32>
    %c0_1 = arith.constant 0 : index
    %c0_2 = arith.constant 0 : index
    %1 = vector.load %arg6[%c0_1, %c0_2] : memref<1x128xf32, #tpu.memory_space<vmem>>, vector<1x128xf32>
    %c0_3 = arith.constant 0 : index
    %c0_4 = arith.constant 0 : index
    %c0_5 = arith.constant 0 : index
    %2 = vector.load %arg2[%c0_3, %c0_4, %c0_5] : memref<16x2x32xf32, #tpu.memory_space<vmem>>, vector<16x1x32xf32>
    %3 = vector.shape_cast %2 : vector<16x1x32xf32> to vector<16x32xf32>
    %c0_6 = arith.constant 0 : index
    %c0_7 = arith.constant 0 : index
    %c0_8 = arith.constant 0 : index
    %4 = vector.load %arg3[%c0_6, %c0_7, %c0_8] : memref<16x2x32xf32, #tpu.memory_space<vmem>>, vector<16x1x32xf32>
    %5 = vector.shape_cast %4 : vector<16x1x32xf32> to vector<16x32xf32>
    %c0_9 = arith.constant 0 : index
    %c0_10 = arith.constant 0 : index
    %6 = vector.load %arg4[%c0_9, %c0_10] : memref<2x16xf32, #tpu.memory_space<vmem>>, vector<1x16xf32>
    %cst = arith.constant dense<0.000000e+00> : vector<16x16xf32>
    %7 = tpu.matmul %3, %5, %cst {dimension_numbers = #tpu.dot_dimension_numbers<[1], [1], [0], [0], [0, 0, 1, 0], [], []>} : vector<16x32xf32>, vector<16x32xf32>, vector<16x16xf32> -> vector<16x16xf32>
    %8 = vector.broadcast %6 : vector<1x16xf32> to vector<16x16xf32>
    %9 = arith.mulf %7, %8 : vector<16x16xf32>
    %cst_11 = arith.constant dense<0xFF800000> : vector<16xf32>
    %10 = vector.multi_reduction <maximumf>, %9, %cst_11 [1] : vector<16x16xf32> to vector<16xf32>
    %11 = vector.shape_cast %10 : vector<16xf32> to vector<16x1xf32>
    %12 = vector.broadcast %11 : vector<16x1xf32> to vector<16x16xf32>
    %13 = arith.subf %9, %12 : vector<16x16xf32>
    %14 = math.exp %13 : vector<16x16xf32>
    %cst_12 = arith.constant dense<0.000000e+00> : vector<16xf32>
    %15 = vector.multi_reduction <add>, %14, %cst_12 [1] : vector<16x16xf32> to vector<16xf32>
    %16 = vector.shape_cast %15 : vector<16xf32> to vector<16x1xf32>
    %17 = tpu.reciprocal %16 {approx = true} : vector<16x1xf32> -> vector<16x1xf32>
    %18 = vector.broadcast %17 : vector<16x1xf32> to vector<16x16xf32>
    %19 = arith.mulf %14, %18 : vector<16x16xf32>
    %20 = vector.broadcast %6 : vector<1x16xf32> to vector<16x16xf32>
    %21 = arith.mulf %19, %20 : vector<16x16xf32>
    %cst_13 = arith.constant dense<0.000000e+00> : vector<16xf32>
    %22 = vector.multi_reduction <add>, %21, %cst_13 [1] : vector<16x16xf32> to vector<16xf32>
    %23 = vector.shape_cast %22 : vector<16xf32> to vector<16x1xf32>
    %cst_14 = arith.constant 9.99999982E-14 : f32
    %24 = vector.broadcast %cst_14 : f32 to vector<16x1xf32>
    %25 = arith.addf %23, %24 : vector<16x1xf32>
    %26 = tpu.reciprocal %25 {approx = true} : vector<16x1xf32> -> vector<16x1xf32>
    %27 = vector.broadcast %26 : vector<16x1xf32> to vector<16x16xf32>
    %28 = arith.mulf %21, %27 : vector<16x16xf32>
    %cst_15 = arith.constant dense<0.000000e+00> : vector<16x32xf32>
    %29 = tpu.matmul %28, %5, %cst_15 {dimension_numbers = #tpu.dot_dimension_numbers<[1], [0], [0], [1], [0, 0, 1, 1], [], []>} : vector<16x16xf32>, vector<16x32xf32>, vector<16x32xf32> -> vector<16x32xf32>
    %30 = arith.subf %3, %29 : vector<16x32xf32>
    %31 = arith.mulf %3, %29 : vector<16x32xf32>
    %32 = tpu.concatenate %3, %30, %31 in 1 : vector<16x32xf32>, vector<16x32xf32>, vector<16x32xf32> -> vector<16x96xf32>
    %cst_16 = arith.constant dense<0.000000e+00> : vector<16x128xf32>
    %33 = tpu.matmul %32, %0, %cst_16 {dimension_numbers = #tpu.dot_dimension_numbers<[1], [0], [0], [1], [0, 0, 1, 1], [], []>} : vector<16x96xf32>, vector<96x128xf32>, vector<16x128xf32> -> vector<16x128xf32>
    %34 = vector.broadcast %1 : vector<1x128xf32> to vector<16x128xf32>
    %35 = arith.addf %33, %34 : vector<16x128xf32>
    %36 = vector.extract_strided_slice %35 {offsets = [0, 0], sizes = [16, 64], strides = [1, 1]} : vector<16x128xf32> to vector<16x64xf32>
    %c0_17 = arith.constant 0 : index
    %c0_18 = arith.constant 0 : index
    %c0_19 = arith.constant 0 : index
    %37 = vector.load %arg7[%c0_17, %c0_18, %c0_19] : memref<16x2x64xf32, #tpu.memory_space<vmem>>, vector<16x1x64xf32>
    %38 = vector.shape_cast %37 : vector<16x1x64xf32> to vector<16x64xf32>
    %39 = vector.shape_cast %36 : vector<16x64xf32> to vector<16x1x64xf32>
    tpu.vector_store %arg7[%c0_17, %c0_18, %c0_19], %39 {strides = array<i32>} : memref<16x2x64xf32, #tpu.memory_space<vmem>>, vector<16x1x64xf32>,
    %40 = vector.extract_strided_slice %35 {offsets = [0, 64], sizes = [16, 64], strides = [1, 1]} : vector<16x128xf32> to vector<16x64xf32>
    %c0_20 = arith.constant 0 : index
    %c0_21 = arith.constant 0 : index
    %c0_22 = arith.constant 0 : index
    %41 = vector.load %arg8[%c0_20, %c0_21, %c0_22] : memref<16x2x64xf32, #tpu.memory_space<vmem>>, vector<16x1x64xf32>
    %42 = vector.shape_cast %41 : vector<16x1x64xf32> to vector<16x64xf32>
    %43 = vector.shape_cast %40 : vector<16x64xf32> to vector<16x1x64xf32>
    tpu.vector_store %arg8[%c0_20, %c0_21, %c0_22], %43 {strides = array<i32>} : memref<16x2x64xf32, #tpu.memory_space<vmem>>, vector<16x1x64xf32>,
    %c0_23 = arith.constant 0 : index
    %c1 = arith.constant 1 : index
    %c0_24 = arith.constant 0 : index
    %44 = vector.load %arg2[%c0_23, %c1, %c0_24] : memref<16x2x32xf32, #tpu.memory_space<vmem>>, vector<16x1x32xf32>
    %45 = vector.shape_cast %44 : vector<16x1x32xf32> to vector<16x32xf32>
    %c0_25 = arith.constant 0 : index
    %c1_26 = arith.constant 1 : index
    %c0_27 = arith.constant 0 : index
    %46 = vector.load %arg3[%c0_25, %c1_26, %c0_27] : memref<16x2x32xf32, #tpu.memory_space<vmem>>, vector<16x1x32xf32>
    %47 = vector.shape_cast %46 : vector<16x1x32xf32> to vector<16x32xf32>
    %c1_28 = arith.constant 1 : index
    %c0_29 = arith.constant 0 : index
    %48 = vector.load %arg4[%c1_28, %c0_29] : memref<2x16xf32, #tpu.memory_space<vmem>>, vector<1x16xf32>
    %cst_30 = arith.constant dense<0.000000e+00> : vector<16x16xf32>
    %49 = tpu.matmul %45, %47, %cst_30 {dimension_numbers = #tpu.dot_dimension_numbers<[1], [1], [0], [0], [0, 0, 1, 0], [], []>} : vector<16x32xf32>, vector<16x32xf32>, vector<16x16xf32> -> vector<16x16xf32>
    %50 = vector.broadcast %48 : vector<1x16xf32> to vector<16x16xf32>
    %51 = arith.mulf %49, %50 : vector<16x16xf32>
    %cst_31 = arith.constant dense<0xFF800000> : vector<16xf32>
    %52 = vector.multi_reduction <maximumf>, %51, %cst_31 [1] : vector<16x16xf32> to vector<16xf32>
    %53 = vector.shape_cast %52 : vector<16xf32> to vector<16x1xf32>
    %54 = vector.broadcast %53 : vector<16x1xf32> to vector<16x16xf32>
    %55 = arith.subf %51, %54 : vector<16x16xf32>
    %56 = math.exp %55 : vector<16x16xf32>
    %cst_32 = arith.constant dense<0.000000e+00> : vector<16xf32>
    %57 = vector.multi_reduction <add>, %56, %cst_32 [1] : vector<16x16xf32> to vector<16xf32>
    %58 = vector.shape_cast %57 : vector<16xf32> to vector<16x1xf32>
    %59 = tpu.reciprocal %58 {approx = true} : vector<16x1xf32> -> vector<16x1xf32>
    %60 = vector.broadcast %59 : vector<16x1xf32> to vector<16x16xf32>
    %61 = arith.mulf %56, %60 : vector<16x16xf32>
    %62 = vector.broadcast %48 : vector<1x16xf32> to vector<16x16xf32>
    %63 = arith.mulf %61, %62 : vector<16x16xf32>
    %cst_33 = arith.constant dense<0.000000e+00> : vector<16xf32>
    %64 = vector.multi_reduction <add>, %63, %cst_33 [1] : vector<16x16xf32> to vector<16xf32>
    %65 = vector.shape_cast %64 : vector<16xf32> to vector<16x1xf32>
    %cst_34 = arith.constant 9.99999982E-14 : f32
    %66 = vector.broadcast %cst_34 : f32 to vector<16x1xf32>
    %67 = arith.addf %65, %66 : vector<16x1xf32>
    %68 = tpu.reciprocal %67 {approx = true} : vector<16x1xf32> -> vector<16x1xf32>
    %69 = vector.broadcast %68 : vector<16x1xf32> to vector<16x16xf32>
    %70 = arith.mulf %63, %69 : vector<16x16xf32>
    %cst_35 = arith.constant dense<0.000000e+00> : vector<16x32xf32>
    %71 = tpu.matmul %70, %47, %cst_35 {dimension_numbers = #tpu.dot_dimension_numbers<[1], [0], [0], [1], [0, 0, 1, 1], [], []>} : vector<16x16xf32>, vector<16x32xf32>, vector<16x32xf32> -> vector<16x32xf32>
    %72 = arith.subf %45, %71 : vector<16x32xf32>
    %73 = arith.mulf %45, %71 : vector<16x32xf32>
    %74 = tpu.concatenate %45, %72, %73 in 1 : vector<16x32xf32>, vector<16x32xf32>, vector<16x32xf32> -> vector<16x96xf32>
    %cst_36 = arith.constant dense<0.000000e+00> : vector<16x128xf32>
    %75 = tpu.matmul %74, %0, %cst_36 {dimension_numbers = #tpu.dot_dimension_numbers<[1], [0], [0], [1], [0, 0, 1, 1], [], []>} : vector<16x96xf32>, vector<96x128xf32>, vector<16x128xf32> -> vector<16x128xf32>
    %76 = vector.broadcast %1 : vector<1x128xf32> to vector<16x128xf32>
    %77 = arith.addf %75, %76 : vector<16x128xf32>
    %78 = vector.extract_strided_slice %77 {offsets = [0, 0], sizes = [16, 64], strides = [1, 1]} : vector<16x128xf32> to vector<16x64xf32>
    %c0_37 = arith.constant 0 : index
    %c1_38 = arith.constant 1 : index
    %c0_39 = arith.constant 0 : index
    %79 = vector.load %arg7[%c0_37, %c1_38, %c0_39] : memref<16x2x64xf32, #tpu.memory_space<vmem>>, vector<16x1x64xf32>
    %80 = vector.shape_cast %79 : vector<16x1x64xf32> to vector<16x64xf32>
    %81 = vector.shape_cast %78 : vector<16x64xf32> to vector<16x1x64xf32>
    tpu.vector_store %arg7[%c0_37, %c1_38, %c0_39], %81 {strides = array<i32>} : memref<16x2x64xf32, #tpu.memory_space<vmem>>, vector<16x1x64xf32>,
    %82 = vector.extract_strided_slice %77 {offsets = [0, 64], sizes = [16, 64], strides = [1, 1]} : vector<16x128xf32> to vector<16x64xf32>
    %c0_40 = arith.constant 0 : index
    %c1_41 = arith.constant 1 : index
    %c0_42 = arith.constant 0 : index
    %83 = vector.load %arg8[%c0_40, %c1_41, %c0_42] : memref<16x2x64xf32, #tpu.memory_space<vmem>>, vector<16x1x64xf32>
    %84 = vector.shape_cast %83 : vector<16x1x64xf32> to vector<16x64xf32>
    %85 = vector.shape_cast %82 : vector<16x64xf32> to vector<16x1x64xf32>
    tpu.vector_store %arg8[%c0_40, %c1_41, %c0_42], %85 {strides = array<i32>} : memref<16x2x64xf32, #tpu.memory_space<vmem>>, vector<16x1x64xf32>,
    return
  }
  func.func @transform_0(%arg0: i32, %arg1: i32) -> (i32, i32, i32) {
    %c0_i32 = arith.constant 0 : i32
    %c0_i32_0 = arith.constant 0 : i32
    return %arg1, %arg0, %c0_i32 : i32, i32, i32
  }
  func.func @transform_1(%arg0: i32, %arg1: i32) -> (i32, i32, i32) {
    %c0_i32 = arith.constant 0 : i32
    %c0_i32_0 = arith.constant 0 : i32
    %c0_i32_1 = arith.constant 0 : i32
    return %c0_i32, %arg0, %c0_i32_0 : i32, i32, i32
  }
  func.func @transform_2(%arg0: i32, %arg1: i32) -> (i32, i32) {
    %c0_i32 = arith.constant 0 : i32
    %c0_i32_0 = arith.constant 0 : i32
    return %arg0, %c0_i32 : i32, i32
  }
  func.func @transform_3(%arg0: i32, %arg1: i32) -> (i32, i32) {
    %c0_i32 = arith.constant 0 : i32
    %c0_i32_0 = arith.constant 0 : i32
    %c0_i32_1 = arith.constant 0 : i32
    return %c0_i32, %c0_i32_0 : i32, i32
  }
  func.func @transform_4(%arg0: i32, %arg1: i32) -> (i32, i32) {
    %c0_i32 = arith.constant 0 : i32
    %c0_i32_0 = arith.constant 0 : i32
    %c0_i32_1 = arith.constant 0 : i32
    return %c0_i32, %c0_i32_0 : i32, i32
  }
  func.func @transform_5(%arg0: i32, %arg1: i32) -> (i32, i32, i32) {
    %c0_i32 = arith.constant 0 : i32
    %c0_i32_0 = arith.constant 0 : i32
    return %arg1, %arg0, %c0_i32 : i32, i32, i32
  }
  func.func @transform_6(%arg0: i32, %arg1: i32) -> (i32, i32, i32) {
    %c0_i32 = arith.constant 0 : i32
    %c0_i32_0 = arith.constant 0 : i32
    return %arg1, %arg0, %c0_i32 : i32, i32, i32
  }
}

module attributes {stable_mosaic.version = 11 : i64} {
  func.func @_bilstm_kernel(%arg0: i32, %arg1: memref<16x2x64xf32, #tpu.memory_space<vmem>>, %arg2: memref<16x2x64xf32, #tpu.memory_space<vmem>>, %arg3: memref<16x2x1xf32, #tpu.memory_space<vmem>>, %arg4: memref<16x64xf32, #tpu.memory_space<vmem>>, %arg5: memref<16x64xf32, #tpu.memory_space<vmem>>, %arg6: memref<16x2x32xf32, #tpu.memory_space<vmem>>, %arg7: memref<2x16xf32, #tpu.memory_space<vmem>>, %arg8: memref<2x16xf32, #tpu.memory_space<vmem>>, %arg9: memref<2x16xf32, #tpu.memory_space<vmem>>, %arg10: memref<2x16xf32, #tpu.memory_space<vmem>>) attributes {dimension_semantics = [#tpu.dimension_semantics<parallel>], iteration_bounds = array<i64: 1>, scalar_prefetch = 0 : i64, scratch_operands = 4 : i64, tpu.core_type = #tpu.core_type<tc>, window_params = [{transform_indices = @transform_0, window_bounds = array<i64: 16, 2, 64>}, {transform_indices = @transform_1, window_bounds = array<i64: 16, 2, 64>}, {transform_indices = @transform_2, window_bounds = array<i64: 16, 2, 1>}, {pipeline_mode = #tpu.pipeline_mode<synchronous>, transform_indices = @transform_3, window_bounds = array<i64: 16, 64>}, {pipeline_mode = #tpu.pipeline_mode<synchronous>, transform_indices = @transform_4, window_bounds = array<i64: 16, 64>}, {transform_indices = @transform_5, window_bounds = array<i64: 16, 2, 32>}]} {
    %cst = arith.constant 0.000000e+00 : f32
    %0 = vector.broadcast %cst : f32 to vector<2x16xf32>
    %c0 = arith.constant 0 : index
    %c0_0 = arith.constant 0 : index
    %1 = vector.load %arg7[%c0, %c0_0] : memref<2x16xf32, #tpu.memory_space<vmem>>, vector<2x16xf32>
    tpu.vector_store %arg7[%c0, %c0_0], %0 {strides = array<i32>} : memref<2x16xf32, #tpu.memory_space<vmem>>, vector<2x16xf32>,
    %cst_1 = arith.constant 0.000000e+00 : f32
    %2 = vector.broadcast %cst_1 : f32 to vector<2x16xf32>
    %c0_2 = arith.constant 0 : index
    %c0_3 = arith.constant 0 : index
    %3 = vector.load %arg8[%c0_2, %c0_3] : memref<2x16xf32, #tpu.memory_space<vmem>>, vector<2x16xf32>
    tpu.vector_store %arg8[%c0_2, %c0_3], %2 {strides = array<i32>} : memref<2x16xf32, #tpu.memory_space<vmem>>, vector<2x16xf32>,
    %cst_4 = arith.constant 0.000000e+00 : f32
    %4 = vector.broadcast %cst_4 : f32 to vector<2x16xf32>
    %c0_5 = arith.constant 0 : index
    %c0_6 = arith.constant 0 : index
    %5 = vector.load %arg9[%c0_5, %c0_6] : memref<2x16xf32, #tpu.memory_space<vmem>>, vector<2x16xf32>
    tpu.vector_store %arg9[%c0_5, %c0_6], %4 {strides = array<i32>} : memref<2x16xf32, #tpu.memory_space<vmem>>, vector<2x16xf32>,
    %cst_7 = arith.constant 0.000000e+00 : f32
    %6 = vector.broadcast %cst_7 : f32 to vector<2x16xf32>
    %c0_8 = arith.constant 0 : index
    %c0_9 = arith.constant 0 : index
    %7 = vector.load %arg10[%c0_8, %c0_9] : memref<2x16xf32, #tpu.memory_space<vmem>>, vector<2x16xf32>
    tpu.vector_store %arg10[%c0_8, %c0_9], %6 {strides = array<i32>} : memref<2x16xf32, #tpu.memory_space<vmem>>, vector<2x16xf32>,
    %c0_10 = arith.constant 0 : index
    %c0_11 = arith.constant 0 : index
    %8 = vector.load %arg4[%c0_10, %c0_11] : memref<16x64xf32, #tpu.memory_space<vmem>>, vector<16x64xf32>
    %c0_12 = arith.constant 0 : index
    %c0_13 = arith.constant 0 : index
    %9 = vector.load %arg5[%c0_12, %c0_13] : memref<16x64xf32, #tpu.memory_space<vmem>>, vector<16x64xf32>
    %c0_i32 = arith.constant 0 : i32
    %c16_i32 = arith.constant 16 : i32
    %10 = arith.addi %c0_i32, %c16_i32 : i32
    %c1_i32 = arith.constant 1 : i32
    scf.for %arg11 = %c0_i32 to %10 step %c1_i32  : i32 {
      %c1_i32_15 = arith.constant 1 : i32
      %11 = arith.muli %arg11, %c1_i32_15 : i32
      %c0_i32_16 = arith.constant 0 : i32
      %12 = arith.addi %c0_i32_16, %11 : i32
      %c15_i32 = arith.constant 15 : i32
      %13 = arith.subi %c15_i32, %12 : i32
      %14 = arith.index_cast %12 : i32 to index
      %c0_17 = arith.constant 0 : index
      %c0_18 = arith.constant 0 : index
      %15 = vector.load %arg1[%14, %c0_17, %c0_18] : memref<16x2x64xf32, #tpu.memory_space<vmem>>, vector<1x2x64xf32>
      %16 = vector.shape_cast %15 : vector<1x2x64xf32> to vector<2x64xf32>
      %17 = arith.index_cast %12 : i32 to index
      %c0_19 = arith.constant 0 : index
      %c0_20 = arith.constant 0 : index
      %18 = vector.load %arg3[%17, %c0_19, %c0_20] : memref<16x2x1xf32, #tpu.memory_space<vmem>>, vector<1x2x1xf32>
      %19 = vector.shape_cast %18 : vector<1x2x1xf32> to vector<2x1xf32>
      %c0_21 = arith.constant 0 : index
      %c0_22 = arith.constant 0 : index
      %20 = vector.load %arg7[%c0_21, %c0_22] : memref<2x16xf32, #tpu.memory_space<vmem>>, vector<2x16xf32>
      %c0_23 = arith.constant 0 : index
      %c0_24 = arith.constant 0 : index
      %21 = vector.load %arg9[%c0_23, %c0_24] : memref<2x16xf32, #tpu.memory_space<vmem>>, vector<2x16xf32>
      %cst_25 = arith.constant dense<0.000000e+00> : vector<2x64xf32>
      %22 = tpu.matmul %20, %8, %cst_25 {dimension_numbers = #tpu.dot_dimension_numbers<[1], [0], [0], [1], [0, 0, 1, 1], [], []>} : vector<2x16xf32>, vector<16x64xf32>, vector<2x64xf32> -> vector<2x64xf32>
      %23 = arith.addf %16, %22 : vector<2x64xf32>
      %24 = vector.extract_strided_slice %23 {offsets = [0, 0], sizes = [2, 48], strides = [1, 1]} : vector<2x64xf32> to vector<2x48xf32>
      %25 = arith.negf %24 : vector<2x48xf32>
      %26 = math.exp %25 : vector<2x48xf32>
      %cst_26 = arith.constant 1.000000e+00 : f32
      %27 = vector.broadcast %cst_26 : f32 to vector<2x48xf32>
      %28 = arith.addf %27, %26 : vector<2x48xf32>
      %29 = arith.divf %27, %28 : vector<2x48xf32>
      %30 = vector.extract_strided_slice %23 {offsets = [0, 48], sizes = [2, 16], strides = [1, 1]} : vector<2x64xf32> to vector<2x16xf32>
      %31 = math.tanh %30 : vector<2x16xf32>
      %32 = vector.extract_strided_slice %29 {offsets = [0, 16], sizes = [2, 16], strides = [1, 1]} : vector<2x48xf32> to vector<2x16xf32>
      %33 = arith.mulf %32, %21 : vector<2x16xf32>
      %34 = vector.extract_strided_slice %29 {offsets = [0, 0], sizes = [2, 16], strides = [1, 1]} : vector<2x48xf32> to vector<2x16xf32>
      %35 = arith.mulf %34, %31 : vector<2x16xf32>
      %36 = arith.addf %33, %35 : vector<2x16xf32>
      %37 = vector.extract_strided_slice %29 {offsets = [0, 32], sizes = [2, 16], strides = [1, 1]} : vector<2x48xf32> to vector<2x16xf32>
      %38 = math.tanh %36 : vector<2x16xf32>
      %39 = arith.mulf %37, %38 : vector<2x16xf32>
      %40 = vector.broadcast %19 : vector<2x1xf32> to vector<2x16xf32>
      %41 = arith.mulf %40, %39 : vector<2x16xf32>
      %cst_27 = arith.constant 1.000000e+00 : f32
      %42 = vector.broadcast %cst_27 : f32 to vector<2x1xf32>
      %43 = arith.subf %42, %19 : vector<2x1xf32>
      %44 = vector.broadcast %43 : vector<2x1xf32> to vector<2x16xf32>
      %45 = arith.mulf %44, %20 : vector<2x16xf32>
      %46 = arith.addf %41, %45 : vector<2x16xf32>
      %47 = vector.broadcast %19 : vector<2x1xf32> to vector<2x16xf32>
      %48 = arith.mulf %47, %36 : vector<2x16xf32>
      %cst_28 = arith.constant 1.000000e+00 : f32
      %49 = vector.broadcast %cst_28 : f32 to vector<2x1xf32>
      %50 = arith.subf %49, %19 : vector<2x1xf32>
      %51 = vector.broadcast %50 : vector<2x1xf32> to vector<2x16xf32>
      %52 = arith.mulf %51, %21 : vector<2x16xf32>
      %53 = arith.addf %48, %52 : vector<2x16xf32>
      %54 = arith.index_cast %13 : i32 to index
      %c0_29 = arith.constant 0 : index
      %c0_30 = arith.constant 0 : index
      %55 = vector.load %arg2[%54, %c0_29, %c0_30] : memref<16x2x64xf32, #tpu.memory_space<vmem>>, vector<1x2x64xf32>
      %56 = vector.shape_cast %55 : vector<1x2x64xf32> to vector<2x64xf32>
      %57 = arith.index_cast %13 : i32 to index
      %c0_31 = arith.constant 0 : index
      %c0_32 = arith.constant 0 : index
      %58 = vector.load %arg3[%57, %c0_31, %c0_32] : memref<16x2x1xf32, #tpu.memory_space<vmem>>, vector<1x2x1xf32>
      %59 = vector.shape_cast %58 : vector<1x2x1xf32> to vector<2x1xf32>
      %c0_33 = arith.constant 0 : index
      %c0_34 = arith.constant 0 : index
      %60 = vector.load %arg8[%c0_33, %c0_34] : memref<2x16xf32, #tpu.memory_space<vmem>>, vector<2x16xf32>
      %c0_35 = arith.constant 0 : index
      %c0_36 = arith.constant 0 : index
      %61 = vector.load %arg10[%c0_35, %c0_36] : memref<2x16xf32, #tpu.memory_space<vmem>>, vector<2x16xf32>
      %cst_37 = arith.constant dense<0.000000e+00> : vector<2x64xf32>
      %62 = tpu.matmul %60, %9, %cst_37 {dimension_numbers = #tpu.dot_dimension_numbers<[1], [0], [0], [1], [0, 0, 1, 1], [], []>} : vector<2x16xf32>, vector<16x64xf32>, vector<2x64xf32> -> vector<2x64xf32>
      %63 = arith.addf %56, %62 : vector<2x64xf32>
      %64 = vector.extract_strided_slice %63 {offsets = [0, 0], sizes = [2, 48], strides = [1, 1]} : vector<2x64xf32> to vector<2x48xf32>
      %65 = arith.negf %64 : vector<2x48xf32>
      %66 = math.exp %65 : vector<2x48xf32>
      %cst_38 = arith.constant 1.000000e+00 : f32
      %67 = vector.broadcast %cst_38 : f32 to vector<2x48xf32>
      %68 = arith.addf %67, %66 : vector<2x48xf32>
      %69 = arith.divf %67, %68 : vector<2x48xf32>
      %70 = vector.extract_strided_slice %63 {offsets = [0, 48], sizes = [2, 16], strides = [1, 1]} : vector<2x64xf32> to vector<2x16xf32>
      %71 = math.tanh %70 : vector<2x16xf32>
      %72 = vector.extract_strided_slice %69 {offsets = [0, 16], sizes = [2, 16], strides = [1, 1]} : vector<2x48xf32> to vector<2x16xf32>
      %73 = arith.mulf %72, %61 : vector<2x16xf32>
      %74 = vector.extract_strided_slice %69 {offsets = [0, 0], sizes = [2, 16], strides = [1, 1]} : vector<2x48xf32> to vector<2x16xf32>
      %75 = arith.mulf %74, %71 : vector<2x16xf32>
      %76 = arith.addf %73, %75 : vector<2x16xf32>
      %77 = vector.extract_strided_slice %69 {offsets = [0, 32], sizes = [2, 16], strides = [1, 1]} : vector<2x48xf32> to vector<2x16xf32>
      %78 = math.tanh %76 : vector<2x16xf32>
      %79 = arith.mulf %77, %78 : vector<2x16xf32>
      %80 = vector.broadcast %59 : vector<2x1xf32> to vector<2x16xf32>
      %81 = arith.mulf %80, %79 : vector<2x16xf32>
      %cst_39 = arith.constant 1.000000e+00 : f32
      %82 = vector.broadcast %cst_39 : f32 to vector<2x1xf32>
      %83 = arith.subf %82, %59 : vector<2x1xf32>
      %84 = vector.broadcast %83 : vector<2x1xf32> to vector<2x16xf32>
      %85 = arith.mulf %84, %60 : vector<2x16xf32>
      %86 = arith.addf %81, %85 : vector<2x16xf32>
      %87 = vector.broadcast %59 : vector<2x1xf32> to vector<2x16xf32>
      %88 = arith.mulf %87, %76 : vector<2x16xf32>
      %cst_40 = arith.constant 1.000000e+00 : f32
      %89 = vector.broadcast %cst_40 : f32 to vector<2x1xf32>
      %90 = arith.subf %89, %59 : vector<2x1xf32>
      %91 = vector.broadcast %90 : vector<2x1xf32> to vector<2x16xf32>
      %92 = arith.mulf %91, %61 : vector<2x16xf32>
      %93 = arith.addf %88, %92 : vector<2x16xf32>
      %c0_41 = arith.constant 0 : index
      %c0_42 = arith.constant 0 : index
      %94 = vector.load %arg7[%c0_41, %c0_42] : memref<2x16xf32, #tpu.memory_space<vmem>>, vector<2x16xf32>
      tpu.vector_store %arg7[%c0_41, %c0_42], %46 {strides = array<i32>} : memref<2x16xf32, #tpu.memory_space<vmem>>, vector<2x16xf32>,
      %c0_43 = arith.constant 0 : index
      %c0_44 = arith.constant 0 : index
      %95 = vector.load %arg9[%c0_43, %c0_44] : memref<2x16xf32, #tpu.memory_space<vmem>>, vector<2x16xf32>
      tpu.vector_store %arg9[%c0_43, %c0_44], %53 {strides = array<i32>} : memref<2x16xf32, #tpu.memory_space<vmem>>, vector<2x16xf32>,
      %c0_45 = arith.constant 0 : index
      %c0_46 = arith.constant 0 : index
      %96 = vector.load %arg8[%c0_45, %c0_46] : memref<2x16xf32, #tpu.memory_space<vmem>>, vector<2x16xf32>
      tpu.vector_store %arg8[%c0_45, %c0_46], %86 {strides = array<i32>} : memref<2x16xf32, #tpu.memory_space<vmem>>, vector<2x16xf32>,
      %c0_47 = arith.constant 0 : index
      %c0_48 = arith.constant 0 : index
      %97 = vector.load %arg10[%c0_47, %c0_48] : memref<2x16xf32, #tpu.memory_space<vmem>>, vector<2x16xf32>
      tpu.vector_store %arg10[%c0_47, %c0_48], %93 {strides = array<i32>} : memref<2x16xf32, #tpu.memory_space<vmem>>, vector<2x16xf32>,
      %98 = arith.index_cast %12 : i32 to index
      %c0_49 = arith.constant 0 : index
      %c0_50 = arith.constant 0 : index
      %99 = vector.load %arg6[%98, %c0_49, %c0_50] : memref<16x2x32xf32, #tpu.memory_space<vmem>>, vector<1x2x16xf32>
      %100 = vector.shape_cast %99 : vector<1x2x16xf32> to vector<2x16xf32>
      %101 = vector.shape_cast %41 : vector<2x16xf32> to vector<1x2x16xf32>
      tpu.vector_store %arg6[%98, %c0_49, %c0_50], %101 {strides = array<i32>} : memref<16x2x32xf32, #tpu.memory_space<vmem>>, vector<1x2x16xf32>,
      %102 = arith.index_cast %13 : i32 to index
      %c0_51 = arith.constant 0 : index
      %c16 = arith.constant 16 : index
      %103 = vector.load %arg6[%102, %c0_51, %c16] : memref<16x2x32xf32, #tpu.memory_space<vmem>>, vector<1x2x16xf32>
      %104 = vector.shape_cast %103 : vector<1x2x16xf32> to vector<2x16xf32>
      %105 = vector.shape_cast %81 : vector<2x16xf32> to vector<1x2x16xf32>
      tpu.vector_store %arg6[%102, %c0_51, %c16], %105 {strides = array<i32>} : memref<16x2x32xf32, #tpu.memory_space<vmem>>, vector<1x2x16xf32>,
    }
    %c16_i32_14 = arith.constant 16 : i32
    return
  }
  func.func @transform_0(%arg0: i32) -> (i32, i32, i32) {
    %c0_i32 = arith.constant 0 : i32
    %c0_i32_0 = arith.constant 0 : i32
    %c0_i32_1 = arith.constant 0 : i32
    return %c0_i32, %arg0, %c0_i32_0 : i32, i32, i32
  }
  func.func @transform_1(%arg0: i32) -> (i32, i32, i32) {
    %c0_i32 = arith.constant 0 : i32
    %c0_i32_0 = arith.constant 0 : i32
    %c0_i32_1 = arith.constant 0 : i32
    return %c0_i32, %arg0, %c0_i32_0 : i32, i32, i32
  }
  func.func @transform_2(%arg0: i32) -> (i32, i32, i32) {
    %c0_i32 = arith.constant 0 : i32
    %c0_i32_0 = arith.constant 0 : i32
    %c0_i32_1 = arith.constant 0 : i32
    return %c0_i32, %arg0, %c0_i32_0 : i32, i32, i32
  }
  func.func @transform_3(%arg0: i32) -> (i32, i32) {
    %c0_i32 = arith.constant 0 : i32
    %c0_i32_0 = arith.constant 0 : i32
    %c0_i32_1 = arith.constant 0 : i32
    return %c0_i32, %c0_i32_0 : i32, i32
  }
  func.func @transform_4(%arg0: i32) -> (i32, i32) {
    %c0_i32 = arith.constant 0 : i32
    %c0_i32_0 = arith.constant 0 : i32
    %c0_i32_1 = arith.constant 0 : i32
    return %c0_i32, %c0_i32_0 : i32, i32
  }
  func.func @transform_5(%arg0: i32) -> (i32, i32, i32) {
    %c0_i32 = arith.constant 0 : i32
    %c0_i32_0 = arith.constant 0 : i32
    %c0_i32_1 = arith.constant 0 : i32
    return %c0_i32, %arg0, %c0_i32_0 : i32, i32, i32
  }
}

module attributes {stable_mosaic.version = 11 : i64} {
  func.func @_pool_maxout_kernel(%arg0: i32, %arg1: memref<16x2x32xf32, #tpu.memory_space<vmem>>, %arg2: memref<16x2x1xf32, #tpu.memory_space<vmem>>, %arg3: memref<1x32xf32, #tpu.memory_space<vmem>>, %arg4: memref<1x1xf32, #tpu.memory_space<vmem>>, %arg5: memref<128x8xf32, #tpu.memory_space<vmem>>, %arg6: memref<1x8xf32, #tpu.memory_space<vmem>>, %arg7: memref<2x4xf32, #tpu.memory_space<vmem>>, %arg8: memref<2x4xf32, #tpu.memory_space<vmem>>) attributes {dimension_semantics = [#tpu.dimension_semantics<parallel>], iteration_bounds = array<i64: 1>, scalar_prefetch = 0 : i64, scratch_operands = 0 : i64, tpu.core_type = #tpu.core_type<tc>, window_params = [{transform_indices = @transform_0, window_bounds = array<i64: 16, 2, 32>}, {transform_indices = @transform_1, window_bounds = array<i64: 16, 2, 1>}, {pipeline_mode = #tpu.pipeline_mode<synchronous>, transform_indices = @transform_2, window_bounds = array<i64: 1, 32>}, {pipeline_mode = #tpu.pipeline_mode<synchronous>, transform_indices = @transform_3, window_bounds = array<i64: 1, 1>}, {pipeline_mode = #tpu.pipeline_mode<synchronous>, transform_indices = @transform_4, window_bounds = array<i64: 128, 8>}, {pipeline_mode = #tpu.pipeline_mode<synchronous>, transform_indices = @transform_5, window_bounds = array<i64: 1, 8>}, {transform_indices = @transform_6, window_bounds = array<i64: 2, 4>}, {transform_indices = @transform_7, window_bounds = array<i64: 2, 4>}]} {
    %c0 = arith.constant 0 : index
    %c0_0 = arith.constant 0 : index
    %c0_1 = arith.constant 0 : index
    %0 = vector.load %arg1[%c0, %c0_0, %c0_1] : memref<16x2x32xf32, #tpu.memory_space<vmem>>, vector<16x2x32xf32>
    %c0_2 = arith.constant 0 : index
    %c0_3 = arith.constant 0 : index
    %c0_4 = arith.constant 0 : index
    %1 = vector.load %arg2[%c0_2, %c0_3, %c0_4] : memref<16x2x1xf32, #tpu.memory_space<vmem>>, vector<16x2x1xf32>
    %cst = arith.constant 5.000000e-01 : f32
    %2 = vector.broadcast %cst : f32 to vector<16x2x1xf32>
    %3 = arith.cmpf ogt, %1, %2 : vector<16x2x1xf32>
    %cst_5 = arith.constant -1.000000e+07 : f32
    %4 = vector.shape_cast %3 : vector<16x2x1xi1> to vector<16x2x1xi1>
    %5 = vector.broadcast %4 : vector<16x2x1xi1> to vector<16x2x32xi1>
    %6 = vector.broadcast %cst_5 : f32 to vector<16x2x32xf32>
    %7 = arith.select %5, %0, %6 : vector<16x2x32xi1>, vector<16x2x32xf32>
    %cst_6 = arith.constant dense<0xFF800000> : vector<2x32xf32>
    %8 = vector.multi_reduction <maximumf>, %7, %cst_6 [0] : vector<16x2x32xf32> to vector<2x32xf32>
    %cst_7 = arith.constant 1.000000e+07 : f32
    %9 = vector.shape_cast %3 : vector<16x2x1xi1> to vector<16x2x1xi1>
    %10 = vector.broadcast %9 : vector<16x2x1xi1> to vector<16x2x32xi1>
    %11 = vector.broadcast %cst_7 : f32 to vector<16x2x32xf32>
    %12 = arith.select %10, %0, %11 : vector<16x2x32xi1>, vector<16x2x32xf32>
    %cst_8 = arith.constant dense<0x7F800000> : vector<2x32xf32>
    %13 = vector.multi_reduction <minimumf>, %12, %cst_8 [0] : vector<16x2x32xf32> to vector<2x32xf32>
    %cst_9 = arith.constant dense<0.000000e+00> : vector<2x32xf32>
    %14 = vector.multi_reduction <add>, %0, %cst_9 [0] : vector<16x2x32xf32> to vector<2x32xf32>
    %cst_10 = arith.constant dense<0.000000e+00> : vector<2x1xf32>
    %15 = vector.multi_reduction <add>, %1, %cst_10 [0] : vector<16x2x1xf32> to vector<2x1xf32>
    %16 = vector.broadcast %15 : vector<2x1xf32> to vector<2x32xf32>
    %17 = arith.divf %14, %16 : vector<2x32xf32>
    %c0_11 = arith.constant 0 : index
    %c0_12 = arith.constant 0 : index
    %18 = vector.load %arg3[%c0_11, %c0_12] : memref<1x32xf32, #tpu.memory_space<vmem>>, vector<1x32xf32>
    %19 = vector.shape_cast %18 : vector<1x32xf32> to vector<1x1x32xf32>
    %20 = vector.broadcast %19 : vector<1x1x32xf32> to vector<16x2x32xf32>
    %21 = arith.mulf %0, %20 : vector<16x2x32xf32>
    %cst_13 = arith.constant dense<0.000000e+00> : vector<16x2xf32>
    %22 = vector.multi_reduction <add>, %21, %cst_13 [2] : vector<16x2x32xf32> to vector<16x2xf32>
    %23 = vector.shape_cast %22 : vector<16x2xf32> to vector<16x2x1xf32>
    %c0_14 = arith.constant 0 : index
    %c0_15 = arith.constant 0 : index
    %24 = vector.load %arg4[%c0_14, %c0_15] : memref<1x1xf32, #tpu.memory_space<vmem>>, vector<1x1xf32>
    %25 = vector.extract %24[0, 0] : f32 from vector<1x1xf32>
    %26 = vector.broadcast %25 : f32 to vector<16x2x1xf32>
    %27 = arith.addf %23, %26 : vector<16x2x1xf32>
    %28 = arith.mulf %27, %1 : vector<16x2x1xf32>
    %cst_16 = arith.constant dense<0xFF800000> : vector<2x1xf32>
    %29 = vector.multi_reduction <maximumf>, %28, %cst_16 [0] : vector<16x2x1xf32> to vector<2x1xf32>
    %30 = vector.shape_cast %29 : vector<2x1xf32> to vector<1x2x1xf32>
    %31 = vector.broadcast %30 : vector<1x2x1xf32> to vector<16x2x1xf32>
    %32 = arith.subf %28, %31 : vector<16x2x1xf32>
    %33 = math.exp %32 : vector<16x2x1xf32>
    %cst_17 = arith.constant dense<0.000000e+00> : vector<2x1xf32>
    %34 = vector.multi_reduction <add>, %33, %cst_17 [0] : vector<16x2x1xf32> to vector<2x1xf32>
    %35 = vector.shape_cast %34 : vector<2x1xf32> to vector<1x2x1xf32>
    %36 = tpu.reciprocal %35 {approx = true} : vector<1x2x1xf32> -> vector<1x2x1xf32>
    %37 = vector.broadcast %36 : vector<1x2x1xf32> to vector<16x2x1xf32>
    %38 = arith.mulf %33, %37 : vector<16x2x1xf32>
    %39 = arith.mulf %38, %1 : vector<16x2x1xf32>
    %cst_18 = arith.constant dense<0.000000e+00> : vector<2x1xf32>
    %40 = vector.multi_reduction <add>, %39, %cst_18 [0] : vector<16x2x1xf32> to vector<2x1xf32>
    %41 = vector.shape_cast %40 : vector<2x1xf32> to vector<1x2x1xf32>
    %cst_19 = arith.constant 9.99999982E-14 : f32
    %42 = vector.broadcast %cst_19 : f32 to vector<1x2x1xf32>
    %43 = arith.addf %41, %42 : vector<1x2x1xf32>
    %44 = tpu.reciprocal %43 {approx = true} : vector<1x2x1xf32> -> vector<1x2x1xf32>
    %45 = vector.broadcast %44 : vector<1x2x1xf32> to vector<16x2x1xf32>
    %46 = arith.mulf %39, %45 : vector<16x2x1xf32>
    %47 = vector.broadcast %46 : vector<16x2x1xf32> to vector<16x2x32xf32>
    %48 = arith.mulf %47, %0 : vector<16x2x32xf32>
    %cst_20 = arith.constant dense<0.000000e+00> : vector<2x32xf32>
    %49 = vector.multi_reduction <add>, %48, %cst_20 [0] : vector<16x2x32xf32> to vector<2x32xf32>
    %50 = tpu.concatenate %8, %13, %17, %49 in 1 : vector<2x32xf32>, vector<2x32xf32>, vector<2x32xf32>, vector<2x32xf32> -> vector<2x128xf32>
    %c0_21 = arith.constant 0 : index
    %c0_22 = arith.constant 0 : index
    %51 = vector.load %arg5[%c0_21, %c0_22] : memref<128x8xf32, #tpu.memory_space<vmem>>, vector<128x8xf32>
    %cst_23 = arith.constant dense<0.000000e+00> : vector<2x8xf32>
    %52 = tpu.matmul %50, %51, %cst_23 {dimension_numbers = #tpu.dot_dimension_numbers<[1], [0], [0], [1], [0, 0, 1, 1], [], []>} : vector<2x128xf32>, vector<128x8xf32>, vector<2x8xf32> -> vector<2x8xf32>
    %c0_24 = arith.constant 0 : index
    %c0_25 = arith.constant 0 : index
    %53 = vector.load %arg6[%c0_24, %c0_25] : memref<1x8xf32, #tpu.memory_space<vmem>>, vector<1x8xf32>
    %54 = vector.broadcast %53 : vector<1x8xf32> to vector<2x8xf32>
    %55 = arith.addf %52, %54 : vector<2x8xf32>
    %56 = vector.extract_strided_slice %55 {offsets = [0, 0], sizes = [2, 4], strides = [1, 1]} : vector<2x8xf32> to vector<2x4xf32>
    %57 = vector.extract_strided_slice %55 {offsets = [0, 4], sizes = [2, 4], strides = [1, 1]} : vector<2x8xf32> to vector<2x4xf32>
    %58 = arith.maximumf %56, %57 : vector<2x4xf32>
    %c0_26 = arith.constant 0 : index
    %c0_27 = arith.constant 0 : index
    %59 = vector.load %arg7[%c0_26, %c0_27] : memref<2x4xf32, #tpu.memory_space<vmem>>, vector<2x4xf32>
    tpu.vector_store %arg7[%c0_26, %c0_27], %58 {strides = array<i32>} : memref<2x4xf32, #tpu.memory_space<vmem>>, vector<2x4xf32>,
    %cst_28 = arith.constant dense<0xFF800000> : vector<2xf32>
    %60 = vector.multi_reduction <maximumf>, %58, %cst_28 [1] : vector<2x4xf32> to vector<2xf32>
    %61 = vector.shape_cast %60 : vector<2xf32> to vector<2x1xf32>
    %62 = vector.broadcast %61 : vector<2x1xf32> to vector<2x4xf32>
    %63 = arith.subf %58, %62 : vector<2x4xf32>
    %64 = math.exp %63 : vector<2x4xf32>
    %cst_29 = arith.constant dense<0.000000e+00> : vector<2xf32>
    %65 = vector.multi_reduction <add>, %64, %cst_29 [1] : vector<2x4xf32> to vector<2xf32>
    %66 = vector.shape_cast %65 : vector<2xf32> to vector<2x1xf32>
    %67 = vector.broadcast %66 : vector<2x1xf32> to vector<2x4xf32>
    %68 = arith.divf %64, %67 : vector<2x4xf32>
    %c0_30 = arith.constant 0 : index
    %c0_31 = arith.constant 0 : index
    %69 = vector.load %arg8[%c0_30, %c0_31] : memref<2x4xf32, #tpu.memory_space<vmem>>, vector<2x4xf32>
    tpu.vector_store %arg8[%c0_30, %c0_31], %68 {strides = array<i32>} : memref<2x4xf32, #tpu.memory_space<vmem>>, vector<2x4xf32>,
    return
  }
  func.func @transform_0(%arg0: i32) -> (i32, i32, i32) {
    %c0_i32 = arith.constant 0 : i32
    %c0_i32_0 = arith.constant 0 : i32
    %c0_i32_1 = arith.constant 0 : i32
    return %c0_i32, %arg0, %c0_i32_0 : i32, i32, i32
  }
  func.func @transform_1(%arg0: i32) -> (i32, i32, i32) {
    %c0_i32 = arith.constant 0 : i32
    %c0_i32_0 = arith.constant 0 : i32
    %c0_i32_1 = arith.constant 0 : i32
    return %c0_i32, %arg0, %c0_i32_0 : i32, i32, i32
  }
  func.func @transform_2(%arg0: i32) -> (i32, i32) {
    %c0_i32 = arith.constant 0 : i32
    %c0_i32_0 = arith.constant 0 : i32
    %c0_i32_1 = arith.constant 0 : i32
    return %c0_i32, %c0_i32_0 : i32, i32
  }
  func.func @transform_3(%arg0: i32) -> (i32, i32) {
    %c0_i32 = arith.constant 0 : i32
    %c0_i32_0 = arith.constant 0 : i32
    %c0_i32_1 = arith.constant 0 : i32
    return %c0_i32, %c0_i32_0 : i32, i32
  }
  func.func @transform_4(%arg0: i32) -> (i32, i32) {
    %c0_i32 = arith.constant 0 : i32
    %c0_i32_0 = arith.constant 0 : i32
    %c0_i32_1 = arith.constant 0 : i32
    return %c0_i32, %c0_i32_0 : i32, i32
  }
  func.func @transform_5(%arg0: i32) -> (i32, i32) {
    %c0_i32 = arith.constant 0 : i32
    %c0_i32_0 = arith.constant 0 : i32
    %c0_i32_1 = arith.constant 0 : i32
    return %c0_i32, %c0_i32_0 : i32, i32
  }
  func.func @transform_6(%arg0: i32) -> (i32, i32) {
    %c0_i32 = arith.constant 0 : i32
    %c0_i32_0 = arith.constant 0 : i32
    return %arg0, %c0_i32 : i32, i32
  }
  func.func @transform_7(%arg0: i32) -> (i32, i32) {
    %c0_i32 = arith.constant 0 : i32
    %c0_i32_0 = arith.constant 0 : i32
    return %arg0, %c0_i32 : i32, i32
  }
}

</mosaic_0001>

<llo_original>
// kernel: bcn_forward.5
$region0: #{bcn_forward.5}
  #allocation0 [shape = 'u32[]', space=smem, size = 0x4, offset = 0x4, fixed_abs, tag = 'smem constant byte address 0x4 - core index']
  #allocation1 [shape = 'u32[72,128]{1,0:T(1,128)}', space=vmem, size = 0x9000, scoped, tag = 'internal scratch']
  %s0 = inlined_call_operand.vmem [shape: f32[32,32], index: 0, kind: input, shape index: {}]
  %s1 = inlined_call_operand.vmem [shape: f32[32,32], index: 1, kind: input, shape index: {}]
  %s2 = inlined_call_operand.vmem [shape: f32[1,32], index: 2, kind: input, shape index: {}]
  %s3 = inlined_call_operand.vmem [shape: f32[32,128], index: 3, kind: input, shape index: {}]
  %s4 = inlined_call_operand.vmem [shape: f32[1,128], index: 4, kind: input, shape index: {}]
  %s5 = inlined_call_operand.vmem [shape: bf16[32,64], index: 5, kind: output, shape index: {0}]
  %s6 = inlined_call_operand.vmem [shape: bf16[32,64], index: 6, kind: output, shape index: {1}]
  %7 = xla_tuple %s5, %s6
  %s8 = sld [smem:[#allocation0]]
  $region38: #{bcn_forward.5} parent=0
    _
  %s10 = ssub.s32 1, %s8
  %s11 = scalar_select 0, %s10, %s8
  // Predicated region
  $region2: #{bcn_forward.5} parent=0 // pred_check
    _
  $region3: #{bcn_forward.5} parent=0 // pred_check_branch
    %13 = sbr.rel (0) target = $region5
  $region4: #{bcn_forward.5} parent=0 // pred_region
    _
  $region5: #{bcn_forward.5} parent=0 // pred_fallthru
    _
  // Predicated region
  $region6: #{bcn_forward.5} parent=0 // pred_check
    _
  $region7: #{bcn_forward.5} parent=0 // pred_check_branch
    %15 = sbr.rel (0) target = $region9
  $region8: #{bcn_forward.5} parent=0 // pred_region
    _
  $region9: #{bcn_forward.5} parent=0 // pred_fallthru
    _
  // Predicated region
  $region10: #{bcn_forward.5} parent=0 // pred_check
    _
  $region11: #{bcn_forward.5} parent=0 // pred_check_branch
    %17 = sbr.rel (0) target = $region13
  $region12: #{bcn_forward.5} parent=0 // pred_region
    _
  $region13: #{bcn_forward.5} parent=0 // pred_fallthru
    _
  // Predicated region
  $region14: #{bcn_forward.5} parent=0 // pred_check
    _
  $region15: #{bcn_forward.5} parent=0 // pred_check_branch
    %19 = sbr.rel (0) target = $region17
  $region16: #{bcn_forward.5} parent=0 // pred_region
    _
  $region17: #{bcn_forward.5} parent=0 // pred_fallthru
    _
  // Predicated region
  $region18: #{bcn_forward.5} parent=0 // pred_check
    _
  $region19: #{bcn_forward.5} parent=0 // pred_check_branch
    %21 = sbr.rel (0) target = $region21
  $region20: #{bcn_forward.5} parent=0 // pred_region
    _
  $region21: #{bcn_forward.5} parent=0 // pred_fallthru
    _
  %v22 = vld [vmem:[%s0] sm:$0xff]
  %v23 = vld [vmem:[%s0 + $0x8] sm:$0xff]
  %v24 = vld [vmem:[%s0 + $0x10] sm:$0xff]
  %v25 = vld [vmem:[%s0 + $0x18] sm:$0xff]
  %v26 = vld [vmem:[%s1] sm:$0xff]
  %v27 = vld [vmem:[%s1 + $0x8] sm:$0xff]
  %v28 = vld [vmem:[%s1 + $0x10] sm:$0xff]
  %v29 = vld [vmem:[%s1 + $0x18] sm:$0xff]
  %v30 = vld [vmem:[%s2] sm:$0x1]
  %v32 = vperm.slane %v30, 0
  %vm34 = vcmask 261120
  %v36 = vsel %vm34, %v22, 0
  %v39 = vsel %vm34, %v23, 0
  %v42 = vsel %vm34, %v24, 0
  %v45 = vsel %vm34, %v25, 0
  %47 = vmatpush.msra.mxu0 0.0
  %48 = vmatpush.msra.mxu0 0.0
  %49 = vmatpush.msra.mxu0 0.0
  %50 = vmatpush.msra.mxu0 0.0
  %51 = vmatpush.msra.mxu0 0.0
  %52 = vmatpush.msra.mxu0 0.0
  %53 = vmatpush.msra.mxu0 0.0
  %54 = vmatpush.msra.mxu0 0.0
  %55 = vmatpush.msra.mxu0 0.0
  %56 = vmatpush.msra.mxu0 0.0
  %57 = vmatpush.msra.mxu0 0.0
  %58 = vmatpush.msra.mxu0 0.0
  %59 = vmatpush.msra.mxu0 %v29
  %60 = vmatpush.msra.mxu0 %v28
  %61 = vmatpush.msra.mxu0 %v27
  %62 = vmatpush.msra.mxu0 %v26
  %63 = vmatmul.f32.gmra.mxu0 %v36
  %v64 = vpop.f32.mrf.mxu0
  %v65 = vadd.f32 %v32, %v64
  %66 = vmatmul.f32.gmra.mxu0 %v39
  %v67 = vpop.f32.mrf.mxu0
  %v68 = vadd.f32 %v32, %v67
  %69 = vmatmul.f32.gmra.mxu0 %v42
  %v70 = vpop.f32.mrf.mxu0
  %v71 = vadd.f32 %v32, %v70
  %72 = vmatmul.f32.gmra.mxu0 %v45
  %v73 = vpop.f32.mrf.mxu0
  %v74 = vadd.f32 %v32, %v73
  %75 = vdwg.mxu0
  %v76 = vmax.f32 %v65, 0.0
  %v77 = vmax.f32 %v68, 0.0
  %v78 = vmax.f32 %v71, 0.0
  %v79 = vmax.f32 %v74, 0.0
  %v80 = vld [vmem:[%s3] sm:$0xff]
  %v81 = vld [vmem:[%s3 + $0x8] sm:$0xff]
  %v82 = vld [vmem:[%s3 + $0x10] sm:$0xff]
  %v83 = vld [vmem:[%s3 + $0x18] sm:$0xff]
  %v84 = vld [vmem:[%s4] sm:$0x1]
  %v86 = vperm.slane %v84, 0
  %v89 = vsel %vm34, %v76, 0
  %v92 = vsel %vm34, %v77, 0
  %v95 = vsel %vm34, %v78, 0
  %v98 = vsel %vm34, %v79, 0
  %100 = vmatpush.msra.mxu0 0.0
  %101 = vmatpush.msra.mxu0 0.0
  %102 = vmatpush.msra.mxu0 0.0
  %103 = vmatpush.msra.mxu0 0.0
  %104 = vmatpush.msra.mxu0 0.0
  %105 = vmatpush.msra.mxu0 0.0
  %106 = vmatpush.msra.mxu0 0.0
  %107 = vmatpush.msra.mxu0 0.0
  %108 = vmatpush.msra.mxu0 0.0
  %109 = vmatpush.msra.mxu0 0.0
  %110 = vmatpush.msra.mxu0 0.0
  %111 = vmatpush.msra.mxu0 0.0
  %112 = vmatpush.msra.mxu0 %v83
  %113 = vmatpush.msra.mxu0 %v82
  %114 = vmatpush.msra.mxu0 %v81
  %115 = vmatpush.msra.mxu0 %v80
  %116 = vmatmul.f32.gmra.mxu0 %v89
  %v117 = vpop.f32.mrf.mxu0
  %v118 = vadd.f32 %v86, %v117
  %119 = vmatmul.f32.gmra.mxu0 %v92
  %v120 = vpop.f32.mrf.mxu0
  %v121 = vadd.f32 %v86, %v120
  %122 = vmatmul.f32.gmra.mxu0 %v95
  %v123 = vpop.f32.mrf.mxu0
  %v124 = vadd.f32 %v86, %v123
  %125 = vmatmul.f32.gmra.mxu0 %v98
  %v126 = vpop.f32.mrf.mxu0
  %v127 = vadd.f32 %v86, %v126
  %128 = vdwg.mxu0
  %v129 = vpack.c.bf16 %v118, %v118
  %v130 = vpack.c.bf16 %v121, %v121
  %v131 = vpack.c.bf16 %v124, %v124
  %v132 = vpack.c.bf16 %v127, %v127
  %vm133 = vcmask 519168
  %134 = vst.msk [vmem:[%s5] sm:$0xf] %vm133, %v129
  %135 = vst.msk [vmem:[%s5 + $0x4] sm:$0xf] %vm133, %v130
  %136 = vst.msk [vmem:[%s5 + $0x8] sm:$0xf] %vm133, %v131
  %137 = vst.msk [vmem:[%s5 + $0xc] sm:$0xf] %vm133, %v132
  %142 = vrot.lane.b32.xlu0 %v129, 64
  %v143 = vpop.permute.xlu0 %142
  %144 = vrot.lane.b32.xlu0 %v130, 64
  %v145 = vpop.permute.xlu0 %144
  %146 = vrot.lane.b32.xlu0 %v131, 64
  %v147 = vpop.permute.xlu0 %146
  %148 = vrot.lane.b32.xlu0 %v132, 64
  %v149 = vpop.permute.xlu0 %148
  %154 = vst.msk [vmem:[%s6] sm:$0xf] %vm133, %v143
  %155 = vst.msk [vmem:[%s6 + $0x4] sm:$0xf] %vm133, %v145
  %156 = vst.msk [vmem:[%s6 + $0x8] sm:$0xf] %vm133, %v147
  %157 = vst.msk [vmem:[%s6 + $0xc] sm:$0xf] %vm133, %v149
  // Predicated region
  $region22: #{bcn_forward.5} parent=0 // pred_check
    _
  $region23: #{bcn_forward.5} parent=0 // pred_check_branch
    %159 = sbr.rel (0) target = $region25
  $region24: #{bcn_forward.5} parent=0 // pred_region
    _
  $region25: #{bcn_forward.5} parent=0 // pred_fallthru
    _
  // Predicated region
  $region26: #{bcn_forward.5} parent=0 // pred_check
    _
  $region27: #{bcn_forward.5} parent=0 // pred_check_branch
    %161 = sbr.rel (0) target = $region29
  $region28: #{bcn_forward.5} parent=0 // pred_region
    _
  $region29: #{bcn_forward.5} parent=0 // pred_fallthru
    _
  // Predicated region
  $region30: #{bcn_forward.5} parent=0 // pred_check
    _
  $region31: #{bcn_forward.5} parent=0 // pred_check_branch
    %163 = sbr.rel (0) target = $region33
  $region32: #{bcn_forward.5} parent=0 // pred_region
    _
  $region33: #{bcn_forward.5} parent=0 // pred_fallthru
    _
  // Predicated region
  $region34: #{bcn_forward.5} parent=0 // pred_check
    _
  $region35: #{bcn_forward.5} parent=0 // pred_check_branch
    %165 = sbr.rel (0) target = $region37
  $region36: #{bcn_forward.5} parent=0 // pred_region
    _
  $region37: #{bcn_forward.5} parent=0 // pred_fallthru
    _

// kernel: bcn_forward.6
$region0: #{bcn_forward.6}
  #allocation0 [shape = 'u32[]', space=smem, size = 0x4, offset = 0x4, fixed_abs, tag = 'smem constant byte address 0x4 - core index']
  #allocation1 [shape = 'u32[72,128]{1,0:T(1,128)}', space=vmem, size = 0x9000, scoped, tag = 'internal scratch']
  #allocation2 [shape = 'f32[2,16]{1,0:T(2,128)}', space=vmem, size = 0x400, scoped, tag = 'scratch operand']
  #allocation3 [shape = 'f32[2,16]{1,0:T(2,128)}', space=vmem, size = 0x400, scoped, tag = 'scratch operand']
  #allocation4 [shape = 'f32[2,16]{1,0:T(2,128)}', space=vmem, size = 0x400, scoped, tag = 'scratch operand']
  #allocation5 [shape = 'f32[2,16]{1,0:T(2,128)}', space=vmem, size = 0x400, scoped, tag = 'scratch operand']
  %s0 = inlined_call_operand.vmem [shape: bf16[16,2,64], index: 0, kind: input, shape index: {}]
  %s1 = inlined_call_operand.vmem [shape: bf16[16,2,64], index: 1, kind: input, shape index: {}]
  %s2 = inlined_call_operand.vmem [shape: f32[16,2,1], index: 2, kind: input, shape index: {}]
  %s3 = inlined_call_operand.hbm [shape: f32[16,64], index: 3, kind: input, shape index: {}]
  %s4 = inlined_call_operand.hbm [shape: f32[16,64], index: 4, kind: input, shape index: {}]
  %s5 = inlined_call_operand.vmem [shape: f32[16,2,32], index: 5, kind: output, shape index: {}]
  %s6 = sld [smem:[#allocation0]]
  $region45: #{bcn_forward.6} parent=0
    _
  %s8 = ssub.s32 1, %s6
  %s9 = scalar_select 0, %s8, %s6
  $region1: #{bcn_forward.6} parent=0
    #allocation6 [shape = 'u8[8192]{0}', space=vmem, size = 0x2000, scoped, tag = 'input window, operand 3, single buffered']
    #allocation7 [shape = 's32[1]{0}', space=sflag, size = 0x4, scoped, tag = 'scoped memory for bcn_forward.6']
    #allocation8 [shape = 'u8[8192]{0}', space=vmem, size = 0x2000, scoped, tag = 'input window, operand 4, single buffered']
    #allocation9 [shape = 's32[1]{0}', space=sflag, size = 0x4, scoped, tag = 'scoped memory for bcn_forward.6']
    %10 = vsyncpa [#allocation7], 0
    %11 = vsyncpa [#allocation9], 0
    // Predicated region
    $region2: #{bcn_forward.6} parent=1 // pred_check
      _
    $region3: #{bcn_forward.6} parent=1 // pred_check_branch
      %13 = sbr.rel (0) target = $region5
    $region4: #{bcn_forward.6} parent=1 // pred_region
      _
    $region5: #{bcn_forward.6} parent=1 // pred_fallthru
      _
    // Predicated region
    $region6: #{bcn_forward.6} parent=1 // pred_check
      _
    $region7: #{bcn_forward.6} parent=1 // pred_check_branch
      %15 = sbr.rel (0) target = $region9
    $region8: #{bcn_forward.6} parent=1 // pred_region
      _
    $region9: #{bcn_forward.6} parent=1 // pred_fallthru
      _
    // Predicated region
    $region10: #{bcn_forward.6} parent=1 // pred_check
      _
    $region11: #{bcn_forward.6} parent=1 // pred_check_branch
      %17 = sbr.rel (0) target = $region13
    $region12: #{bcn_forward.6} parent=1 // pred_region
      _
    $region13: #{bcn_forward.6} parent=1 // pred_fallthru
      _
    // Predicated region
    $region14: #{bcn_forward.6} parent=1 // pred_check
      _
    $region15: #{bcn_forward.6} parent=1 // pred_check_branch
      %19 = sbr.rel (0) target = $region17
    $region16: #{bcn_forward.6} parent=1 // pred_region
      %21 = vsyncadd [#allocation7], 0
      %s22 = sshll.u32 %s3, 4
      %s23 = int_to_ptr.hbm [resolvable:$true] %s22
      %s24 = sshll.u32 [#allocation6], 4
      %s25 = int_to_ptr.vmem [resolvable:$true] %s24
      %30 = dma.hbm_to_vmem [thread:$0]  %s23, 256, %s25, [#allocation7], 128, 128, 8
    $region17: #{bcn_forward.6} parent=1 // pred_fallthru
      _
    // Predicated region
    $region18: #{bcn_forward.6} parent=1 // pred_check
      _
    $region19: #{bcn_forward.6} parent=1 // pred_check_branch
      %32 = sbr.rel (0) target = $region21
    $region20: #{bcn_forward.6} parent=1 // pred_region
      %34 = vsyncadd [#allocation9], 0
      %s35 = sshll.u32 %s4, 4
      %s36 = int_to_ptr.hbm [resolvable:$true] %s35
      %s37 = sshll.u32 [#allocation8], 4
      %s38 = int_to_ptr.vmem [resolvable:$true] %s37
      %43 = dma.hbm_to_vmem [thread:$0]  %s36, 256, %s38, [#allocation9], 128, 128, 8
    $region21: #{bcn_forward.6} parent=1 // pred_fallthru
      _
    // Predicated region
    $region22: #{bcn_forward.6} parent=1 // pred_check
      _
    $region23: #{bcn_forward.6} parent=1 // pred_check_branch
      %45 = sbr.rel (0) target = $region25
    $region24: #{bcn_forward.6} parent=1 // pred_region
      %47 = dma.done [#allocation7], 256
    $region25: #{bcn_forward.6} parent=1 // pred_fallthru
      _
    // Predicated region
    $region26: #{bcn_forward.6} parent=1 // pred_check
      _
    $region27: #{bcn_forward.6} parent=1 // pred_check_branch
      %49 = sbr.rel (0) target = $region29
    $region28: #{bcn_forward.6} parent=1 // pred_region
      %51 = dma.done [#allocation9], 256
    $region29: #{bcn_forward.6} parent=1 // pred_fallthru
      _
    %vm52 = vcmask 123904
    %53 = vst.msk [vmem:[#allocation2] sm:$0x3] %vm52, 0.0
    %54 = vst.msk [vmem:[#allocation3] sm:$0x3] %vm52, 0.0
    %55 = vst.msk [vmem:[#allocation4] sm:$0x3] %vm52, 0.0
    %56 = vst.msk [vmem:[#allocation5] sm:$0x3] %vm52, 0.0
    %v57 = vld [vmem:[#allocation6] sm:$0xff]
    %v58 = vld [vmem:[#allocation6 + $0x8] sm:$0xff]
    %v59 = vld [vmem:[#allocation8] sm:$0xff]
    %v60 = vld [vmem:[#allocation8 + $0x8] sm:$0xff]
    loop: start=0, step=1, limit=16
    $region30: #{bcn_forward.6} parent=1 // loop_pre_header
      _
    $region31: #{bcn_forward.6} parent=1 // loop_header
      %s62 = sphi 0, %s66
      %p63 = scmp.ge.s32.totalorder %s62, 16
    $region32: #{bcn_forward.6} parent=1 // loop_header_branch
      %65 = sbr.rel (%p63) target = $region36
    $region33: #{bcn_forward.6} parent=1 // loop_body
      %s67 = ssub.s32 15, %s62
      %s68 = scalar_lea.vmem %s0, %s62
      %v69 = vld [vmem:[%s68] sm:$0x1]
      %s70 = smul.u32 %s62, 2
      %s71 = scalar_lea.vmem %s2, %s70
      %v72 = vld [vmem:[%s71] sm:$0x3]
      %v73 = vld [vmem:[#allocation2] sm:$0x3]
      %v74 = vld [vmem:[#allocation4] sm:$0x3]
      %v75 = vunpack.c.l.bf16 %v69
      %vm76 = vcmask 130048
      %v78 = vsel %vm76, %v73, 0
      %80 = vmatpush.msra.mxu0 0.0
      %81 = vmatpush.msra.mxu0 0.0
      %82 = vmatpush.msra.mxu0 0.0
      %83 = vmatpush.msra.mxu0 0.0
      %84 = vmatpush.msra.mxu0 0.0
      %85 = vmatpush.msra.mxu0 0.0
      %86 = vmatpush.msra.mxu0 0.0
      %87 = vmatpush.msra.mxu0 0.0
      %88 = vmatpush.msra.mxu0 0.0
      %89 = vmatpush.msra.mxu0 0.0
      %90 = vmatpush.msra.mxu0 0.0
      %91 = vmatpush.msra.mxu0 0.0
      %92 = vmatpush.msra.mxu0 0.0
      %93 = vmatpush.msra.mxu0 0.0
      %94 = vmatpush.msra.mxu0 %v58
      %95 = vmatpush.msra.mxu0 %v57
      %96 = vmatmul.f32.gmra.mxu0 %v78
      %v97 = vpop.f32.mrf.mxu0
      %v98 = vadd.f32 0.0, %v97
      %99 = vdwg.mxu0
      %v100 = vadd.f32 %v75, %v98
      %v101 = vxor.u32 %v100, 2147483648
      %v102 = vmul.f32 %v101, 1.442695
      %v103 = vpow.pop %v102
      %v104 = vadd.f32 %v103, 1.0
      %v105 = vrcp.pop %v104
      %v106 = vmul.f32 %v104, %v105
      %v107 = vsub.f32 1.0, %v106
      %v108 = vmul.f32 %v105, %v107
      %v109 = vadd.f32 %v105, %v108
      %vm110 = vweird.f32 %v104
      %vm111 = vweird.f32 %v105
      %vm112 = vmor %vm110, %vm111
      %v113 = vsel %vm112, %v105, %v109
      %v114 = vand.u32 2147483647, %v104
      %vm115 = vcmp.eq.f32.partialorder %v114, 8.507059e+37
      %v116 = vand.u32 %v104, 2147483648
      %v117 = vor.u32 1.1754944e-38, %v116
      %v118 = vsel %vm115, %v117, %v113
      %v119 = vmul.f32 1.0, %v118
      %v120 = vtanh.pop %v100
      %122 = vrot.lane.b32.xlu0 %v74, 16
      %v123 = vpop.permute.xlu0 %122
      %v125 = vmul.f32 %v119, %v123
      %127 = vrot.lane.b32.xlu0 %v120, 80
      %v128 = vpop.permute.xlu0 %127
      %v130 = vmul.f32 %v119, %v128
      %132 = vrot.lane.b32.xlu0 %v130, 16
      %v133 = vpop.permute.xlu0 %132
      %v135 = vadd.f32 %v125, %v133
      %v136 = vtanh.pop %v135
      %138 = vrot.lane.b32.xlu0 %v136, 16
      %v139 = vpop.permute.xlu0 %138
      %v141 = vmul.f32 %v119, %v139
      %143 = vset.pattern.permute.xlu0 0
      %144 = vperm.xlu0 %143, %v72
      %v145 = vpop.permute.xlu0 %144
      %148 = vst [vmem:[#allocation1] ss:$4 sm:$0xff] %v141
      %v149 = vld.sshfl [vmem:[#allocation1] sm:$0xff pattern:$0x73625140]
      %150 = vrot.lane.b32.xlu0 %v149, 96
      %v151 = vpop.permute.xlu0 %150
      %v153 = vmul.f32 %v145, %v151
      %v154 = vsub.f32 1.0, %v72
      %156 = vset.pattern.permute.xlu0 0
      %157 = vperm.xlu0 %156, %v154
      %v158 = vpop.permute.xlu0 %157
      %v160 = vmul.f32 %v158, %v73
      %v161 = vadd.f32 %v153, %v160
      %163 = vst [vmem:[#allocation1] ss:$4 sm:$0xff] %v135
      %v164 = vld.sshfl [vmem:[#allocation1] sm:$0xff pattern:$0x73625140]
      %165 = vrot.lane.b32.xlu0 %v164, 112
      %v166 = vpop.permute.xlu0 %165
      %v168 = vmul.f32 %v145, %v166
      %v169 = vmul.f32 %v158, %v74
      %v170 = vadd.f32 %v168, %v169
      %s171 = scalar_lea.vmem %s1, %s67
      %v172 = vld [vmem:[%s171] sm:$0x1]
      %s173 = smul.u32 %s67, 2
      %s174 = scalar_lea.vmem %s2, %s173
      %v175 = vld [vmem:[%s174] sm:$0x3]
      %v176 = vld [vmem:[#allocation3] sm:$0x3]
      %v177 = vld [vmem:[#allocation5] sm:$0x3]
      %v178 = vunpack.c.l.bf16 %v172
      %v180 = vsel %vm76, %v176, 0
      %182 = vmatpush.msra.mxu0 0.0
      %183 = vmatpush.msra.mxu0 0.0
      %184 = vmatpush.msra.mxu0 0.0
      %185 = vmatpush.msra.mxu0 0.0
      %186 = vmatpush.msra.mxu0 0.0
      %187 = vmatpush.msra.mxu0 0.0
      %188 = vmatpush.msra.mxu0 0.0
      %189 = vmatpush.msra.mxu0 0.0
      %190 = vmatpush.msra.mxu0 0.0
      %191 = vmatpush.msra.mxu0 0.0
      %192 = vmatpush.msra.mxu0 0.0
      %193 = vmatpush.msra.mxu0 0.0
      %194 = vmatpush.msra.mxu0 0.0
      %195 = vmatpush.msra.mxu0 0.0
      %196 = vmatpush.msra.mxu0 %v60
      %197 = vmatpush.msra.mxu0 %v59
      %198 = vmatmul.f32.gmra.mxu0 %v180
      %v199 = vpop.f32.mrf.mxu0
      %v200 = vadd.f32 0.0, %v199
      %201 = vdwg.mxu0
      %v202 = vadd.f32 %v178, %v200
      %v203 = vxor.u32 %v202, 2147483648
      %v204 = vmul.f32 %v203, 1.442695
      %v205 = vpow.pop %v204
      %v206 = vadd.f32 %v205, 1.0
      %v207 = vrcp.pop %v206
      %v208 = vmul.f32 %v206, %v207
      %v209 = vsub.f32 1.0, %v208
      %v210 = vmul.f32 %v207, %v209
      %v211 = vadd.f32 %v207, %v210
      %vm212 = vweird.f32 %v206
      %vm213 = vweird.f32 %v207
      %vm214 = vmor %vm212, %vm213
      %v215 = vsel %vm214, %v207, %v211
      %v216 = vand.u32 2147483647, %v206
      %vm217 = vcmp.eq.f32.partialorder %v216, 8.507059e+37
      %v218 = vand.u32 %v206, 2147483648
      %v219 = vor.u32 1.1754944e-38, %v218
      %v220 = vsel %vm217, %v219, %v215
      %v221 = vmul.f32 1.0, %v220
      %v222 = vtanh.pop %v202
      %224 = vrot.lane.b32.xlu0 %v177, 16
      %v225 = vpop.permute.xlu0 %224
      %v227 = vmul.f32 %v221, %v225
      %229 = vrot.lane.b32.xlu0 %v222, 80
      %v230 = vpop.permute.xlu0 %229
      %v232 = vmul.f32 %v221, %v230
      %234 = vrot.lane.b32.xlu0 %v232, 16
      %v235 = vpop.permute.xlu0 %234
      %v237 = vadd.f32 %v227, %v235
      %v238 = vtanh.pop %v237
      %240 = vrot.lane.b32.xlu0 %v238, 16
      %v241 = vpop.permute.xlu0 %240
      %v243 = vmul.f32 %v221, %v241
      %245 = vset.pattern.permute.xlu0 0
      %246 = vperm.xlu0 %245, %v175
      %v247 = vpop.permute.xlu0 %246
      %250 = vst [vmem:[#allocation1] ss:$4 sm:$0xff] %v243
      %v251 = vld.sshfl [vmem:[#allocation1] sm:$0xff pattern:$0x73625140]
      %252 = vrot.lane.b32.xlu0 %v251, 96
      %v253 = vpop.permute.xlu0 %252
      %v255 = vmul.f32 %v247, %v253
      %v256 = vsub.f32 1.0, %v175
      %258 = vset.pattern.permute.xlu0 0
      %259 = vperm.xlu0 %258, %v256
      %v260 = vpop.permute.xlu0 %259
      %v262 = vmul.f32 %v260, %v176
      %v263 = vadd.f32 %v255, %v262
      %265 = vst [vmem:[#allocation1] ss:$4 sm:$0xff] %v237
      %v266 = vld.sshfl [vmem:[#allocation1] sm:$0xff pattern:$0x73625140]
      %267 = vrot.lane.b32.xlu0 %v266, 112
      %v268 = vpop.permute.xlu0 %267
      %v270 = vmul.f32 %v247, %v268
      %v271 = vmul.f32 %v260, %v177
      %v272 = vadd.f32 %v270, %v271
      %273 = vst.msk [vmem:[#allocation2] sm:$0x3] %vm52, %v161
      %274 = vst.msk [vmem:[#allocation4] sm:$0x3] %vm52, %v170
      %275 = vst.msk [vmem:[#allocation3] sm:$0x3] %vm52, %v263
      %276 = vst.msk [vmem:[#allocation5] sm:$0x3] %vm52, %v272
      %s277 = scalar_lea.vmem %s5, %s70
      %278 = vst.msk [vmem:[%s277] sm:$0x3] %vm52, %v153
      %280 = vrot.lane.b32.xlu0 %v255, 16
      %v281 = vpop.permute.xlu0 %280
      %s283 = scalar_lea.vmem %s5, %s173
      %vm284 = vcmask 255104
      %285 = vst.msk [vmem:[%s283] sm:$0x3] %vm284, %v281
    $region34: #{bcn_forward.6} parent=1 // loop_footer
      %s66 = sadd.s32 1, %s62
    $region35: #{bcn_forward.6} parent=1 // loop_footer_branch
      %61 = sbr.rel target = $region31
    $region36: #{bcn_forward.6} parent=1 // loop_exit
      _
    // Predicated region
    $region37: #{bcn_forward.6} parent=1 // pred_check
      _
    $region38: #{bcn_forward.6} parent=1 // pred_check_branch
      %287 = sbr.rel (0) target = $region40
    $region39: #{bcn_forward.6} parent=1 // pred_region
      _
    $region40: #{bcn_forward.6} parent=1 // pred_fallthru
      _
    // Predicated region
    $region41: #{bcn_forward.6} parent=1 // pred_check
      _
    $region42: #{bcn_forward.6} parent=1 // pred_check_branch
      %289 = sbr.rel (0) target = $region44
    $region43: #{bcn_forward.6} parent=1 // pred_region
      _
    $region44: #{bcn_forward.6} parent=1 // pred_fallthru
      _
    %290 = vsyncpa [#allocation7], 1
    %291 = vsyncpa [#allocation9], 1

// kernel: bcn_forward.8
$region0: #{bcn_forward.8}
  #allocation0 [shape = 'u32[]', space=smem, size = 0x4, offset = 0x4, fixed_abs, tag = 'smem constant byte address 0x4 - core index']
  #allocation1 [shape = 'u32[72,128]{1,0:T(1,128)}', space=vmem, size = 0x9000, scoped, tag = 'internal scratch']
  #allocation2 [shape = 'f32[2,16]{1,0:T(2,128)}', space=vmem, size = 0x400, scoped, tag = 'scratch operand']
  #allocation3 [shape = 'f32[2,16]{1,0:T(2,128)}', space=vmem, size = 0x400, scoped, tag = 'scratch operand']
  #allocation4 [shape = 'f32[2,16]{1,0:T(2,128)}', space=vmem, size = 0x400, scoped, tag = 'scratch operand']
  #allocation5 [shape = 'f32[2,16]{1,0:T(2,128)}', space=vmem, size = 0x400, scoped, tag = 'scratch operand']
  %s0 = inlined_call_operand.vmem [shape: f32[16,2,64], index: 0, kind: input, shape index: {}]
  %s1 = inlined_call_operand.vmem [shape: f32[16,2,64], index: 1, kind: input, shape index: {}]
  %s2 = inlined_call_operand.vmem [shape: f32[16,2,1], index: 2, kind: input, shape index: {}]
  %s3 = inlined_call_operand.hbm [shape: f32[16,64], index: 3, kind: input, shape index: {}]
  %s4 = inlined_call_operand.hbm [shape: f32[16,64], index: 4, kind: input, shape index: {}]
  %s5 = inlined_call_operand.vmem [shape: f32[16,2,32], index: 5, kind: output, shape index: {}]
  %s6 = sld [smem:[#allocation0]]
  $region45: #{bcn_forward.8} parent=0
    _
  %s8 = ssub.s32 1, %s6
  %s9 = scalar_select 0, %s8, %s6
  $region1: #{bcn_forward.8} parent=0
    #allocation6 [shape = 'u8[8192]{0}', space=vmem, size = 0x2000, scoped, tag = 'input window, operand 3, single buffered']
    #allocation7 [shape = 's32[1]{0}', space=sflag, size = 0x4, scoped, tag = 'scoped memory for bcn_forward.8']
    #allocation8 [shape = 'u8[8192]{0}', space=vmem, size = 0x2000, scoped, tag = 'input window, operand 4, single buffered']
    #allocation9 [shape = 's32[1]{0}', space=sflag, size = 0x4, scoped, tag = 'scoped memory for bcn_forward.8']
    %10 = vsyncpa [#allocation7], 0
    %11 = vsyncpa [#allocation9], 0
    // Predicated region
    $region2: #{bcn_forward.8} parent=1 // pred_check
      _
    $region3: #{bcn_forward.8} parent=1 // pred_check_branch
      %13 = sbr.rel (0) target = $region5
    $region4: #{bcn_forward.8} parent=1 // pred_region
      _
    $region5: #{bcn_forward.8} parent=1 // pred_fallthru
      _
    // Predicated region
    $region6: #{bcn_forward.8} parent=1 // pred_check
      _
    $region7: #{bcn_forward.8} parent=1 // pred_check_branch
      %15 = sbr.rel (0) target = $region9
    $region8: #{bcn_forward.8} parent=1 // pred_region
      _
    $region9: #{bcn_forward.8} parent=1 // pred_fallthru
      _
    // Predicated region
    $region10: #{bcn_forward.8} parent=1 // pred_check
      _
    $region11: #{bcn_forward.8} parent=1 // pred_check_branch
      %17 = sbr.rel (0) target = $region13
    $region12: #{bcn_forward.8} parent=1 // pred_region
      _
    $region13: #{bcn_forward.8} parent=1 // pred_fallthru
      _
    // Predicated region
    $region14: #{bcn_forward.8} parent=1 // pred_check
      _
    $region15: #{bcn_forward.8} parent=1 // pred_check_branch
      %19 = sbr.rel (0) target = $region17
    $region16: #{bcn_forward.8} parent=1 // pred_region
      %21 = vsyncadd [#allocation7], 0
      %s22 = sshll.u32 %s3, 4
      %s23 = int_to_ptr.hbm [resolvable:$true] %s22
      %s24 = sshll.u32 [#allocation6], 4
      %s25 = int_to_ptr.vmem [resolvable:$true] %s24
      %30 = dma.hbm_to_vmem [thread:$0]  %s23, 256, %s25, [#allocation7], 128, 128, 8
    $region17: #{bcn_forward.8} parent=1 // pred_fallthru
      _
    // Predicated region
    $region18: #{bcn_forward.8} parent=1 // pred_check
      _
    $region19: #{bcn_forward.8} parent=1 // pred_check_branch
      %32 = sbr.rel (0) target = $region21
    $region20: #{bcn_forward.8} parent=1 // pred_region
      %34 = vsyncadd [#allocation9], 0
      %s35 = sshll.u32 %s4, 4
      %s36 = int_to_ptr.hbm [resolvable:$true] %s35
      %s37 = sshll.u32 [#allocation8], 4
      %s38 = int_to_ptr.vmem [resolvable:$true] %s37
      %43 = dma.hbm_to_vmem [thread:$0]  %s36, 256, %s38, [#allocation9], 128, 128, 8
    $region21: #{bcn_forward.8} parent=1 // pred_fallthru
      _
    // Predicated region
    $region22: #{bcn_forward.8} parent=1 // pred_check
      _
    $region23: #{bcn_forward.8} parent=1 // pred_check_branch
      %45 = sbr.rel (0) target = $region25
    $region24: #{bcn_forward.8} parent=1 // pred_region
      %47 = dma.done [#allocation7], 256
    $region25: #{bcn_forward.8} parent=1 // pred_fallthru
      _
    // Predicated region
    $region26: #{bcn_forward.8} parent=1 // pred_check
      _
    $region27: #{bcn_forward.8} parent=1 // pred_check_branch
      %49 = sbr.rel (0) target = $region29
    $region28: #{bcn_forward.8} parent=1 // pred_region
      %51 = dma.done [#allocation9], 256
    $region29: #{bcn_forward.8} parent=1 // pred_fallthru
      _
    %vm52 = vcmask 123904
    %53 = vst.msk [vmem:[#allocation2] sm:$0x3] %vm52, 0.0
    %54 = vst.msk [vmem:[#allocation3] sm:$0x3] %vm52, 0.0
    %55 = vst.msk [vmem:[#allocation4] sm:$0x3] %vm52, 0.0
    %56 = vst.msk [vmem:[#allocation5] sm:$0x3] %vm52, 0.0
    %v57 = vld [vmem:[#allocation6] sm:$0xff]
    %v58 = vld [vmem:[#allocation6 + $0x8] sm:$0xff]
    %v59 = vld [vmem:[#allocation8] sm:$0xff]
    %v60 = vld [vmem:[#allocation8 + $0x8] sm:$0xff]
    loop: start=0, step=1, limit=16
    $region30: #{bcn_forward.8} parent=1 // loop_pre_header
      _
    $region31: #{bcn_forward.8} parent=1 // loop_header
      %s62 = sphi 0, %s66
      %p63 = scmp.ge.s32.totalorder %s62, 16
    $region32: #{bcn_forward.8} parent=1 // loop_header_branch
      %65 = sbr.rel (%p63) target = $region36
    $region33: #{bcn_forward.8} parent=1 // loop_body
      %s67 = ssub.s32 15, %s62
      %s68 = smul.u32 %s62, 2
      %s69 = scalar_lea.vmem %s0, %s68
      %v70 = vld [vmem:[%s69] sm:$0x3]
      %s71 = scalar_lea.vmem %s2, %s68
      %v72 = vld [vmem:[%s71] sm:$0x3]
      %v73 = vld [vmem:[#allocation2] sm:$0x3]
      %v74 = vld [vmem:[#allocation4] sm:$0x3]
      %vm75 = vcmask 130048
      %v77 = vsel %vm75, %v73, 0
      %79 = vmatpush.msra.mxu0 0.0
      %80 = vmatpush.msra.mxu0 0.0
      %81 = vmatpush.msra.mxu0 0.0
      %82 = vmatpush.msra.mxu0 0.0
      %83 = vmatpush.msra.mxu0 0.0
      %84 = vmatpush.msra.mxu0 0.0
      %85 = vmatpush.msra.mxu0 0.0
      %86 = vmatpush.msra.mxu0 0.0
      %87 = vmatpush.msra.mxu0 0.0
      %88 = vmatpush.msra.mxu0 0.0
      %89 = vmatpush.msra.mxu0 0.0
      %90 = vmatpush.msra.mxu0 0.0
      %91 = vmatpush.msra.mxu0 0.0
      %92 = vmatpush.msra.mxu0 0.0
      %93 = vmatpush.msra.mxu0 %v58
      %94 = vmatpush.msra.mxu0 %v57
      %95 = vmatmul.f32.gmra.mxu0 %v77
      %v96 = vpop.f32.mrf.mxu0
      %v97 = vadd.f32 0.0, %v96
      %98 = vdwg.mxu0
      %v99 = vadd.f32 %v70, %v97
      %v100 = vxor.u32 %v99, 2147483648
      %v101 = vmul.f32 %v100, 1.442695
      %v102 = vpow.pop %v101
      %v103 = vadd.f32 %v102, 1.0
      %v104 = vrcp.pop %v103
      %v105 = vmul.f32 %v103, %v104
      %v106 = vsub.f32 1.0, %v105
      %v107 = vmul.f32 %v104, %v106
      %v108 = vadd.f32 %v104, %v107
      %vm109 = vweird.f32 %v103
      %vm110 = vweird.f32 %v104
      %vm111 = vmor %vm109, %vm110
      %v112 = vsel %vm111, %v104, %v108
      %v113 = vand.u32 2147483647, %v103
      %vm114 = vcmp.eq.f32.partialorder %v113, 8.507059e+37
      %v115 = vand.u32 %v103, 2147483648
      %v116 = vor.u32 1.1754944e-38, %v115
      %v117 = vsel %vm114, %v116, %v112
      %v118 = vmul.f32 1.0, %v117
      %v119 = vtanh.pop %v99
      %121 = vrot.lane.b32.xlu0 %v74, 16
      %v122 = vpop.permute.xlu0 %121
      %v124 = vmul.f32 %v118, %v122
      %126 = vrot.lane.b32.xlu0 %v119, 80
      %v127 = vpop.permute.xlu0 %126
      %v129 = vmul.f32 %v118, %v127
      %131 = vrot.lane.b32.xlu0 %v129, 16
      %v132 = vpop.permute.xlu0 %131
      %v134 = vadd.f32 %v124, %v132
      %v135 = vtanh.pop %v134
      %137 = vrot.lane.b32.xlu0 %v135, 16
      %v138 = vpop.permute.xlu0 %137
      %v140 = vmul.f32 %v118, %v138
      %142 = vset.pattern.permute.xlu0 0
      %143 = vperm.xlu0 %142, %v72
      %v144 = vpop.permute.xlu0 %143
      %v146 = vmul.f32 %v144, %v140
      %v147 = vsub.f32 1.0, %v72
      %149 = vset.pattern.permute.xlu0 0
      %150 = vperm.xlu0 %149, %v147
      %v151 = vpop.permute.xlu0 %150
      %v153 = vmul.f32 %v151, %v73
      %155 = vrot.lane.b32.xlu0 %v153, 32
      %v156 = vpop.permute.xlu0 %155
      %v158 = vadd.f32 %v146, %v156
      %v159 = vmul.f32 %v144, %v134
      %v160 = vmul.f32 %v151, %v74
      %162 = vrot.lane.b32.xlu0 %v160, 16
      %v163 = vpop.permute.xlu0 %162
      %v165 = vadd.f32 %v159, %v163
      %s166 = smul.u32 %s67, 2
      %s167 = scalar_lea.vmem %s1, %s166
      %v168 = vld [vmem:[%s167] sm:$0x3]
      %s169 = scalar_lea.vmem %s2, %s166
      %v170 = vld [vmem:[%s169] sm:$0x3]
      %v171 = vld [vmem:[#allocation3] sm:$0x3]
      %v172 = vld [vmem:[#allocation5] sm:$0x3]
      %v174 = vsel %vm75, %v171, 0
      %176 = vmatpush.msra.mxu0 0.0
      %177 = vmatpush.msra.mxu0 0.0
      %178 = vmatpush.msra.mxu0 0.0
      %179 = vmatpush.msra.mxu0 0.0
      %180 = vmatpush.msra.mxu0 0.0
      %181 = vmatpush.msra.mxu0 0.0
      %182 = vmatpush.msra.mxu0 0.0
      %183 = vmatpush.msra.mxu0 0.0
      %184 = vmatpush.msra.mxu0 0.0
      %185 = vmatpush.msra.mxu0 0.0
      %186 = vmatpush.msra.mxu0 0.0
      %187 = vmatpush.msra.mxu0 0.0
      %188 = vmatpush.msra.mxu0 0.0
      %189 = vmatpush.msra.mxu0 0.0
      %190 = vmatpush.msra.mxu0 %v60
      %191 = vmatpush.msra.mxu0 %v59
      %192 = vmatmul.f32.gmra.mxu0 %v174
      %v193 = vpop.f32.mrf.mxu0
      %v194 = vadd.f32 0.0, %v193
      %195 = vdwg.mxu0
      %v196 = vadd.f32 %v168, %v194
      %v197 = vxor.u32 %v196, 2147483648
      %v198 = vmul.f32 %v197, 1.442695
      %v199 = vpow.pop %v198
      %v200 = vadd.f32 %v199, 1.0
      %v201 = vrcp.pop %v200
      %v202 = vmul.f32 %v200, %v201
      %v203 = vsub.f32 1.0, %v202
      %v204 = vmul.f32 %v201, %v203
      %v205 = vadd.f32 %v201, %v204
      %vm206 = vweird.f32 %v200
      %vm207 = vweird.f32 %v201
      %vm208 = vmor %vm206, %vm207
      %v209 = vsel %vm208, %v201, %v205
      %v210 = vand.u32 2147483647, %v200
      %vm211 = vcmp.eq.f32.partialorder %v210, 8.507059e+37
      %v212 = vand.u32 %v200, 2147483648
      %v213 = vor.u32 1.1754944e-38, %v212
      %v214 = vsel %vm211, %v213, %v209
      %v215 = vmul.f32 1.0, %v214
      %v216 = vtanh.pop %v196
      %218 = vrot.lane.b32.xlu0 %v172, 16
      %v219 = vpop.permute.xlu0 %218
      %v221 = vmul.f32 %v215, %v219
      %223 = vrot.lane.b32.xlu0 %v216, 80
      %v224 = vpop.permute.xlu0 %223
      %v226 = vmul.f32 %v215, %v224
      %228 = vrot.lane.b32.xlu0 %v226, 16
      %v229 = vpop.permute.xlu0 %228
      %v231 = vadd.f32 %v221, %v229
      %v232 = vtanh.pop %v231
      %234 = vrot.lane.b32.xlu0 %v232, 16
      %v235 = vpop.permute.xlu0 %234
      %v237 = vmul.f32 %v215, %v235
      %239 = vset.pattern.permute.xlu0 0
      %240 = vperm.xlu0 %239, %v170
      %v241 = vpop.permute.xlu0 %240
      %v243 = vmul.f32 %v241, %v237
      %v244 = vsub.f32 1.0, %v170
      %246 = vset.pattern.permute.xlu0 0
      %247 = vperm.xlu0 %246, %v244
      %v248 = vpop.permute.xlu0 %247
      %v250 = vmul.f32 %v248, %v171
      %252 = vrot.lane.b32.xlu0 %v250, 32
      %v253 = vpop.permute.xlu0 %252
      %v255 = vadd.f32 %v243, %v253
      %v256 = vmul.f32 %v241, %v231
      %v257 = vmul.f32 %v248, %v172
      %259 = vrot.lane.b32.xlu0 %v257, 16
      %v260 = vpop.permute.xlu0 %259
      %v262 = vadd.f32 %v256, %v260
      %264 = vrot.lane.b32.xlu0 %v158, 96
      %v265 = vpop.permute.xlu0 %264
      %267 = vst.msk [vmem:[#allocation2] sm:$0x3] %vm52, %v265
      %269 = vrot.lane.b32.xlu0 %v165, 112
      %v270 = vpop.permute.xlu0 %269
      %272 = vst.msk [vmem:[#allocation4] sm:$0x3] %vm52, %v270
      %274 = vrot.lane.b32.xlu0 %v255, 96
      %v275 = vpop.permute.xlu0 %274
      %277 = vst.msk [vmem:[#allocation3] sm:$0x3] %vm52, %v275
      %279 = vrot.lane.b32.xlu0 %v262, 112
      %v280 = vpop.permute.xlu0 %279
      %282 = vst.msk [vmem:[#allocation5] sm:$0x3] %vm52, %v280
      %284 = vrot.lane.b32.xlu0 %v146, 96
      %v285 = vpop.permute.xlu0 %284
      %s287 = scalar_lea.vmem %s5, %s68
      %288 = vst.msk [vmem:[%s287] sm:$0x3] %vm52, %v285
      %290 = vrot.lane.b32.xlu0 %v243, 112
      %v291 = vpop.permute.xlu0 %290
      %s293 = scalar_lea.vmem %s5, %s166
      %vm294 = vcmask 255104
      %295 = vst.msk [vmem:[%s293] sm:$0x3] %vm294, %v291
    $region34: #{bcn_forward.8} parent=1 // loop_footer
      %s66 = sadd.s32 1, %s62
    $region35: #{bcn_forward.8} parent=1 // loop_footer_branch
      %61 = sbr.rel target = $region31
    $region36: #{bcn_forward.8} parent=1 // loop_exit
      _
    // Predicated region
    $region37: #{bcn_forward.8} parent=1 // pred_check
      _
    $region38: #{bcn_forward.8} parent=1 // pred_check_branch
      %297 = sbr.rel (0) target = $region40
    $region39: #{bcn_forward.8} parent=1 // pred_region
      _
    $region40: #{bcn_forward.8} parent=1 // pred_fallthru
      _
    // Predicated region
    $region41: #{bcn_forward.8} parent=1 // pred_check
      _
    $region42: #{bcn_forward.8} parent=1 // pred_check_branch
      %299 = sbr.rel (0) target = $region44
    $region43: #{bcn_forward.8} parent=1 // pred_region
      _
    $region44: #{bcn_forward.8} parent=1 // pred_fallthru
      _
    %300 = vsyncpa [#allocation7], 1
    %301 = vsyncpa [#allocation9], 1

// kernel: bcn_forward.7
$region0: #{bcn_forward.7}
  #allocation0 [shape = 'u32[]', space=smem, size = 0x4, offset = 0x4, fixed_abs, tag = 'smem constant byte address 0x4 - core index']
  #allocation1 [shape = 'u32[72,128]{1,0:T(1,128)}', space=vmem, size = 0x9000, scoped, tag = 'internal scratch']
  %s0 = inlined_call_operand.vmem [shape: f32[16,2,32], index: 0, kind: input, shape index: {}, may-alias: {0,1}]
  %s1 = inlined_call_operand.vmem [shape: f32[16,2,32], index: 1, kind: input, shape index: {}, may-alias: {0,1}]
  %s2 = inlined_call_operand.vmem [shape: f32[2,16], index: 2, kind: input, shape index: {}]
  %s3 = inlined_call_operand.hbm [shape: f32[96,128], index: 3, kind: input, shape index: {}]
  %s4 = inlined_call_operand.vmem [shape: f32[1,128], index: 4, kind: input, shape index: {}]
  %s5 = inlined_call_operand.vmem [shape: f32[16,2,64], index: 5, kind: output, shape index: {0}]
  %s6 = inlined_call_operand.vmem [shape: f32[16,2,64], index: 6, kind: output, shape index: {1}]
  %7 = xla_tuple %s5, %s6
  %s8 = sld [smem:[#allocation0]]
  $region42: #{bcn_forward.7} parent=0
    _
  %s10 = ssub.s32 1, %s8
  %s11 = scalar_select 0, %s10, %s8
  $region1: #{bcn_forward.7} parent=0
    #allocation2 [shape = 'u8[49152]{0}', space=vmem, size = 0xc000, scoped, tag = 'input window, operand 3, single buffered']
    #allocation3 [shape = 's32[1]{0}', space=sflag, size = 0x4, scoped, tag = 'scoped memory for bcn_forward.7']
    %12 = vsyncpa [#allocation3], 0
    // Predicated region
    $region2: #{bcn_forward.7} parent=1 // pred_check
      _
    $region3: #{bcn_forward.7} parent=1 // pred_check_branch
      %14 = sbr.rel (0) target = $region5
    $region4: #{bcn_forward.7} parent=1 // pred_region
      _
    $region5: #{bcn_forward.7} parent=1 // pred_fallthru
      _
    // Predicated region
    $region6: #{bcn_forward.7} parent=1 // pred_check
      _
    $region7: #{bcn_forward.7} parent=1 // pred_check_branch
      %16 = sbr.rel (0) target = $region9
    $region8: #{bcn_forward.7} parent=1 // pred_region
      _
    $region9: #{bcn_forward.7} parent=1 // pred_fallthru
      _
    // Predicated region
    $region10: #{bcn_forward.7} parent=1 // pred_check
      _
    $region11: #{bcn_forward.7} parent=1 // pred_check_branch
      %18 = sbr.rel (0) target = $region13
    $region12: #{bcn_forward.7} parent=1 // pred_region
      _
    $region13: #{bcn_forward.7} parent=1 // pred_fallthru
      _
    // Predicated region
    $region14: #{bcn_forward.7} parent=1 // pred_check
      _
    $region15: #{bcn_forward.7} parent=1 // pred_check_branch
      %20 = sbr.rel (0) target = $region17
    $region16: #{bcn_forward.7} parent=1 // pred_region
      %22 = vsyncadd [#allocation3], 0
      %s23 = sshll.u32 %s3, 4
      %s24 = int_to_ptr.hbm [resolvable:$true] %s23
      %s25 = sshll.u32 [#allocation2], 4
      %s26 = int_to_ptr.vmem [resolvable:$true] %s25
      %31 = dma.hbm_to_vmem [thread:$0]  %s24, 1536, %s26, [#allocation3], 128, 128, 8
    $region17: #{bcn_forward.7} parent=1 // pred_fallthru
      _
    // Predicated region
    $region18: #{bcn_forward.7} parent=1 // pred_check
      _
    $region19: #{bcn_forward.7} parent=1 // pred_check_branch
      %33 = sbr.rel (0) target = $region21
    $region20: #{bcn_forward.7} parent=1 // pred_region
      _
    $region21: #{bcn_forward.7} parent=1 // pred_fallthru
      _
    // Predicated region
    $region22: #{bcn_forward.7} parent=1 // pred_check
      _
    $region23: #{bcn_forward.7} parent=1 // pred_check_branch
      %35 = sbr.rel (0) target = $region25
    $region24: #{bcn_forward.7} parent=1 // pred_region
      %37 = dma.done [#allocation3], 1536
    $region25: #{bcn_forward.7} parent=1 // pred_fallthru
      _
    %v38 = vld [vmem:[#allocation2] sm:$0xff]
    %v39 = vld [vmem:[#allocation2 + $0x8] sm:$0xff]
    %v40 = vld [vmem:[#allocation2 + $0x10] sm:$0xff]
    %v41 = vld [vmem:[#allocation2 + $0x18] sm:$0xff]
    %v42 = vld [vmem:[#allocation2 + $0x20] sm:$0xff]
    %v43 = vld [vmem:[#allocation2 + $0x28] sm:$0xff]
    %v44 = vld [vmem:[#allocation2 + $0x30] sm:$0xff]
    %v45 = vld [vmem:[#allocation2 + $0x38] sm:$0xff]
    %v46 = vld [vmem:[#allocation2 + $0x40] sm:$0xff]
    %v47 = vld [vmem:[#allocation2 + $0x48] sm:$0xff]
    %v48 = vld [vmem:[#allocation2 + $0x50] sm:$0xff]
    %v49 = vld [vmem:[#allocation2 + $0x58] sm:$0xff]
    %v50 = vld [vmem:[%s4] sm:$0x1]
    %v51 = vld [vmem:[%s0] sm:$0x1]
    %v52 = vld [vmem:[%s0 + $0x2] sm:$0x1]
    %v53 = vld [vmem:[%s0 + $0x4] sm:$0x1]
    %v54 = vld [vmem:[%s0 + $0x6] sm:$0x1]
    %v55 = vld [vmem:[%s0 + $0x8] sm:$0x1]
    %v56 = vld [vmem:[%s0 + $0xa] sm:$0x1]
    %v57 = vld [vmem:[%s0 + $0xc] sm:$0x1]
    %v58 = vld [vmem:[%s0 + $0xe] sm:$0x1]
    %v59 = vld [vmem:[%s0 + $0x10] sm:$0x1]
    %v60 = vld [vmem:[%s0 + $0x12] sm:$0x1]
    %v61 = vld [vmem:[%s0 + $0x14] sm:$0x1]
    %v62 = vld [vmem:[%s0 + $0x16] sm:$0x1]
    %v63 = vld [vmem:[%s0 + $0x18] sm:$0x1]
    %v64 = vld [vmem:[%s0 + $0x1a] sm:$0x1]
    %v65 = vld [vmem:[%s0 + $0x1c] sm:$0x1]
    %v66 = vld [vmem:[%s0 + $0x1e] sm:$0x1]
    %v67 = vld [vmem:[%s1] sm:$0x1]
    %v68 = vld [vmem:[%s1 + $0x2] sm:$0x1]
    %v69 = vld [vmem:[%s1 + $0x4] sm:$0x1]
    %v70 = vld [vmem:[%s1 + $0x6] sm:$0x1]
    %v71 = vld [vmem:[%s1 + $0x8] sm:$0x1]
    %v72 = vld [vmem:[%s1 + $0xa] sm:$0x1]
    %v73 = vld [vmem:[%s1 + $0xc] sm:$0x1]
    %v74 = vld [vmem:[%s1 + $0xe] sm:$0x1]
    %v75 = vld [vmem:[%s1 + $0x10] sm:$0x1]
    %v76 = vld [vmem:[%s1 + $0x12] sm:$0x1]
    %v77 = vld [vmem:[%s1 + $0x14] sm:$0x1]
    %v78 = vld [vmem:[%s1 + $0x16] sm:$0x1]
    %v79 = vld [vmem:[%s1 + $0x18] sm:$0x1]
    %v80 = vld [vmem:[%s1 + $0x1a] sm:$0x1]
    %v81 = vld [vmem:[%s1 + $0x1c] sm:$0x1]
    %v82 = vld [vmem:[%s1 + $0x1e] sm:$0x1]
    %v83 = vld [vmem:[%s2] sm:$0x1]
    %v100 = vrot.slane %v52, 7
    %vm101 = vcmask 1041409
    %v102 = vsel %vm101, %v100, %v51
    %v103 = vrot.slane %v53, 6
    %vm104 = vcmask 1042434
    %v105 = vsel %vm104, %v103, %v102
    %v106 = vrot.slane %v54, 5
    %vm107 = vcmask 1043459
    %v108 = vsel %vm107, %v106, %v105
    %v109 = vrot.slane %v55, 4
    %vm110 = vcmask 1044484
    %v111 = vsel %vm110, %v109, %v108
    %v112 = vrot.slane %v56, 3
    %vm113 = vcmask 1045509
    %v114 = vsel %vm113, %v112, %v111
    %v115 = vrot.slane %v57, 2
    %vm116 = vcmask 1046534
    %v117 = vsel %vm116, %v115, %v114
    %v118 = vrot.slane %v58, 1
    %vm119 = vcmask 1047559
    %v120 = vsel %vm119, %v118, %v117
    %v121 = vrot.slane %v60, 7
    %v122 = vsel %vm101, %v121, %v59
    %v123 = vrot.slane %v61, 6
    %v124 = vsel %vm104, %v123, %v122
    %v125 = vrot.slane %v62, 5
    %v126 = vsel %vm107, %v125, %v124
    %v127 = vrot.slane %v63, 4
    %v128 = vsel %vm110, %v127, %v126
    %v129 = vrot.slane %v64, 3
    %v130 = vsel %vm113, %v129, %v128
    %v131 = vrot.slane %v65, 2
    %v132 = vsel %vm116, %v131, %v130
    %v133 = vrot.slane %v66, 1
    %v134 = vsel %vm119, %v133, %v132
    %v151 = vrot.slane %v68, 7
    %v152 = vsel %vm101, %v151, %v67
    %v153 = vrot.slane %v69, 6
    %v154 = vsel %vm104, %v153, %v152
    %v155 = vrot.slane %v70, 5
    %v156 = vsel %vm107, %v155, %v154
    %v157 = vrot.slane %v71, 4
    %v158 = vsel %vm110, %v157, %v156
    %v159 = vrot.slane %v72, 3
    %v160 = vsel %vm113, %v159, %v158
    %v161 = vrot.slane %v73, 2
    %v162 = vsel %vm116, %v161, %v160
    %v163 = vrot.slane %v74, 1
    %v164 = vsel %vm119, %v163, %v162
    %v165 = vrot.slane %v76, 7
    %v166 = vsel %vm101, %v165, %v75
    %v167 = vrot.slane %v77, 6
    %v168 = vsel %vm104, %v167, %v166
    %v169 = vrot.slane %v78, 5
    %v170 = vsel %vm107, %v169, %v168
    %v171 = vrot.slane %v79, 4
    %v172 = vsel %vm110, %v171, %v170
    %v173 = vrot.slane %v80, 3
    %v174 = vsel %vm113, %v173, %v172
    %v175 = vrot.slane %v81, 2
    %v176 = vsel %vm116, %v175, %v174
    %v177 = vrot.slane %v82, 1
    %v178 = vsel %vm119, %v177, %v176
    %vm179 = vcmask 261120
    %v180 = vsel %vm179, %v120, 0
    %v182 = vsel %vm179, %v134, 0
    %v184 = vsel %vm179, %v164, 0
    %v186 = vsel %vm179, %v178, 0
    %188 = vmatpush.xpose.msra.mxu0 0.0
    %189 = vmatpush.xpose.msra.mxu0 0.0
    %190 = vmatpush.xpose.msra.mxu0 0.0
    %191 = vmatpush.xpose.msra.mxu0 0.0
    %192 = vmatpush.xpose.msra.mxu0 0.0
    %193 = vmatpush.xpose.msra.mxu0 0.0
    %194 = vmatpush.xpose.msra.mxu0 0.0
    %195 = vmatpush.xpose.msra.mxu0 0.0
    %196 = vmatpush.xpose.msra.mxu0 0.0
    %197 = vmatpush.xpose.msra.mxu0 0.0
    %198 = vmatpush.xpose.msra.mxu0 0.0
    %199 = vmatpush.xpose.msra.mxu0 0.0
    %200 = vmatpush.xpose.msra.mxu0 0.0
    %201 = vmatpush.xpose.msra.mxu0 0.0
    %202 = vmatpush.xpose.msra.mxu0 %v186
    %203 = vmatpush.xpose.msra.mxu0 %v184
    %204 = vmatmul.f32.gmra.mxu0 %v180
    %v205 = vpop.f32.mrf.mxu0
    %v206 = vadd.f32 0.0, %v205
    %207 = vmatmul.f32.gmra.mxu0 %v182
    %v208 = vpop.f32.mrf.mxu0
    %v209 = vadd.f32 0.0, %v208
    %210 = vdwg.mxu0
    %v211 = vperm.slane %v83, 0
    %v212 = vmul.f32 %v206, %v211
    %v213 = vmul.f32 %v209, %v211
    %vm214 = vcmask 130048
    %v215 = vsel %vm214, %v212, -inf
    %216 = vmax.xlane.f32.xlu0 %v215
    %v217 = vpop.xlane.xlu0 %216
    %v218 = vsel %vm214, %v213, -inf
    %219 = vmax.xlane.f32.xlu0 %v218
    %v220 = vpop.xlane.xlu0 %219
    %v221 = vsub.f32 %v212, %v217
    %v222 = vsub.f32 %v213, %v220
    %v223 = vmul.f32 %v221, 1.442695
    %v224 = vpow.pop %v223
    %v225 = vmul.f32 %v222, 1.442695
    %v226 = vpow.pop %v225
    %v227 = vsel %vm214, %v224, 0.0
    %228 = vadd.xlane.f32.xlu0 %v227
    %v229 = vpop.xlane.xlu0 %228
    %v230 = vsel %vm214, %v226, 0.0
    %231 = vadd.xlane.f32.xlu0 %v230
    %v232 = vpop.xlane.xlu0 %231
    %v233 = vrcp.pop %v229
    %v234 = vrcp.pop %v232
    %v235 = vmul.f32 %v224, %v233
    %v236 = vmul.f32 %v226, %v234
    %v237 = vmul.f32 %v235, %v211
    %v238 = vmul.f32 %v236, %v211
    %v239 = vsel %vm214, %v237, 0.0
    %240 = vadd.xlane.f32.xlu0 %v239
    %v241 = vpop.xlane.xlu0 %240
    %v242 = vsel %vm214, %v238, 0.0
    %243 = vadd.xlane.f32.xlu0 %v242
    %v244 = vpop.xlane.xlu0 %243
    %v245 = vadd.f32 %v241, 1e-13
    %v246 = vadd.f32 %v244, 1e-13
    %v247 = vrcp.pop %v245
    %v248 = vrcp.pop %v246
    %v249 = vmul.f32 %v237, %v247
    %v250 = vmul.f32 %v238, %v248
    %v254 = vsel %vm214, %v249, 0
    %v257 = vsel %vm214, %v250, 0
    %259 = vmatpush.msra.mxu0 0.0
    %260 = vmatpush.msra.mxu0 0.0
    %261 = vmatpush.msra.mxu0 0.0
    %262 = vmatpush.msra.mxu0 0.0
    %263 = vmatpush.msra.mxu0 0.0
    %264 = vmatpush.msra.mxu0 0.0
    %265 = vmatpush.msra.mxu0 0.0
    %266 = vmatpush.msra.mxu0 0.0
    %267 = vmatpush.msra.mxu0 0.0
    %268 = vmatpush.msra.mxu0 0.0
    %269 = vmatpush.msra.mxu0 0.0
    %270 = vmatpush.msra.mxu0 0.0
    %271 = vmatpush.msra.mxu0 0.0
    %272 = vmatpush.msra.mxu0 0.0
    %273 = vmatpush.msra.mxu0 %v178
    %274 = vmatpush.msra.mxu0 %v164
    %275 = vmatmul.f32.gmra.mxu0 %v254
    %v276 = vpop.f32.mrf.mxu0
    %v277 = vadd.f32 0.0, %v276
    %278 = vmatmul.f32.gmra.mxu0 %v257
    %v279 = vpop.f32.mrf.mxu0
    %v280 = vadd.f32 0.0, %v279
    %281 = vdwg.mxu0
    %v284 = vrot.slane %v277, 1
    %v285 = vrot.slane %v277, 2
    %v286 = vrot.slane %v277, 3
    %v287 = vrot.slane %v277, 4
    %v288 = vrot.slane %v277, 5
    %v289 = vrot.slane %v277, 6
    %v290 = vrot.slane %v277, 7
    %v291 = vrot.slane %v280, 1
    %v292 = vrot.slane %v280, 2
    %v293 = vrot.slane %v280, 3
    %v294 = vrot.slane %v280, 4
    %v295 = vrot.slane %v280, 5
    %v296 = vrot.slane %v280, 6
    %v297 = vrot.slane %v280, 7
    %v314 = vsub.f32 %v51, %v277
    %v315 = vsub.f32 %v52, %v284
    %v316 = vsub.f32 %v53, %v285
    %v317 = vsub.f32 %v54, %v286
    %v318 = vsub.f32 %v55, %v287
    %v319 = vsub.f32 %v56, %v288
    %v320 = vsub.f32 %v57, %v289
    %v321 = vsub.f32 %v58, %v290
    %v322 = vsub.f32 %v59, %v280
    %v323 = vsub.f32 %v60, %v291
    %v324 = vsub.f32 %v61, %v292
    %v325 = vsub.f32 %v62, %v293
    %v326 = vsub.f32 %v63, %v294
    %v327 = vsub.f32 %v64, %v295
    %v328 = vsub.f32 %v65, %v296
    %v329 = vsub.f32 %v66, %v297
    %v330 = vmul.f32 %v51, %v277
    %v331 = vmul.f32 %v52, %v284
    %v332 = vmul.f32 %v53, %v285
    %v333 = vmul.f32 %v54, %v286
    %v334 = vmul.f32 %v55, %v287
    %v335 = vmul.f32 %v56, %v288
    %v336 = vmul.f32 %v57, %v289
    %v337 = vmul.f32 %v58, %v290
    %v338 = vmul.f32 %v59, %v280
    %v339 = vmul.f32 %v60, %v291
    %v340 = vmul.f32 %v61, %v292
    %v341 = vmul.f32 %v62, %v293
    %v342 = vmul.f32 %v63, %v294
    %v343 = vmul.f32 %v64, %v295
    %v344 = vmul.f32 %v65, %v296
    %v345 = vmul.f32 %v66, %v297
    %v364 = vrot.slane %v315, 7
    %v365 = vsel %vm101, %v364, %v314
    %v366 = vrot.slane %v316, 6
    %v367 = vsel %vm104, %v366, %v365
    %v368 = vrot.slane %v317, 5
    %v369 = vsel %vm107, %v368, %v367
    %v370 = vrot.slane %v318, 4
    %v371 = vsel %vm110, %v370, %v369
    %v372 = vrot.slane %v319, 3
    %v373 = vsel %vm113, %v372, %v371
    %v374 = vrot.slane %v320, 2
    %v375 = vsel %vm116, %v374, %v373
    %v376 = vrot.slane %v321, 1
    %v377 = vsel %vm119, %v376, %v375
    %v378 = vrot.slane %v323, 7
    %v379 = vsel %vm101, %v378, %v322
    %v380 = vrot.slane %v324, 6
    %v381 = vsel %vm104, %v380, %v379
    %v382 = vrot.slane %v325, 5
    %v383 = vsel %vm107, %v382, %v381
    %v384 = vrot.slane %v326, 4
    %v385 = vsel %vm110, %v384, %v383
    %v386 = vrot.slane %v327, 3
    %v387 = vsel %vm113, %v386, %v385
    %v388 = vrot.slane %v328, 2
    %v389 = vsel %vm116, %v388, %v387
    %v390 = vrot.slane %v329, 1
    %v391 = vsel %vm119, %v390, %v389
    %392 = vrot.lane.b32.xlu0 %v377, 32
    %v393 = vpop.permute.xlu0 %392
    %394 = vrot.lane.b32.xlu0 %v391, 32
    %v395 = vpop.permute.xlu0 %394
    %v414 = vrot.slane %v331, 7
    %v415 = vsel %vm101, %v414, %v330
    %v416 = vrot.slane %v332, 6
    %v417 = vsel %vm104, %v416, %v415
    %v418 = vrot.slane %v333, 5
    %v419 = vsel %vm107, %v418, %v417
    %v420 = vrot.slane %v334, 4
    %v421 = vsel %vm110, %v420, %v419
    %v422 = vrot.slane %v335, 3
    %v423 = vsel %vm113, %v422, %v421
    %v424 = vrot.slane %v336, 2
    %v425 = vsel %vm116, %v424, %v423
    %v426 = vrot.slane %v337, 1
    %v427 = vsel %vm119, %v426, %v425
    %v428 = vrot.slane %v339, 7
    %v429 = vsel %vm101, %v428, %v338
    %v430 = vrot.slane %v340, 6
    %v431 = vsel %vm104, %v430, %v429
    %v432 = vrot.slane %v341, 5
    %v433 = vsel %vm107, %v432, %v431
    %v434 = vrot.slane %v342, 4
    %v435 = vsel %vm110, %v434, %v433
    %v436 = vrot.slane %v343, 3
    %v437 = vsel %vm113, %v436, %v435
    %v438 = vrot.slane %v344, 2
    %v439 = vsel %vm116, %v438, %v437
    %v440 = vrot.slane %v345, 1
    %v441 = vsel %vm119, %v440, %v439
    %442 = vrot.lane.b32.xlu0 %v427, 64
    %v443 = vpop.permute.xlu0 %442
    %444 = vrot.lane.b32.xlu0 %v441, 64
    %v445 = vpop.permute.xlu0 %444
    %v448 = vsel %vm179, %v120, %v393
    %v449 = vsel %vm179, %v134, %v395
    %vm450 = vcmask 523264
    %v451 = vsel %vm450, %v448, %v443
    %v452 = vsel %vm450, %v449, %v445
    %v454 = vperm.slane %v50, 0
    %vm456 = vcmask 785408
    %v458 = vsel %vm456, %v451, 0
    %v461 = vsel %vm456, %v452, 0
    %463 = vmatpush.msra.mxu0 0.0
    %464 = vmatpush.msra.mxu0 0.0
    %465 = vmatpush.msra.mxu0 0.0
    %466 = vmatpush.msra.mxu0 0.0
    %467 = vmatpush.msra.mxu0 %v49
    %468 = vmatpush.msra.mxu0 %v48
    %469 = vmatpush.msra.mxu0 %v47
    %470 = vmatpush.msra.mxu0 %v46
    %471 = vmatpush.msra.mxu0 %v45
    %472 = vmatpush.msra.mxu0 %v44
    %473 = vmatpush.msra.mxu0 %v43
    %474 = vmatpush.msra.mxu0 %v42
    %475 = vmatpush.msra.mxu0 %v41
    %476 = vmatpush.msra.mxu0 %v40
    %477 = vmatpush.msra.mxu0 %v39
    %478 = vmatpush.msra.mxu0 %v38
    %479 = vmatmul.f32.gmra.mxu0 %v458
    %v480 = vpop.f32.mrf.mxu0
    %v481 = vadd.f32 %v454, %v480
    %482 = vmatmul.f32.gmra.mxu0 %v461
    %v483 = vpop.f32.mrf.mxu0
    %v484 = vadd.f32 %v454, %v483
    %485 = vdwg.mxu0
    %v488 = vrot.slane %v481, 1
    %v489 = vrot.slane %v481, 2
    %v490 = vrot.slane %v481, 3
    %v491 = vrot.slane %v481, 4
    %v492 = vrot.slane %v481, 5
    %v493 = vrot.slane %v481, 6
    %v494 = vrot.slane %v481, 7
    %v495 = vrot.slane %v484, 1
    %v496 = vrot.slane %v484, 2
    %v497 = vrot.slane %v484, 3
    %v498 = vrot.slane %v484, 4
    %v499 = vrot.slane %v484, 5
    %v500 = vrot.slane %v484, 6
    %v501 = vrot.slane %v484, 7
    %vm516 = vcmask 516096
    %517 = vst.msk [vmem:[%s5] sm:$0x1] %vm516, %v481
    %518 = vst.msk [vmem:[%s5 + $0x2] sm:$0x1] %vm516, %v488
    %519 = vst.msk [vmem:[%s5 + $0x4] sm:$0x1] %vm516, %v489
    %520 = vst.msk [vmem:[%s5 + $0x6] sm:$0x1] %vm516, %v490
    %521 = vst.msk [vmem:[%s5 + $0x8] sm:$0x1] %vm516, %v491
    %522 = vst.msk [vmem:[%s5 + $0xa] sm:$0x1] %vm516, %v492
    %523 = vst.msk [vmem:[%s5 + $0xc] sm:$0x1] %vm516, %v493
    %524 = vst.msk [vmem:[%s5 + $0xe] sm:$0x1] %vm516, %v494
    %525 = vst.msk [vmem:[%s5 + $0x10] sm:$0x1] %vm516, %v484
    %526 = vst.msk [vmem:[%s5 + $0x12] sm:$0x1] %vm516, %v495
    %527 = vst.msk [vmem:[%s5 + $0x14] sm:$0x1] %vm516, %v496
    %528 = vst.msk [vmem:[%s5 + $0x16] sm:$0x1] %vm516, %v497
    %529 = vst.msk [vmem:[%s5 + $0x18] sm:$0x1] %vm516, %v498
    %530 = vst.msk [vmem:[%s5 + $0x1a] sm:$0x1] %vm516, %v499
    %531 = vst.msk [vmem:[%s5 + $0x1c] sm:$0x1] %vm516, %v500
    %532 = vst.msk [vmem:[%s5 + $0x1e] sm:$0x1] %vm516, %v501
    %v533 = vperm.slane %v481, 0
    %v534 = vperm.slane %v488, 0
    %v535 = vperm.slane %v489, 0
    %v536 = vperm.slane %v490, 0
    %v537 = vperm.slane %v491, 0
    %v538 = vperm.slane %v492, 0
    %v539 = vperm.slane %v493, 0
    %v540 = vperm.slane %v494, 0
    %v541 = vperm.slane %v484, 0
    %v542 = vperm.slane %v495, 0
    %v543 = vperm.slane %v496, 0
    %v544 = vperm.slane %v497, 0
    %v545 = vperm.slane %v498, 0
    %v546 = vperm.slane %v499, 0
    %v547 = vperm.slane %v500, 0
    %v548 = vperm.slane %v501, 0
    %549 = vrot.lane.b32.xlu0 %v533, 64
    %v550 = vpop.permute.xlu0 %549
    %551 = vrot.lane.b32.xlu0 %v534, 64
    %v552 = vpop.permute.xlu0 %551
    %553 = vrot.lane.b32.xlu0 %v535, 64
    %v554 = vpop.permute.xlu0 %553
    %555 = vrot.lane.b32.xlu0 %v536, 64
    %v556 = vpop.permute.xlu0 %555
    %557 = vrot.lane.b32.xlu0 %v537, 64
    %v558 = vpop.permute.xlu0 %557
    %559 = vrot.lane.b32.xlu0 %v538, 64
    %v560 = vpop.permute.xlu0 %559
    %561 = vrot.lane.b32.xlu0 %v539, 64
    %v562 = vpop.permute.xlu0 %561
    %563 = vrot.lane.b32.xlu0 %v540, 64
    %v564 = vpop.permute.xlu0 %563
    %565 = vrot.lane.b32.xlu0 %v541, 64
    %v566 = vpop.permute.xlu0 %565
    %567 = vrot.lane.b32.xlu0 %v542, 64
    %v568 = vpop.permute.xlu0 %567
    %569 = vrot.lane.b32.xlu0 %v543, 64
    %v570 = vpop.permute.xlu0 %569
    %571 = vrot.lane.b32.xlu0 %v544, 64
    %v572 = vpop.permute.xlu0 %571
    %573 = vrot.lane.b32.xlu0 %v545, 64
    %v574 = vpop.permute.xlu0 %573
    %575 = vrot.lane.b32.xlu0 %v546, 64
    %v576 = vpop.permute.xlu0 %575
    %577 = vrot.lane.b32.xlu0 %v547, 64
    %v578 = vpop.permute.xlu0 %577
    %579 = vrot.lane.b32.xlu0 %v548, 64
    %v580 = vpop.permute.xlu0 %579
    %597 = vst.msk [vmem:[%s6] sm:$0x1] %vm516, %v550
    %598 = vst.msk [vmem:[%s6 + $0x2] sm:$0x1] %vm516, %v552
    %599 = vst.msk [vmem:[%s6 + $0x4] sm:$0x1] %vm516, %v554
    %600 = vst.msk [vmem:[%s6 + $0x6] sm:$0x1] %vm516, %v556
    %601 = vst.msk [vmem:[%s6 + $0x8] sm:$0x1] %vm516, %v558
    %602 = vst.msk [vmem:[%s6 + $0xa] sm:$0x1] %vm516, %v560
    %603 = vst.msk [vmem:[%s6 + $0xc] sm:$0x1] %vm516, %v562
    %604 = vst.msk [vmem:[%s6 + $0xe] sm:$0x1] %vm516, %v564
    %605 = vst.msk [vmem:[%s6 + $0x10] sm:$0x1] %vm516, %v566
    %606 = vst.msk [vmem:[%s6 + $0x12] sm:$0x1] %vm516, %v568
    %607 = vst.msk [vmem:[%s6 + $0x14] sm:$0x1] %vm516, %v570
    %608 = vst.msk [vmem:[%s6 + $0x16] sm:$0x1] %vm516, %v572
    %609 = vst.msk [vmem:[%s6 + $0x18] sm:$0x1] %vm516, %v574
    %610 = vst.msk [vmem:[%s6 + $0x1a] sm:$0x1] %vm516, %v576
    %611 = vst.msk [vmem:[%s6 + $0x1c] sm:$0x1] %vm516, %v578
    %612 = vst.msk [vmem:[%s6 + $0x1e] sm:$0x1] %vm516, %v580
    %v613 = vld [vmem:[%s0 + $0x1] sm:$0x1]
    %v614 = vld [vmem:[%s0 + $0x3] sm:$0x1]
    %v615 = vld [vmem:[%s0 + $0x5] sm:$0x1]
    %v616 = vld [vmem:[%s0 + $0x7] sm:$0x1]
    %v617 = vld [vmem:[%s0 + $0x9] sm:$0x1]
    %v618 = vld [vmem:[%s0 + $0xb] sm:$0x1]
    %v619 = vld [vmem:[%s0 + $0xd] sm:$0x1]
    %v620 = vld [vmem:[%s0 + $0xf] sm:$0x1]
    %v621 = vld [vmem:[%s0 + $0x11] sm:$0x1]
    %v622 = vld [vmem:[%s0 + $0x13] sm:$0x1]
    %v623 = vld [vmem:[%s0 + $0x15] sm:$0x1]
    %v624 = vld [vmem:[%s0 + $0x17] sm:$0x1]
    %v625 = vld [vmem:[%s0 + $0x19] sm:$0x1]
    %v626 = vld [vmem:[%s0 + $0x1b] sm:$0x1]
    %v627 = vld [vmem:[%s0 + $0x1d] sm:$0x1]
    %v628 = vld [vmem:[%s0 + $0x1f] sm:$0x1]
    %v629 = vld [vmem:[%s1 + $0x1] sm:$0x1]
    %v630 = vld [vmem:[%s1 + $0x3] sm:$0x1]
    %v631 = vld [vmem:[%s1 + $0x5] sm:$0x1]
    %v632 = vld [vmem:[%s1 + $0x7] sm:$0x1]
    %v633 = vld [vmem:[%s1 + $0x9] sm:$0x1]
    %v634 = vld [vmem:[%s1 + $0xb] sm:$0x1]
    %v635 = vld [vmem:[%s1 + $0xd] sm:$0x1]
    %v636 = vld [vmem:[%s1 + $0xf] sm:$0x1]
    %v637 = vld [vmem:[%s1 + $0x11] sm:$0x1]
    %v638 = vld [vmem:[%s1 + $0x13] sm:$0x1]
    %v639 = vld [vmem:[%s1 + $0x15] sm:$0x1]
    %v640 = vld [vmem:[%s1 + $0x17] sm:$0x1]
    %v641 = vld [vmem:[%s1 + $0x19] sm:$0x1]
    %v642 = vld [vmem:[%s1 + $0x1b] sm:$0x1]
    %v643 = vld [vmem:[%s1 + $0x1d] sm:$0x1]
    %v644 = vld [vmem:[%s1 + $0x1f] sm:$0x1]
    %v645 = vld [vmem:[%s2 + $0x1] sm:$0x1]
    %v662 = vrot.slane %v614, 7
    %v663 = vsel %vm101, %v662, %v613
    %v664 = vrot.slane %v615, 6
    %v665 = vsel %vm104, %v664, %v663
    %v666 = vrot.slane %v616, 5
    %v667 = vsel %vm107, %v666, %v665
    %v668 = vrot.slane %v617, 4
    %v669 = vsel %vm110, %v668, %v667
    %v670 = vrot.slane %v618, 3
    %v671 = vsel %vm113, %v670, %v669
    %v672 = vrot.slane %v619, 2
    %v673 = vsel %vm116, %v672, %v671
    %v674 = vrot.slane %v620, 1
    %v675 = vsel %vm119, %v674, %v673
    %v676 = vrot.slane %v622, 7
    %v677 = vsel %vm101, %v676, %v621
    %v678 = vrot.slane %v623, 6
    %v679 = vsel %vm104, %v678, %v677
    %v680 = vrot.slane %v624, 5
    %v681 = vsel %vm107, %v680, %v679
    %v682 = vrot.slane %v625, 4
    %v683 = vsel %vm110, %v682, %v681
    %v684 = vrot.slane %v626, 3
    %v685 = vsel %vm113, %v684, %v683
    %v686 = vrot.slane %v627, 2
    %v687 = vsel %vm116, %v686, %v685
    %v688 = vrot.slane %v628, 1
    %v689 = vsel %vm119, %v688, %v687
    %v706 = vrot.slane %v630, 7
    %v707 = vsel %vm101, %v706, %v629
    %v708 = vrot.slane %v631, 6
    %v709 = vsel %vm104, %v708, %v707
    %v710 = vrot.slane %v632, 5
    %v711 = vsel %vm107, %v710, %v709
    %v712 = vrot.slane %v633, 4
    %v713 = vsel %vm110, %v712, %v711
    %v714 = vrot.slane %v634, 3
    %v715 = vsel %vm113, %v714, %v713
    %v716 = vrot.slane %v635, 2
    %v717 = vsel %vm116, %v716, %v715
    %v718 = vrot.slane %v636, 1
    %v719 = vsel %vm119, %v718, %v717
    %v720 = vrot.slane %v638, 7
    %v721 = vsel %vm101, %v720, %v637
    %v722 = vrot.slane %v639, 6
    %v723 = vsel %vm104, %v722, %v721
    %v724 = vrot.slane %v640, 5
    %v725 = vsel %vm107, %v724, %v723
    %v726 = vrot.slane %v641, 4
    %v727 = vsel %vm110, %v726, %v725
    %v728 = vrot.slane %v642, 3
    %v729 = vsel %vm113, %v728, %v727
    %v730 = vrot.slane %v643, 2
    %v731 = vsel %vm116, %v730, %v729
    %v732 = vrot.slane %v644, 1
    %v733 = vsel %vm119, %v732, %v731
    %v734 = vsel %vm179, %v675, 0
    %v736 = vsel %vm179, %v689, 0
    %v738 = vsel %vm179, %v719, 0
    %v740 = vsel %vm179, %v733, 0
    %742 = vmatpush.xpose.msra.mxu0 0.0
    %743 = vmatpush.xpose.msra.mxu0 0.0
    %744 = vmatpush.xpose.msra.mxu0 0.0
    %745 = vmatpush.xpose.msra.mxu0 0.0
    %746 = vmatpush.xpose.msra.mxu0 0.0
    %747 = vmatpush.xpose.msra.mxu0 0.0
    %748 = vmatpush.xpose.msra.mxu0 0.0
    %749 = vmatpush.xpose.msra.mxu0 0.0
    %750 = vmatpush.xpose.msra.mxu0 0.0
    %751 = vmatpush.xpose.msra.mxu0 0.0
    %752 = vmatpush.xpose.msra.mxu0 0.0
    %753 = vmatpush.xpose.msra.mxu0 0.0
    %754 = vmatpush.xpose.msra.mxu0 0.0
    %755 = vmatpush.xpose.msra.mxu0 0.0
    %756 = vmatpush.xpose.msra.mxu0 %v740
    %757 = vmatpush.xpose.msra.mxu0 %v738
    %758 = vmatmul.f32.gmra.mxu0 %v734
    %v759 = vpop.f32.mrf.mxu0
    %v760 = vadd.f32 0.0, %v759
    %761 = vmatmul.f32.gmra.mxu0 %v736
    %v762 = vpop.f32.mrf.mxu0
    %v763 = vadd.f32 0.0, %v762
    %764 = vdwg.mxu0
    %v765 = vperm.slane %v645, 0
    %v766 = vmul.f32 %v760, %v765
    %v767 = vmul.f32 %v763, %v765
    %v768 = vsel %vm214, %v766, -inf
    %769 = vmax.xlane.f32.xlu0 %v768
    %v770 = vpop.xlane.xlu0 %769
    %v771 = vsel %vm214, %v767, -inf
    %772 = vmax.xlane.f32.xlu0 %v771
    %v773 = vpop.xlane.xlu0 %772
    %v774 = vsub.f32 %v766, %v770
    %v775 = vsub.f32 %v767, %v773
    %v776 = vmul.f32 %v774, 1.442695
    %v777 = vpow.pop %v776
    %v778 = vmul.f32 %v775, 1.442695
    %v779 = vpow.pop %v778
    %v780 = vsel %vm214, %v777, 0.0
    %781 = vadd.xlane.f32.xlu0 %v780
    %v782 = vpop.xlane.xlu0 %781
    %v783 = vsel %vm214, %v779, 0.0
    %784 = vadd.xlane.f32.xlu0 %v783
    %v785 = vpop.xlane.xlu0 %784
    %v786 = vrcp.pop %v782
    %v787 = vrcp.pop %v785
    %v788 = vmul.f32 %v777, %v786
    %v789 = vmul.f32 %v779, %v787
    %v790 = vmul.f32 %v788, %v765
    %v791 = vmul.f32 %v789, %v765
    %v792 = vsel %vm214, %v790, 0.0
    %793 = vadd.xlane.f32.xlu0 %v792
    %v794 = vpop.xlane.xlu0 %793
    %v795 = vsel %vm214, %v791, 0.0
    %796 = vadd.xlane.f32.xlu0 %v795
    %v797 = vpop.xlane.xlu0 %796
    %v798 = vadd.f32 %v794, 1e-13
    %v799 = vadd.f32 %v797, 1e-13
    %v800 = vrcp.pop %v798
    %v801 = vrcp.pop %v799
    %v802 = vmul.f32 %v790, %v800
    %v803 = vmul.f32 %v791, %v801
    %v807 = vsel %vm214, %v802, 0
    %v810 = vsel %vm214, %v803, 0
    %812 = vmatpush.msra.mxu0 0.0
    %813 = vmatpush.msra.mxu0 0.0
    %814 = vmatpush.msra.mxu0 0.0
    %815 = vmatpush.msra.mxu0 0.0
    %816 = vmatpush.msra.mxu0 0.0
    %817 = vmatpush.msra.mxu0 0.0
    %818 = vmatpush.msra.mxu0 0.0
    %819 = vmatpush.msra.mxu0 0.0
    %820 = vmatpush.msra.mxu0 0.0
    %821 = vmatpush.msra.mxu0 0.0
    %822 = vmatpush.msra.mxu0 0.0
    %823 = vmatpush.msra.mxu0 0.0
    %824 = vmatpush.msra.mxu0 0.0
    %825 = vmatpush.msra.mxu0 0.0
    %826 = vmatpush.msra.mxu0 %v733
    %827 = vmatpush.msra.mxu0 %v719
    %828 = vmatmul.f32.gmra.mxu0 %v807
    %v829 = vpop.f32.mrf.mxu0
    %v830 = vadd.f32 0.0, %v829
    %831 = vmatmul.f32.gmra.mxu0 %v810
    %v832 = vpop.f32.mrf.mxu0
    %v833 = vadd.f32 0.0, %v832
    %834 = vdwg.mxu0
    %v837 = vrot.slane %v830, 1
    %v838 = vrot.slane %v830, 2
    %v839 = vrot.slane %v830, 3
    %v840 = vrot.slane %v830, 4
    %v841 = vrot.slane %v830, 5
    %v842 = vrot.slane %v830, 6
    %v843 = vrot.slane %v830, 7
    %v844 = vrot.slane %v833, 1
    %v845 = vrot.slane %v833, 2
    %v846 = vrot.slane %v833, 3
    %v847 = vrot.slane %v833, 4
    %v848 = vrot.slane %v833, 5
    %v849 = vrot.slane %v833, 6
    %v850 = vrot.slane %v833, 7
    %v867 = vsub.f32 %v613, %v830
    %v868 = vsub.f32 %v614, %v837
    %v869 = vsub.f32 %v615, %v838
    %v870 = vsub.f32 %v616, %v839
    %v871 = vsub.f32 %v617, %v840
    %v872 = vsub.f32 %v618, %v841
    %v873 = vsub.f32 %v619, %v842
    %v874 = vsub.f32 %v620, %v843
    %v875 = vsub.f32 %v621, %v833
    %v876 = vsub.f32 %v622, %v844
    %v877 = vsub.f32 %v623, %v845
    %v878 = vsub.f32 %v624, %v846
    %v879 = vsub.f32 %v625, %v847
    %v880 = vsub.f32 %v626, %v848
    %v881 = vsub.f32 %v627, %v849
    %v882 = vsub.f32 %v628, %v850
    %v883 = vmul.f32 %v613, %v830
    %v884 = vmul.f32 %v614, %v837
    %v885 = vmul.f32 %v615, %v838
    %v886 = vmul.f32 %v616, %v839
    %v887 = vmul.f32 %v617, %v840
    %v888 = vmul.f32 %v618, %v841
    %v889 = vmul.f32 %v619, %v842
    %v890 = vmul.f32 %v620, %v843
    %v891 = vmul.f32 %v621, %v833
    %v892 = vmul.f32 %v622, %v844
    %v893 = vmul.f32 %v623, %v845
    %v894 = vmul.f32 %v624, %v846
    %v895 = vmul.f32 %v625, %v847
    %v896 = vmul.f32 %v626, %v848
    %v897 = vmul.f32 %v627, %v849
    %v898 = vmul.f32 %v628, %v850
    %v917 = vrot.slane %v868, 7
    %v918 = vsel %vm101, %v917, %v867
    %v919 = vrot.slane %v869, 6
    %v920 = vsel %vm104, %v919, %v918
    %v921 = vrot.slane %v870, 5
    %v922 = vsel %vm107, %v921, %v920
    %v923 = vrot.slane %v871, 4
    %v924 = vsel %vm110, %v923, %v922
    %v925 = vrot.slane %v872, 3
    %v926 = vsel %vm113, %v925, %v924
    %v927 = vrot.slane %v873, 2
    %v928 = vsel %vm116, %v927, %v926
    %v929 = vrot.slane %v874, 1
    %v930 = vsel %vm119, %v929, %v928
    %v931 = vrot.slane %v876, 7
    %v932 = vsel %vm101, %v931, %v875
    %v933 = vrot.slane %v877, 6
    %v934 = vsel %vm104, %v933, %v932
    %v935 = vrot.slane %v878, 5
    %v936 = vsel %vm107, %v935, %v934
    %v937 = vrot.slane %v879, 4
    %v938 = vsel %vm110, %v937, %v936
    %v939 = vrot.slane %v880, 3
    %v940 = vsel %vm113, %v939, %v938
    %v941 = vrot.slane %v881, 2
    %v942 = vsel %vm116, %v941, %v940
    %v943 = vrot.slane %v882, 1
    %v944 = vsel %vm119, %v943, %v942
    %945 = vrot.lane.b32.xlu0 %v930, 32
    %v946 = vpop.permute.xlu0 %945
    %947 = vrot.lane.b32.xlu0 %v944, 32
    %v948 = vpop.permute.xlu0 %947
    %v967 = vrot.slane %v884, 7
    %v968 = vsel %vm101, %v967, %v883
    %v969 = vrot.slane %v885, 6
    %v970 = vsel %vm104, %v969, %v968
    %v971 = vrot.slane %v886, 5
    %v972 = vsel %vm107, %v971, %v970
    %v973 = vrot.slane %v887, 4
    %v974 = vsel %vm110, %v973, %v972
    %v975 = vrot.slane %v888, 3
    %v976 = vsel %vm113, %v975, %v974
    %v977 = vrot.slane %v889, 2
    %v978 = vsel %vm116, %v977, %v976
    %v979 = vrot.slane %v890, 1
    %v980 = vsel %vm119, %v979, %v978
    %v981 = vrot.slane %v892, 7
    %v982 = vsel %vm101, %v981, %v891
    %v983 = vrot.slane %v893, 6
    %v984 = vsel %vm104, %v983, %v982
    %v985 = vrot.slane %v894, 5
    %v986 = vsel %vm107, %v985, %v984
    %v987 = vrot.slane %v895, 4
    %v988 = vsel %vm110, %v987, %v986
    %v989 = vrot.slane %v896, 3
    %v990 = vsel %vm113, %v989, %v988
    %v991 = vrot.slane %v897, 2
    %v992 = vsel %vm116, %v991, %v990
    %v993 = vrot.slane %v898, 1
    %v994 = vsel %vm119, %v993, %v992
    %995 = vrot.lane.b32.xlu0 %v980, 64
    %v996 = vpop.permute.xlu0 %995
    %997 = vrot.lane.b32.xlu0 %v994, 64
    %v998 = vpop.permute.xlu0 %997
    %v1001 = vsel %vm179, %v675, %v946
    %v1002 = vsel %vm179, %v689, %v948
    %v1003 = vsel %vm450, %v1001, %v996
    %v1004 = vsel %vm450, %v1002, %v998
    %v1006 = vsel %vm456, %v1003, 0
    %v1009 = vsel %vm456, %v1004, 0
    %1011 = vmatpush.msra.mxu0 0.0
    %1012 = vmatpush.msra.mxu0 0.0
    %1013 = vmatpush.msra.mxu0 0.0
    %1014 = vmatpush.msra.mxu0 0.0
    %1015 = vmatpush.msra.mxu0 %v49
    %1016 = vmatpush.msra.mxu0 %v48
    %1017 = vmatpush.msra.mxu0 %v47
    %1018 = vmatpush.msra.mxu0 %v46
    %1019 = vmatpush.msra.mxu0 %v45
    %1020 = vmatpush.msra.mxu0 %v44
    %1021 = vmatpush.msra.mxu0 %v43
    %1022 = vmatpush.msra.mxu0 %v42
    %1023 = vmatpush.msra.mxu0 %v41
    %1024 = vmatpush.msra.mxu0 %v40
    %1025 = vmatpush.msra.mxu0 %v39
    %1026 = vmatpush.msra.mxu0 %v38
    %1027 = vmatmul.f32.gmra.mxu0 %v1006
    %v1028 = vpop.f32.mrf.mxu0
    %v1029 = vadd.f32 %v454, %v1028
    %1030 = vmatmul.f32.gmra.mxu0 %v1009
    %v1031 = vpop.f32.mrf.mxu0
    %v1032 = vadd.f32 %v454, %v1031
    %1033 = vdwg.mxu0
    %v1036 = vrot.slane %v1029, 1
    %v1037 = vrot.slane %v1029, 2
    %v1038 = vrot.slane %v1029, 3
    %v1039 = vrot.slane %v1029, 4
    %v1040 = vrot.slane %v1029, 5
    %v1041 = vrot.slane %v1029, 6
    %v1042 = vrot.slane %v1029, 7
    %v1043 = vrot.slane %v1032, 1
    %v1044 = vrot.slane %v1032, 2
    %v1045 = vrot.slane %v1032, 3
    %v1046 = vrot.slane %v1032, 4
    %v1047 = vrot.slane %v1032, 5
    %v1048 = vrot.slane %v1032, 6
    %v1049 = vrot.slane %v1032, 7
    %1064 = vst.msk [vmem:[%s5 + $0x1] sm:$0x1] %vm516, %v1029
    %1065 = vst.msk [vmem:[%s5 + $0x3] sm:$0x1] %vm516, %v1036
    %1066 = vst.msk [vmem:[%s5 + $0x5] sm:$0x1] %vm516, %v1037
    %1067 = vst.msk [vmem:[%s5 + $0x7] sm:$0x1] %vm516, %v1038
    %1068 = vst.msk [vmem:[%s5 + $0x9] sm:$0x1] %vm516, %v1039
    %1069 = vst.msk [vmem:[%s5 + $0xb] sm:$0x1] %vm516, %v1040
    %1070 = vst.msk [vmem:[%s5 + $0xd] sm:$0x1] %vm516, %v1041
    %1071 = vst.msk [vmem:[%s5 + $0xf] sm:$0x1] %vm516, %v1042
    %1072 = vst.msk [vmem:[%s5 + $0x11] sm:$0x1] %vm516, %v1032
    %1073 = vst.msk [vmem:[%s5 + $0x13] sm:$0x1] %vm516, %v1043
    %1074 = vst.msk [vmem:[%s5 + $0x15] sm:$0x1] %vm516, %v1044
    %1075 = vst.msk [vmem:[%s5 + $0x17] sm:$0x1] %vm516, %v1045
    %1076 = vst.msk [vmem:[%s5 + $0x19] sm:$0x1] %vm516, %v1046
    %1077 = vst.msk [vmem:[%s5 + $0x1b] sm:$0x1] %vm516, %v1047
    %1078 = vst.msk [vmem:[%s5 + $0x1d] sm:$0x1] %vm516, %v1048
    %1079 = vst.msk [vmem:[%s5 + $0x1f] sm:$0x1] %vm516, %v1049
    %v1080 = vperm.slane %v1029, 0
    %v1081 = vperm.slane %v1036, 0
    %v1082 = vperm.slane %v1037, 0
    %v1083 = vperm.slane %v1038, 0
    %v1084 = vperm.slane %v1039, 0
    %v1085 = vperm.slane %v1040, 0
    %v1086 = vperm.slane %v1041, 0
    %v1087 = vperm.slane %v1042, 0
    %v1088 = vperm.slane %v1032, 0
    %v1089 = vperm.slane %v1043, 0
    %v1090 = vperm.slane %v1044, 0
    %v1091 = vperm.slane %v1045, 0
    %v1092 = vperm.slane %v1046, 0
    %v1093 = vperm.slane %v1047, 0
    %v1094 = vperm.slane %v1048, 0
    %v1095 = vperm.slane %v1049, 0
    %1096 = vrot.lane.b32.xlu0 %v1080, 64
    %v1097 = vpop.permute.xlu0 %1096
    %1098 = vrot.lane.b32.xlu0 %v1081, 64
    %v1099 = vpop.permute.xlu0 %1098
    %1100 = vrot.lane.b32.xlu0 %v1082, 64
    %v1101 = vpop.permute.xlu0 %1100
    %1102 = vrot.lane.b32.xlu0 %v1083, 64
    %v1103 = vpop.permute.xlu0 %1102
    %1104 = vrot.lane.b32.xlu0 %v1084, 64
    %v1105 = vpop.permute.xlu0 %1104
    %1106 = vrot.lane.b32.xlu0 %v1085, 64
    %v1107 = vpop.permute.xlu0 %1106
    %1108 = vrot.lane.b32.xlu0 %v1086, 64
    %v1109 = vpop.permute.xlu0 %1108
    %1110 = vrot.lane.b32.xlu0 %v1087, 64
    %v1111 = vpop.permute.xlu0 %1110
    %1112 = vrot.lane.b32.xlu0 %v1088, 64
    %v1113 = vpop.permute.xlu0 %1112
    %1114 = vrot.lane.b32.xlu0 %v1089, 64
    %v1115 = vpop.permute.xlu0 %1114
    %1116 = vrot.lane.b32.xlu0 %v1090, 64
    %v1117 = vpop.permute.xlu0 %1116
    %1118 = vrot.lane.b32.xlu0 %v1091, 64
    %v1119 = vpop.permute.xlu0 %1118
    %1120 = vrot.lane.b32.xlu0 %v1092, 64
    %v1121 = vpop.permute.xlu0 %1120
    %1122 = vrot.lane.b32.xlu0 %v1093, 64
    %v1123 = vpop.permute.xlu0 %1122
    %1124 = vrot.lane.b32.xlu0 %v1094, 64
    %v1125 = vpop.permute.xlu0 %1124
    %1126 = vrot.lane.b32.xlu0 %v1095, 64
    %v1127 = vpop.permute.xlu0 %1126
    %1144 = vst.msk [vmem:[%s6 + $0x1] sm:$0x1] %vm516, %v1097
    %1145 = vst.msk [vmem:[%s6 + $0x3] sm:$0x1] %vm516, %v1099
    %1146 = vst.msk [vmem:[%s6 + $0x5] sm:$0x1] %vm516, %v1101
    %1147 = vst.msk [vmem:[%s6 + $0x7] sm:$0x1] %vm516, %v1103
    %1148 = vst.msk [vmem:[%s6 + $0x9] sm:$0x1] %vm516, %v1105
    %1149 = vst.msk [vmem:[%s6 + $0xb] sm:$0x1] %vm516, %v1107
    %1150 = vst.msk [vmem:[%s6 + $0xd] sm:$0x1] %vm516, %v1109
    %1151 = vst.msk [vmem:[%s6 + $0xf] sm:$0x1] %vm516, %v1111
    %1152 = vst.msk [vmem:[%s6 + $0x11] sm:$0x1] %vm516, %v1113
    %1153 = vst.msk [vmem:[%s6 + $0x13] sm:$0x1] %vm516, %v1115
    %1154 = vst.msk [vmem:[%s6 + $0x15] sm:$0x1] %vm516, %v1117
    %1155 = vst.msk [vmem:[%s6 + $0x17] sm:$0x1] %vm516, %v1119
    %1156 = vst.msk [vmem:[%s6 + $0x19] sm:$0x1] %vm516, %v1121
    %1157 = vst.msk [vmem:[%s6 + $0x1b] sm:$0x1] %vm516, %v1123
    %1158 = vst.msk [vmem:[%s6 + $0x1d] sm:$0x1] %vm516, %v1125
    %1159 = vst.msk [vmem:[%s6 + $0x1f] sm:$0x1] %vm516, %v1127
    // Predicated region
    $region26: #{bcn_forward.7} parent=1 // pred_check
      _
    $region27: #{bcn_forward.7} parent=1 // pred_check_branch
      %1161 = sbr.rel (0) target = $region29
    $region28: #{bcn_forward.7} parent=1 // pred_region
      _
    $region29: #{bcn_forward.7} parent=1 // pred_fallthru
      _
    // Predicated region
    $region30: #{bcn_forward.7} parent=1 // pred_check
      _
    $region31: #{bcn_forward.7} parent=1 // pred_check_branch
      %1163 = sbr.rel (0) target = $region33
    $region32: #{bcn_forward.7} parent=1 // pred_region
      _
    $region33: #{bcn_forward.7} parent=1 // pred_fallthru
      _
    // Predicated region
    $region34: #{bcn_forward.7} parent=1 // pred_check
      _
    $region35: #{bcn_forward.7} parent=1 // pred_check_branch
      %1165 = sbr.rel (0) target = $region37
    $region36: #{bcn_forward.7} parent=1 // pred_region
      _
    $region37: #{bcn_forward.7} parent=1 // pred_fallthru
      _
    // Predicated region
    $region38: #{bcn_forward.7} parent=1 // pred_check
      _
    $region39: #{bcn_forward.7} parent=1 // pred_check_branch
      %1167 = sbr.rel (0) target = $region41
    $region40: #{bcn_forward.7} parent=1 // pred_region
      _
    $region41: #{bcn_forward.7} parent=1 // pred_fallthru
      _
    %1168 = vsyncpa [#allocation3], 1

// kernel: bcn_forward.9
$region0: #{bcn_forward.9}
  #allocation0 [shape = 'u32[]', space=smem, size = 0x4, offset = 0x4, fixed_abs, tag = 'smem constant byte address 0x4 - core index']
  #allocation1 [shape = 'u32[72,128]{1,0:T(1,128)}', space=vmem, size = 0x9000, scoped, tag = 'internal scratch']
  #allocation2 [shape = 'f32[1,1]{1,0:T(1,128)S(1)}', space=vmem, size = 0x200, scoped, tag = 'scoped memory for bcn_forward.9']
  %s0 = inlined_call_operand.vmem [shape: f32[16,2,32], index: 0, kind: input, shape index: {}]
  %s1 = inlined_call_operand.vmem [shape: f32[16,2,1], index: 1, kind: input, shape index: {}]
  %s2 = inlined_call_operand.vmem [shape: f32[1,32], index: 2, kind: input, shape index: {}]
  %s3 = inlined_call_operand.<no memory space> [shape: f32[1,1], index: 3, kind: input, shape index: {}]
  %s4 = inlined_call_operand.vmem [shape: f32[128,8], index: 4, kind: input, shape index: {}]
  %s5 = inlined_call_operand.vmem [shape: f32[1,8], index: 5, kind: input, shape index: {}]
  %s6 = inlined_call_operand.hbm [shape: f32[2,4], index: 6, kind: output, shape index: {0}]
  %s7 = inlined_call_operand.hbm [shape: f32[2,4], index: 7, kind: output, shape index: {1}]
  %8 = xla_tuple %s6, %s7
  %s9 = sld [smem:[#allocation0]]
  $region42: #{bcn_forward.9} parent=0
    _
  %s11 = ssub.s32 1, %s9
  %s12 = scalar_select 0, %s11, %s9
  %v13 = vstv %s3
  %14 = vst [vmem:[#allocation2] sm:$0x1] %v13
  $region1: #{bcn_forward.9} parent=0
    #allocation3 [shape = 'u8[1024]{0}', space=vmem, size = 0x400, scoped, tag = 'output window, operand 0, single buffered']
    #allocation4 [shape = 's32[1]{0}', space=sflag, size = 0x4, scoped, tag = 'scoped memory for bcn_forward.9']
    #allocation5 [shape = 'u8[1024]{0}', space=vmem, size = 0x400, scoped, tag = 'output window, operand 1, single buffered']
    #allocation6 [shape = 's32[1]{0}', space=sflag, size = 0x4, scoped, tag = 'scoped memory for bcn_forward.9']
    %15 = vsyncpa [#allocation4], 0
    %16 = vsyncpa [#allocation6], 0
    // Predicated region
    $region2: #{bcn_forward.9} parent=1 // pred_check
      _
    $region3: #{bcn_forward.9} parent=1 // pred_check_branch
      %18 = sbr.rel (0) target = $region5
    $region4: #{bcn_forward.9} parent=1 // pred_region
      _
    $region5: #{bcn_forward.9} parent=1 // pred_fallthru
      _
    // Predicated region
    $region6: #{bcn_forward.9} parent=1 // pred_check
      _
    $region7: #{bcn_forward.9} parent=1 // pred_check_branch
      %20 = sbr.rel (0) target = $region9
    $region8: #{bcn_forward.9} parent=1 // pred_region
      _
    $region9: #{bcn_forward.9} parent=1 // pred_fallthru
      _
    // Predicated region
    $region10: #{bcn_forward.9} parent=1 // pred_check
      _
    $region11: #{bcn_forward.9} parent=1 // pred_check_branch
      %22 = sbr.rel (0) target = $region13
    $region12: #{bcn_forward.9} parent=1 // pred_region
      _
    $region13: #{bcn_forward.9} parent=1 // pred_fallthru
      _
    // Predicated region
    $region14: #{bcn_forward.9} parent=1 // pred_check
      _
    $region15: #{bcn_forward.9} parent=1 // pred_check_branch
      %24 = sbr.rel (0) target = $region17
    $region16: #{bcn_forward.9} parent=1 // pred_region
      _
    $region17: #{bcn_forward.9} parent=1 // pred_fallthru
      _
    // Predicated region
    $region18: #{bcn_forward.9} parent=1 // pred_check
      _
    $region19: #{bcn_forward.9} parent=1 // pred_check_branch
      %26 = sbr.rel (0) target = $region21
    $region20: #{bcn_forward.9} parent=1 // pred_region
      _
    $region21: #{bcn_forward.9} parent=1 // pred_fallthru
      _
    // Predicated region
    $region22: #{bcn_forward.9} parent=1 // pred_check
      _
    $region23: #{bcn_forward.9} parent=1 // pred_check_branch
      %28 = sbr.rel (0) target = $region25
    $region24: #{bcn_forward.9} parent=1 // pred_region
      _
    $region25: #{bcn_forward.9} parent=1 // pred_fallthru
      _
    %v29 = vld [vmem:[%s0] sm:$0x3]
    %v30 = vld [vmem:[%s0 + $0x2] sm:$0x3]
    %v31 = vld [vmem:[%s0 + $0x4] sm:$0x3]
    %v32 = vld [vmem:[%s0 + $0x6] sm:$0x3]
    %v33 = vld [vmem:[%s0 + $0x8] sm:$0x3]
    %v34 = vld [vmem:[%s0 + $0xa] sm:$0x3]
    %v35 = vld [vmem:[%s0 + $0xc] sm:$0x3]
    %v36 = vld [vmem:[%s0 + $0xe] sm:$0x3]
    %v37 = vld [vmem:[%s0 + $0x10] sm:$0x3]
    %v38 = vld [vmem:[%s0 + $0x12] sm:$0x3]
    %v39 = vld [vmem:[%s0 + $0x14] sm:$0x3]
    %v40 = vld [vmem:[%s0 + $0x16] sm:$0x3]
    %v41 = vld [vmem:[%s0 + $0x18] sm:$0x3]
    %v42 = vld [vmem:[%s0 + $0x1a] sm:$0x3]
    %v43 = vld [vmem:[%s0 + $0x1c] sm:$0x3]
    %v44 = vld [vmem:[%s0 + $0x1e] sm:$0x3]
    %v45 = vld [vmem:[%s1] sm:$0x3]
    %v46 = vld [vmem:[%s1 + $0x2] sm:$0x3]
    %v47 = vld [vmem:[%s1 + $0x4] sm:$0x3]
    %v48 = vld [vmem:[%s1 + $0x6] sm:$0x3]
    %v49 = vld [vmem:[%s1 + $0x8] sm:$0x3]
    %v50 = vld [vmem:[%s1 + $0xa] sm:$0x3]
    %v51 = vld [vmem:[%s1 + $0xc] sm:$0x3]
    %v52 = vld [vmem:[%s1 + $0xe] sm:$0x3]
    %v53 = vld [vmem:[%s1 + $0x10] sm:$0x3]
    %v54 = vld [vmem:[%s1 + $0x12] sm:$0x3]
    %v55 = vld [vmem:[%s1 + $0x14] sm:$0x3]
    %v56 = vld [vmem:[%s1 + $0x16] sm:$0x3]
    %v57 = vld [vmem:[%s1 + $0x18] sm:$0x3]
    %v58 = vld [vmem:[%s1 + $0x1a] sm:$0x3]
    %v59 = vld [vmem:[%s1 + $0x1c] sm:$0x3]
    %v60 = vld [vmem:[%s1 + $0x1e] sm:$0x3]
    %vm61 = vcmp.gt.f32.partialorder %v45, 0.5
    %vm62 = vcmp.gt.f32.partialorder %v46, 0.5
    %vm63 = vcmp.gt.f32.partialorder %v47, 0.5
    %vm64 = vcmp.gt.f32.partialorder %v48, 0.5
    %vm65 = vcmp.gt.f32.partialorder %v49, 0.5
    %vm66 = vcmp.gt.f32.partialorder %v50, 0.5
    %vm67 = vcmp.gt.f32.partialorder %v51, 0.5
    %vm68 = vcmp.gt.f32.partialorder %v52, 0.5
    %vm69 = vcmp.gt.f32.partialorder %v53, 0.5
    %vm70 = vcmp.gt.f32.partialorder %v54, 0.5
    %vm71 = vcmp.gt.f32.partialorder %v55, 0.5
    %vm72 = vcmp.gt.f32.partialorder %v56, 0.5
    %vm73 = vcmp.gt.f32.partialorder %v57, 0.5
    %vm74 = vcmp.gt.f32.partialorder %v58, 0.5
    %vm75 = vcmp.gt.f32.partialorder %v59, 0.5
    %vm76 = vcmp.gt.f32.partialorder %v60, 0.5
    %v77 = vsel %vm61, 1, 0
    %v78 = vsel %vm62, 1, 0
    %v79 = vsel %vm63, 1, 0
    %v80 = vsel %vm64, 1, 0
    %v81 = vsel %vm65, 1, 0
    %v82 = vsel %vm66, 1, 0
    %v83 = vsel %vm67, 1, 0
    %v84 = vsel %vm68, 1, 0
    %v85 = vsel %vm69, 1, 0
    %v86 = vsel %vm70, 1, 0
    %v87 = vsel %vm71, 1, 0
    %v88 = vsel %vm72, 1, 0
    %v89 = vsel %vm73, 1, 0
    %v90 = vsel %vm74, 1, 0
    %v91 = vsel %vm75, 1, 0
    %v92 = vsel %vm76, 1, 0
    %93 = vset.pattern.permute.xlu0 0
    %94 = vperm.xlu0 %93, %v77
    %v95 = vpop.permute.xlu0 %94
    %96 = vset.pattern.permute.xlu0 0
    %97 = vperm.xlu0 %96, %v78
    %v98 = vpop.permute.xlu0 %97
    %99 = vset.pattern.permute.xlu0 0
    %100 = vperm.xlu0 %99, %v79
    %v101 = vpop.permute.xlu0 %100
    %102 = vset.pattern.permute.xlu0 0
    %103 = vperm.xlu0 %102, %v80
    %v104 = vpop.permute.xlu0 %103
    %105 = vset.pattern.permute.xlu0 0
    %106 = vperm.xlu0 %105, %v81
    %v107 = vpop.permute.xlu0 %106
    %108 = vset.pattern.permute.xlu0 0
    %109 = vperm.xlu0 %108, %v82
    %v110 = vpop.permute.xlu0 %109
    %111 = vset.pattern.permute.xlu0 0
    %112 = vperm.xlu0 %111, %v83
    %v113 = vpop.permute.xlu0 %112
    %114 = vset.pattern.permute.xlu0 0
    %115 = vperm.xlu0 %114, %v84
    %v116 = vpop.permute.xlu0 %115
    %117 = vset.pattern.permute.xlu0 0
    %118 = vperm.xlu0 %117, %v85
    %v119 = vpop.permute.xlu0 %118
    %120 = vset.pattern.permute.xlu0 0
    %121 = vperm.xlu0 %120, %v86
    %v122 = vpop.permute.xlu0 %121
    %123 = vset.pattern.permute.xlu0 0
    %124 = vperm.xlu0 %123, %v87
    %v125 = vpop.permute.xlu0 %124
    %126 = vset.pattern.permute.xlu0 0
    %127 = vperm.xlu0 %126, %v88
    %v128 = vpop.permute.xlu0 %127
    %129 = vset.pattern.permute.xlu0 0
    %130 = vperm.xlu0 %129, %v89
    %v131 = vpop.permute.xlu0 %130
    %132 = vset.pattern.permute.xlu0 0
    %133 = vperm.xlu0 %132, %v90
    %v134 = vpop.permute.xlu0 %133
    %135 = vset.pattern.permute.xlu0 0
    %136 = vperm.xlu0 %135, %v91
    %v137 = vpop.permute.xlu0 %136
    %138 = vset.pattern.permute.xlu0 0
    %139 = vperm.xlu0 %138, %v92
    %v140 = vpop.permute.xlu0 %139
    %vm141 = vcmp.eq.s32.totalorder %v95, 1
    %vm142 = vcmp.eq.s32.totalorder %v98, 1
    %vm143 = vcmp.eq.s32.totalorder %v101, 1
    %vm144 = vcmp.eq.s32.totalorder %v104, 1
    %vm145 = vcmp.eq.s32.totalorder %v107, 1
    %vm146 = vcmp.eq.s32.totalorder %v110, 1
    %vm147 = vcmp.eq.s32.totalorder %v113, 1
    %vm148 = vcmp.eq.s32.totalorder %v116, 1
    %vm149 = vcmp.eq.s32.totalorder %v119, 1
    %vm150 = vcmp.eq.s32.totalorder %v122, 1
    %vm151 = vcmp.eq.s32.totalorder %v125, 1
    %vm152 = vcmp.eq.s32.totalorder %v128, 1
    %vm153 = vcmp.eq.s32.totalorder %v131, 1
    %vm154 = vcmp.eq.s32.totalorder %v134, 1
    %vm155 = vcmp.eq.s32.totalorder %v137, 1
    %vm156 = vcmp.eq.s32.totalorder %v140, 1
    %v157 = vsel %vm141, %v29, -10000000.0
    %v158 = vsel %vm142, %v30, -10000000.0
    %v159 = vsel %vm143, %v31, -10000000.0
    %v160 = vsel %vm144, %v32, -10000000.0
    %v161 = vsel %vm145, %v33, -10000000.0
    %v162 = vsel %vm146, %v34, -10000000.0
    %v163 = vsel %vm147, %v35, -10000000.0
    %v164 = vsel %vm148, %v36, -10000000.0
    %v165 = vsel %vm149, %v37, -10000000.0
    %v166 = vsel %vm150, %v38, -10000000.0
    %v167 = vsel %vm151, %v39, -10000000.0
    %v168 = vsel %vm152, %v40, -10000000.0
    %v169 = vsel %vm153, %v41, -10000000.0
    %v170 = vsel %vm154, %v42, -10000000.0
    %v171 = vsel %vm155, %v43, -10000000.0
    %v172 = vsel %vm156, %v44, -10000000.0
    %vm173 = vcmask 254976
    %v174 = vsel %vm173, %v157, -inf
    %v175 = vsel %vm173, %v158, -inf
    %v176 = vsel %vm173, %v159, -inf
    %v177 = vsel %vm173, %v160, -inf
    %v178 = vsel %vm173, %v161, -inf
    %v179 = vmax.f32 %v174, %v178
    %v180 = vsel %vm173, %v162, -inf
    %v181 = vmax.f32 %v175, %v180
    %v182 = vsel %vm173, %v163, -inf
    %v183 = vmax.f32 %v176, %v182
    %v184 = vsel %vm173, %v164, -inf
    %v185 = vmax.f32 %v177, %v184
    %v186 = vsel %vm173, %v165, -inf
    %v187 = vmax.f32 %v179, %v186
    %v188 = vsel %vm173, %v166, -inf
    %v189 = vmax.f32 %v181, %v188
    %v190 = vsel %vm173, %v167, -inf
    %v191 = vmax.f32 %v183, %v190
    %v192 = vsel %vm173, %v168, -inf
    %v193 = vmax.f32 %v185, %v192
    %v194 = vsel %vm173, %v169, -inf
    %v195 = vmax.f32 %v187, %v194
    %v196 = vsel %vm173, %v170, -inf
    %v197 = vmax.f32 %v189, %v196
    %v198 = vsel %vm173, %v171, -inf
    %v199 = vmax.f32 %v191, %v198
    %v200 = vsel %vm173, %v172, -inf
    %v201 = vmax.f32 %v193, %v200
    %v202 = vmax.f32 %v195, %v197
    %v203 = vmax.f32 %v199, %v201
    %v204 = vmax.f32 %v202, %v203
    %v205 = vsel %vm141, %v29, 10000000.0
    %v206 = vsel %vm142, %v30, 10000000.0
    %v207 = vsel %vm143, %v31, 10000000.0
    %v208 = vsel %vm144, %v32, 10000000.0
    %v209 = vsel %vm145, %v33, 10000000.0
    %v210 = vsel %vm146, %v34, 10000000.0
    %v211 = vsel %vm147, %v35, 10000000.0
    %v212 = vsel %vm148, %v36, 10000000.0
    %v213 = vsel %vm149, %v37, 10000000.0
    %v214 = vsel %vm150, %v38, 10000000.0
    %v215 = vsel %vm151, %v39, 10000000.0
    %v216 = vsel %vm152, %v40, 10000000.0
    %v217 = vsel %vm153, %v41, 10000000.0
    %v218 = vsel %vm154, %v42, 10000000.0
    %v219 = vsel %vm155, %v43, 10000000.0
    %v220 = vsel %vm156, %v44, 10000000.0
    %v221 = vsel %vm173, %v205, inf
    %v222 = vsel %vm173, %v206, inf
    %v223 = vsel %vm173, %v207, inf
    %v224 = vsel %vm173, %v208, inf
    %v225 = vsel %vm173, %v209, inf
    %v226 = vmin.f32 %v221, %v225
    %v227 = vsel %vm173, %v210, inf
    %v228 = vmin.f32 %v222, %v227
    %v229 = vsel %vm173, %v211, inf
    %v230 = vmin.f32 %v223, %v229
    %v231 = vsel %vm173, %v212, inf
    %v232 = vmin.f32 %v224, %v231
    %v233 = vsel %vm173, %v213, inf
    %v234 = vmin.f32 %v226, %v233
    %v235 = vsel %vm173, %v214, inf
    %v236 = vmin.f32 %v228, %v235
    %v237 = vsel %vm173, %v215, inf
    %v238 = vmin.f32 %v230, %v237
    %v239 = vsel %vm173, %v216, inf
    %v240 = vmin.f32 %v232, %v239
    %v241 = vsel %vm173, %v217, inf
    %v242 = vmin.f32 %v234, %v241
    %v243 = vsel %vm173, %v218, inf
    %v244 = vmin.f32 %v236, %v243
    %v245 = vsel %vm173, %v219, inf
    %v246 = vmin.f32 %v238, %v245
    %v247 = vsel %vm173, %v220, inf
    %v248 = vmin.f32 %v240, %v247
    %v249 = vmin.f32 %v242, %v244
    %v250 = vmin.f32 %v246, %v248
    %v251 = vmin.f32 %v249, %v250
    %v252 = vsel %vm173, %v29, 0.0
    %v253 = vsel %vm173, %v30, 0.0
    %v254 = vadd.f32 %v252, %v253
    %v255 = vsel %vm173, %v31, 0.0
    %v256 = vadd.f32 %v254, %v255
    %v257 = vsel %vm173, %v32, 0.0
    %v258 = vadd.f32 %v256, %v257
    %v259 = vsel %vm173, %v33, 0.0
    %v260 = vadd.f32 %v258, %v259
    %v261 = vsel %vm173, %v34, 0.0
    %v262 = vadd.f32 %v260, %v261
    %v263 = vsel %vm173, %v35, 0.0
    %v264 = vadd.f32 %v262, %v263
    %v265 = vsel %vm173, %v36, 0.0
    %v266 = vadd.f32 %v264, %v265
    %v267 = vsel %vm173, %v37, 0.0
    %v268 = vadd.f32 %v266, %v267
    %v269 = vsel %vm173, %v38, 0.0
    %v270 = vadd.f32 %v268, %v269
    %v271 = vsel %vm173, %v39, 0.0
    %v272 = vadd.f32 %v270, %v271
    %v273 = vsel %vm173, %v40, 0.0
    %v274 = vadd.f32 %v272, %v273
    %v275 = vsel %vm173, %v41, 0.0
    %v276 = vadd.f32 %v274, %v275
    %v277 = vsel %vm173, %v42, 0.0
    %v278 = vadd.f32 %v276, %v277
    %v279 = vsel %vm173, %v43, 0.0
    %v280 = vadd.f32 %v278, %v279
    %v281 = vsel %vm173, %v44, 0.0
    %v282 = vadd.f32 %v280, %v281
    %vm283 = vcmask 1024
    %v284 = vsel %vm283, %v45, 0.0
    %v285 = vsel %vm283, %v46, 0.0
    %v286 = vadd.f32 %v284, %v285
    %v287 = vsel %vm283, %v47, 0.0
    %v288 = vadd.f32 %v286, %v287
    %v289 = vsel %vm283, %v48, 0.0
    %v290 = vadd.f32 %v288, %v289
    %v291 = vsel %vm283, %v49, 0.0
    %v292 = vadd.f32 %v290, %v291
    %v293 = vsel %vm283, %v50, 0.0
    %v294 = vadd.f32 %v292, %v293
    %v295 = vsel %vm283, %v51, 0.0
    %v296 = vadd.f32 %v294, %v295
    %v297 = vsel %vm283, %v52, 0.0
    %v298 = vadd.f32 %v296, %v297
    %v299 = vsel %vm283, %v53, 0.0
    %v300 = vadd.f32 %v298, %v299
    %v301 = vsel %vm283, %v54, 0.0
    %v302 = vadd.f32 %v300, %v301
    %v303 = vsel %vm283, %v55, 0.0
    %v304 = vadd.f32 %v302, %v303
    %v305 = vsel %vm283, %v56, 0.0
    %v306 = vadd.f32 %v304, %v305
    %v307 = vsel %vm283, %v57, 0.0
    %v308 = vadd.f32 %v306, %v307
    %v309 = vsel %vm283, %v58, 0.0
    %v310 = vadd.f32 %v308, %v309
    %v311 = vsel %vm283, %v59, 0.0
    %v312 = vadd.f32 %v310, %v311
    %v313 = vsel %vm283, %v60, 0.0
    %v314 = vadd.f32 %v312, %v313
    %316 = vset.pattern.permute.xlu0 0
    %317 = vperm.xlu0 %316, %v314
    %v318 = vpop.permute.xlu0 %317
    %v320 = vrcp.pop %v318
    %v321 = vmul.f32 %v318, %v320
    %v322 = vsub.f32 1.0, %v321
    %v323 = vmul.f32 %v320, %v322
    %v324 = vadd.f32 %v320, %v323
    %vm325 = vweird.f32 %v318
    %vm326 = vweird.f32 %v320
    %vm327 = vmor %vm325, %vm326
    %v328 = vsel %vm327, %v320, %v324
    %v329 = vand.u32 2147483647, %v318
    %vm330 = vcmp.eq.f32.partialorder %v329, 8.507059e+37
    %v331 = vand.u32 %v318, 2147483648
    %v332 = vor.u32 1.1754944e-38, %v331
    %v333 = vsel %vm330, %v332, %v328
    %v334 = vmul.f32 %v282, %v333
    %v335 = vld [vmem:[%s2] sm:$0x1]
    %v337 = vperm.slane %v335, 0
    %v339 = vmul.f32 %v29, %v337
    %v340 = vmul.f32 %v30, %v337
    %v341 = vmul.f32 %v31, %v337
    %v342 = vmul.f32 %v32, %v337
    %v343 = vmul.f32 %v33, %v337
    %v344 = vmul.f32 %v34, %v337
    %v345 = vmul.f32 %v35, %v337
    %v346 = vmul.f32 %v36, %v337
    %v347 = vmul.f32 %v37, %v337
    %v348 = vmul.f32 %v38, %v337
    %v349 = vmul.f32 %v39, %v337
    %v350 = vmul.f32 %v40, %v337
    %v351 = vmul.f32 %v41, %v337
    %v352 = vmul.f32 %v42, %v337
    %v353 = vmul.f32 %v43, %v337
    %v354 = vmul.f32 %v44, %v337
    %v355 = vsel %vm173, %v339, 0.0
    %356 = vadd.xlane.f32.xlu0 %v355
    %v357 = vpop.xlane.xlu0 %356
    %v358 = vsel %vm173, %v340, 0.0
    %359 = vadd.xlane.f32.xlu0 %v358
    %v360 = vpop.xlane.xlu0 %359
    %v361 = vsel %vm173, %v341, 0.0
    %362 = vadd.xlane.f32.xlu0 %v361
    %v363 = vpop.xlane.xlu0 %362
    %v364 = vsel %vm173, %v342, 0.0
    %365 = vadd.xlane.f32.xlu0 %v364
    %v366 = vpop.xlane.xlu0 %365
    %v367 = vsel %vm173, %v343, 0.0
    %368 = vadd.xlane.f32.xlu0 %v367
    %v369 = vpop.xlane.xlu0 %368
    %v370 = vsel %vm173, %v344, 0.0
    %371 = vadd.xlane.f32.xlu0 %v370
    %v372 = vpop.xlane.xlu0 %371
    %v373 = vsel %vm173, %v345, 0.0
    %374 = vadd.xlane.f32.xlu0 %v373
    %v375 = vpop.xlane.xlu0 %374
    %v376 = vsel %vm173, %v346, 0.0
    %377 = vadd.xlane.f32.xlu0 %v376
    %v378 = vpop.xlane.xlu0 %377
    %v379 = vsel %vm173, %v347, 0.0
    %380 = vadd.xlane.f32.xlu0 %v379
    %v381 = vpop.xlane.xlu0 %380
    %v382 = vsel %vm173, %v348, 0.0
    %383 = vadd.xlane.f32.xlu0 %v382
    %v384 = vpop.xlane.xlu0 %383
    %v385 = vsel %vm173, %v349, 0.0
    %386 = vadd.xlane.f32.xlu0 %v385
    %v387 = vpop.xlane.xlu0 %386
    %v388 = vsel %vm173, %v350, 0.0
    %389 = vadd.xlane.f32.xlu0 %v388
    %v390 = vpop.xlane.xlu0 %389
    %v391 = vsel %vm173, %v351, 0.0
    %392 = vadd.xlane.f32.xlu0 %v391
    %v393 = vpop.xlane.xlu0 %392
    %v394 = vsel %vm173, %v352, 0.0
    %395 = vadd.xlane.f32.xlu0 %v394
    %v396 = vpop.xlane.xlu0 %395
    %v397 = vsel %vm173, %v353, 0.0
    %398 = vadd.xlane.f32.xlu0 %v397
    %v399 = vpop.xlane.xlu0 %398
    %v400 = vsel %vm173, %v354, 0.0
    %401 = vadd.xlane.f32.xlu0 %v400
    %v402 = vpop.xlane.xlu0 %401
    %v403 = vld [vmem:[#allocation2] sm:$0x1]
    %s404 = vtos %v403
    %v405 = vstv %s404
    %v406 = vadd.f32 %v357, %v405
    %v407 = vadd.f32 %v360, %v405
    %v408 = vadd.f32 %v363, %v405
    %v409 = vadd.f32 %v366, %v405
    %v410 = vadd.f32 %v369, %v405
    %v411 = vadd.f32 %v372, %v405
    %v412 = vadd.f32 %v375, %v405
    %v413 = vadd.f32 %v378, %v405
    %v414 = vadd.f32 %v381, %v405
    %v415 = vadd.f32 %v384, %v405
    %v416 = vadd.f32 %v387, %v405
    %v417 = vadd.f32 %v390, %v405
    %v418 = vadd.f32 %v393, %v405
    %v419 = vadd.f32 %v396, %v405
    %v420 = vadd.f32 %v399, %v405
    %v421 = vadd.f32 %v402, %v405
    %v422 = vmul.f32 %v406, %v45
    %v423 = vmul.f32 %v407, %v46
    %v424 = vmul.f32 %v408, %v47
    %v425 = vmul.f32 %v409, %v48
    %v426 = vmul.f32 %v410, %v49
    %v427 = vmul.f32 %v411, %v50
    %v428 = vmul.f32 %v412, %v51
    %v429 = vmul.f32 %v413, %v52
    %v430 = vmul.f32 %v414, %v53
    %v431 = vmul.f32 %v415, %v54
    %v432 = vmul.f32 %v416, %v55
    %v433 = vmul.f32 %v417, %v56
    %v434 = vmul.f32 %v418, %v57
    %v435 = vmul.f32 %v419, %v58
    %v436 = vmul.f32 %v420, %v59
    %v437 = vmul.f32 %v421, %v60
    %v438 = vsel %vm283, %v422, -inf
    %v439 = vsel %vm283, %v423, -inf
    %v440 = vsel %vm283, %v424, -inf
    %v441 = vsel %vm283, %v425, -inf
    %v442 = vsel %vm283, %v426, -inf
    %v443 = vmax.f32 %v438, %v442
    %v444 = vsel %vm283, %v427, -inf
    %v445 = vmax.f32 %v439, %v444
    %v446 = vsel %vm283, %v428, -inf
    %v447 = vmax.f32 %v440, %v446
    %v448 = vsel %vm283, %v429, -inf
    %v449 = vmax.f32 %v441, %v448
    %v450 = vsel %vm283, %v430, -inf
    %v451 = vmax.f32 %v443, %v450
    %v452 = vsel %vm283, %v431, -inf
    %v453 = vmax.f32 %v445, %v452
    %v454 = vsel %vm283, %v432, -inf
    %v455 = vmax.f32 %v447, %v454
    %v456 = vsel %vm283, %v433, -inf
    %v457 = vmax.f32 %v449, %v456
    %v458 = vsel %vm283, %v434, -inf
    %v459 = vmax.f32 %v451, %v458
    %v460 = vsel %vm283, %v435, -inf
    %v461 = vmax.f32 %v453, %v460
    %v462 = vsel %vm283, %v436, -inf
    %v463 = vmax.f32 %v455, %v462
    %v464 = vsel %vm283, %v437, -inf
    %v465 = vmax.f32 %v457, %v464
    %v466 = vmax.f32 %v459, %v461
    %v467 = vmax.f32 %v463, %v465
    %v468 = vmax.f32 %v466, %v467
    %v469 = vsub.f32 %v422, %v468
    %v470 = vsub.f32 %v423, %v468
    %v471 = vsub.f32 %v424, %v468
    %v472 = vsub.f32 %v425, %v468
    %v473 = vsub.f32 %v426, %v468
    %v474 = vsub.f32 %v427, %v468
    %v475 = vsub.f32 %v428, %v468
    %v476 = vsub.f32 %v429, %v468
    %v477 = vsub.f32 %v430, %v468
    %v478 = vsub.f32 %v431, %v468
    %v479 = vsub.f32 %v432, %v468
    %v480 = vsub.f32 %v433, %v468
    %v481 = vsub.f32 %v434, %v468
    %v482 = vsub.f32 %v435, %v468
    %v483 = vsub.f32 %v436, %v468
    %v484 = vsub.f32 %v437, %v468
    %v485 = vmul.f32 %v469, 1.442695
    %v486 = vpow.pop %v485
    %v487 = vmul.f32 %v470, 1.442695
    %v488 = vpow.pop %v487
    %v489 = vmul.f32 %v471, 1.442695
    %v490 = vpow.pop %v489
    %v491 = vmul.f32 %v472, 1.442695
    %v492 = vpow.pop %v491
    %v493 = vmul.f32 %v473, 1.442695
    %v494 = vpow.pop %v493
    %v495 = vmul.f32 %v474, 1.442695
    %v496 = vpow.pop %v495
    %v497 = vmul.f32 %v475, 1.442695
    %v498 = vpow.pop %v497
    %v499 = vmul.f32 %v476, 1.442695
    %v500 = vpow.pop %v499
    %v501 = vmul.f32 %v477, 1.442695
    %v502 = vpow.pop %v501
    %v503 = vmul.f32 %v478, 1.442695
    %v504 = vpow.pop %v503
    %v505 = vmul.f32 %v479, 1.442695
    %v506 = vpow.pop %v505
    %v507 = vmul.f32 %v480, 1.442695
    %v508 = vpow.pop %v507
    %v509 = vmul.f32 %v481, 1.442695
    %v510 = vpow.pop %v509
    %v511 = vmul.f32 %v482, 1.442695
    %v512 = vpow.pop %v511
    %v513 = vmul.f32 %v483, 1.442695
    %v514 = vpow.pop %v513
    %v515 = vmul.f32 %v484, 1.442695
    %v516 = vpow.pop %v515
    %v517 = vsel %vm283, %v486, 0.0
    %v518 = vsel %vm283, %v488, 0.0
    %v519 = vadd.f32 %v517, %v518
    %v520 = vsel %vm283, %v490, 0.0
    %v521 = vadd.f32 %v519, %v520
    %v522 = vsel %vm283, %v492, 0.0
    %v523 = vadd.f32 %v521, %v522
    %v524 = vsel %vm283, %v494, 0.0
    %v525 = vadd.f32 %v523, %v524
    %v526 = vsel %vm283, %v496, 0.0
    %v527 = vadd.f32 %v525, %v526
    %v528 = vsel %vm283, %v498, 0.0
    %v529 = vadd.f32 %v527, %v528
    %v530 = vsel %vm283, %v500, 0.0
    %v531 = vadd.f32 %v529, %v530
    %v532 = vsel %vm283, %v502, 0.0
    %v533 = vadd.f32 %v531, %v532
    %v534 = vsel %vm283, %v504, 0.0
    %v535 = vadd.f32 %v533, %v534
    %v536 = vsel %vm283, %v506, 0.0
    %v537 = vadd.f32 %v535, %v536
    %v538 = vsel %vm283, %v508, 0.0
    %v539 = vadd.f32 %v537, %v538
    %v540 = vsel %vm283, %v510, 0.0
    %v541 = vadd.f32 %v539, %v540
    %v542 = vsel %vm283, %v512, 0.0
    %v543 = vadd.f32 %v541, %v542
    %v544 = vsel %vm283, %v514, 0.0
    %v545 = vadd.f32 %v543, %v544
    %v546 = vsel %vm283, %v516, 0.0
    %v547 = vadd.f32 %v545, %v546
    %v548 = vrcp.pop %v547
    %v549 = vmul.f32 %v486, %v548
    %v550 = vmul.f32 %v488, %v548
    %v551 = vmul.f32 %v490, %v548
    %v552 = vmul.f32 %v492, %v548
    %v553 = vmul.f32 %v494, %v548
    %v554 = vmul.f32 %v496, %v548
    %v555 = vmul.f32 %v498, %v548
    %v556 = vmul.f32 %v500, %v548
    %v557 = vmul.f32 %v502, %v548
    %v558 = vmul.f32 %v504, %v548
    %v559 = vmul.f32 %v506, %v548
    %v560 = vmul.f32 %v508, %v548
    %v561 = vmul.f32 %v510, %v548
    %v562 = vmul.f32 %v512, %v548
    %v563 = vmul.f32 %v514, %v548
    %v564 = vmul.f32 %v516, %v548
    %v565 = vmul.f32 %v549, %v45
    %v566 = vmul.f32 %v550, %v46
    %v567 = vmul.f32 %v551, %v47
    %v568 = vmul.f32 %v552, %v48
    %v569 = vmul.f32 %v553, %v49
    %v570 = vmul.f32 %v554, %v50
    %v571 = vmul.f32 %v555, %v51
    %v572 = vmul.f32 %v556, %v52
    %v573 = vmul.f32 %v557, %v53
    %v574 = vmul.f32 %v558, %v54
    %v575 = vmul.f32 %v559, %v55
    %v576 = vmul.f32 %v560, %v56
    %v577 = vmul.f32 %v561, %v57
    %v578 = vmul.f32 %v562, %v58
    %v579 = vmul.f32 %v563, %v59
    %v580 = vmul.f32 %v564, %v60
    %v581 = vsel %vm283, %v565, 0.0
    %v582 = vsel %vm283, %v566, 0.0
    %v583 = vadd.f32 %v581, %v582
    %v584 = vsel %vm283, %v567, 0.0
    %v585 = vadd.f32 %v583, %v584
    %v586 = vsel %vm283, %v568, 0.0
    %v587 = vadd.f32 %v585, %v586
    %v588 = vsel %vm283, %v569, 0.0
    %v589 = vadd.f32 %v587, %v588
    %v590 = vsel %vm283, %v570, 0.0
    %v591 = vadd.f32 %v589, %v590
    %v592 = vsel %vm283, %v571, 0.0
    %v593 = vadd.f32 %v591, %v592
    %v594 = vsel %vm283, %v572, 0.0
    %v595 = vadd.f32 %v593, %v594
    %v596 = vsel %vm283, %v573, 0.0
    %v597 = vadd.f32 %v595, %v596
    %v598 = vsel %vm283, %v574, 0.0
    %v599 = vadd.f32 %v597, %v598
    %v600 = vsel %vm283, %v575, 0.0
    %v601 = vadd.f32 %v599, %v600
    %v602 = vsel %vm283, %v576, 0.0
    %v603 = vadd.f32 %v601, %v602
    %v604 = vsel %vm283, %v577, 0.0
    %v605 = vadd.f32 %v603, %v604
    %v606 = vsel %vm283, %v578, 0.0
    %v607 = vadd.f32 %v605, %v606
    %v608 = vsel %vm283, %v579, 0.0
    %v609 = vadd.f32 %v607, %v608
    %v610 = vsel %vm283, %v580, 0.0
    %v611 = vadd.f32 %v609, %v610
    %v612 = vadd.f32 %v611, 1e-13
    %v613 = vrcp.pop %v612
    %v614 = vmul.f32 %v565, %v613
    %v615 = vmul.f32 %v566, %v613
    %v616 = vmul.f32 %v567, %v613
    %v617 = vmul.f32 %v568, %v613
    %v618 = vmul.f32 %v569, %v613
    %v619 = vmul.f32 %v570, %v613
    %v620 = vmul.f32 %v571, %v613
    %v621 = vmul.f32 %v572, %v613
    %v622 = vmul.f32 %v573, %v613
    %v623 = vmul.f32 %v574, %v613
    %v624 = vmul.f32 %v575, %v613
    %v625 = vmul.f32 %v576, %v613
    %v626 = vmul.f32 %v577, %v613
    %v627 = vmul.f32 %v578, %v613
    %v628 = vmul.f32 %v579, %v613
    %v629 = vmul.f32 %v580, %v613
    %631 = vset.pattern.permute.xlu0 0
    %632 = vperm.xlu0 %631, %v614
    %v633 = vpop.permute.xlu0 %632
    %636 = vset.pattern.permute.xlu0 0
    %637 = vperm.xlu0 %636, %v615
    %v638 = vpop.permute.xlu0 %637
    %641 = vset.pattern.permute.xlu0 0
    %642 = vperm.xlu0 %641, %v616
    %v643 = vpop.permute.xlu0 %642
    %646 = vset.pattern.permute.xlu0 0
    %647 = vperm.xlu0 %646, %v617
    %v648 = vpop.permute.xlu0 %647
    %651 = vset.pattern.permute.xlu0 0
    %652 = vperm.xlu0 %651, %v618
    %v653 = vpop.permute.xlu0 %652
    %656 = vset.pattern.permute.xlu0 0
    %657 = vperm.xlu0 %656, %v619
    %v658 = vpop.permute.xlu0 %657
    %661 = vset.pattern.permute.xlu0 0
    %662 = vperm.xlu0 %661, %v620
    %v663 = vpop.permute.xlu0 %662
    %666 = vset.pattern.permute.xlu0 0
    %667 = vperm.xlu0 %666, %v621
    %v668 = vpop.permute.xlu0 %667
    %671 = vset.pattern.permute.xlu0 0
    %672 = vperm.xlu0 %671, %v622
    %v673 = vpop.permute.xlu0 %672
    %676 = vset.pattern.permute.xlu0 0
    %677 = vperm.xlu0 %676, %v623
    %v678 = vpop.permute.xlu0 %677
    %681 = vset.pattern.permute.xlu0 0
    %682 = vperm.xlu0 %681, %v624
    %v683 = vpop.permute.xlu0 %682
    %686 = vset.pattern.permute.xlu0 0
    %687 = vperm.xlu0 %686, %v625
    %v688 = vpop.permute.xlu0 %687
    %691 = vset.pattern.permute.xlu0 0
    %692 = vperm.xlu0 %691, %v626
    %v693 = vpop.permute.xlu0 %692
    %696 = vset.pattern.permute.xlu0 0
    %697 = vperm.xlu0 %696, %v627
    %v698 = vpop.permute.xlu0 %697
    %701 = vset.pattern.permute.xlu0 0
    %702 = vperm.xlu0 %701, %v628
    %v703 = vpop.permute.xlu0 %702
    %706 = vset.pattern.permute.xlu0 0
    %707 = vperm.xlu0 %706, %v629
    %v708 = vpop.permute.xlu0 %707
    %v710 = vmul.f32 %v633, %v29
    %v711 = vmul.f32 %v638, %v30
    %v712 = vmul.f32 %v643, %v31
    %v713 = vmul.f32 %v648, %v32
    %v714 = vmul.f32 %v653, %v33
    %v715 = vmul.f32 %v658, %v34
    %v716 = vmul.f32 %v663, %v35
    %v717 = vmul.f32 %v668, %v36
    %v718 = vmul.f32 %v673, %v37
    %v719 = vmul.f32 %v678, %v38
    %v720 = vmul.f32 %v683, %v39
    %v721 = vmul.f32 %v688, %v40
    %v722 = vmul.f32 %v693, %v41
    %v723 = vmul.f32 %v698, %v42
    %v724 = vmul.f32 %v703, %v43
    %v725 = vmul.f32 %v708, %v44
    %v726 = vsel %vm173, %v710, 0.0
    %v727 = vsel %vm173, %v711, 0.0
    %v728 = vadd.f32 %v726, %v727
    %v729 = vsel %vm173, %v712, 0.0
    %v730 = vadd.f32 %v728, %v729
    %v731 = vsel %vm173, %v713, 0.0
    %v732 = vadd.f32 %v730, %v731
    %v733 = vsel %vm173, %v714, 0.0
    %v734 = vadd.f32 %v732, %v733
    %v735 = vsel %vm173, %v715, 0.0
    %v736 = vadd.f32 %v734, %v735
    %v737 = vsel %vm173, %v716, 0.0
    %v738 = vadd.f32 %v736, %v737
    %v739 = vsel %vm173, %v717, 0.0
    %v740 = vadd.f32 %v738, %v739
    %v741 = vsel %vm173, %v718, 0.0
    %v742 = vadd.f32 %v740, %v741
    %v743 = vsel %vm173, %v719, 0.0
    %v744 = vadd.f32 %v742, %v743
    %v745 = vsel %vm173, %v720, 0.0
    %v746 = vadd.f32 %v744, %v745
    %v747 = vsel %vm173, %v721, 0.0
    %v748 = vadd.f32 %v746, %v747
    %v749 = vsel %vm173, %v722, 0.0
    %v750 = vadd.f32 %v748, %v749
    %v751 = vsel %vm173, %v723, 0.0
    %v752 = vadd.f32 %v750, %v751
    %v753 = vsel %vm173, %v724, 0.0
    %v754 = vadd.f32 %v752, %v753
    %v755 = vsel %vm173, %v725, 0.0
    %v756 = vadd.f32 %v754, %v755
    %758 = vrot.lane.b32.xlu0 %v251, 32
    %v759 = vpop.permute.xlu0 %758
    %762 = vrot.lane.b32.xlu0 %v334, 64
    %v763 = vpop.permute.xlu0 %762
    %766 = vrot.lane.b32.xlu0 %v756, 96
    %v767 = vpop.permute.xlu0 %766
    %vm769 = vcmask 261120
    %v770 = vsel %vm769, %v204, %v759
    %vm771 = vcmask 523264
    %v772 = vsel %vm771, %v770, %v763
    %vm773 = vcmask 785408
    %v774 = vsel %vm773, %v772, %v767
    %v775 = vld [vmem:[%s4] sm:$0xff]
    %v776 = vld [vmem:[%s4 + $0x8] sm:$0xff]
    %v777 = vld [vmem:[%s4 + $0x10] sm:$0xff]
    %v778 = vld [vmem:[%s4 + $0x18] sm:$0xff]
    %v779 = vld [vmem:[%s4 + $0x20] sm:$0xff]
    %v780 = vld [vmem:[%s4 + $0x28] sm:$0xff]
    %v781 = vld [vmem:[%s4 + $0x30] sm:$0xff]
    %v782 = vld [vmem:[%s4 + $0x38] sm:$0xff]
    %v783 = vld [vmem:[%s4 + $0x40] sm:$0xff]
    %v784 = vld [vmem:[%s4 + $0x48] sm:$0xff]
    %v785 = vld [vmem:[%s4 + $0x50] sm:$0xff]
    %v786 = vld [vmem:[%s4 + $0x58] sm:$0xff]
    %v787 = vld [vmem:[%s4 + $0x60] sm:$0xff]
    %v788 = vld [vmem:[%s4 + $0x68] sm:$0xff]
    %v789 = vld [vmem:[%s4 + $0x70] sm:$0xff]
    %v790 = vld [vmem:[%s4 + $0x78] sm:$0xff]
    %v791 = vld [vmem:[%s5] sm:$0x1]
    %v793 = vperm.slane %v791, 0
    %795 = vmatpush.msra.mxu0 %v790
    %796 = vmatpush.msra.mxu0 %v789
    %797 = vmatpush.msra.mxu0 %v788
    %798 = vmatpush.msra.mxu0 %v787
    %799 = vmatpush.msra.mxu0 %v786
    %800 = vmatpush.msra.mxu0 %v785
    %801 = vmatpush.msra.mxu0 %v784
    %802 = vmatpush.msra.mxu0 %v783
    %803 = vmatpush.msra.mxu0 %v782
    %804 = vmatpush.msra.mxu0 %v781
    %805 = vmatpush.msra.mxu0 %v780
    %806 = vmatpush.msra.mxu0 %v779
    %807 = vmatpush.msra.mxu0 %v778
    %808 = vmatpush.msra.mxu0 %v777
    %809 = vmatpush.msra.mxu0 %v776
    %810 = vmatpush.msra.mxu0 %v775
    %811 = vmatmul.f32.gmra.mxu0 %v774
    %v812 = vpop.f32.mrf.mxu0
    %v813 = vadd.f32 %v793, %v812
    %814 = vdwg.mxu0
    %816 = vrot.lane.b32.xlu0 %v813, 124
    %v817 = vpop.permute.xlu0 %816
    %v819 = vmax.f32 %v813, %v817
    %vm820 = vcmask 25600
    %821 = vst.msk [vmem:[#allocation3] sm:$0x3] %vm820, %v819
    %v822 = vsel %vm820, %v819, -inf
    %823 = vmax.xlane.f32.xlu0 %v822
    %v824 = vpop.xlane.xlu0 %823
    %v825 = vsub.f32 %v819, %v824
    %v826 = vmul.f32 %v825, 1.442695
    %v827 = vpow.pop %v826
    %v828 = vsel %vm820, %v827, 0.0
    %829 = vadd.xlane.f32.xlu0 %v828
    %v830 = vpop.xlane.xlu0 %829
    %v831 = vrcp.pop %v830
    %v832 = vmul.f32 %v830, %v831
    %v833 = vsub.f32 1.0, %v832
    %v834 = vmul.f32 %v831, %v833
    %v835 = vadd.f32 %v831, %v834
    %vm836 = vweird.f32 %v830
    %vm837 = vweird.f32 %v831
    %vm838 = vmor %vm836, %vm837
    %v839 = vsel %vm838, %v831, %v835
    %v840 = vand.u32 2147483647, %v830
    %vm841 = vcmp.eq.f32.partialorder %v840, 8.507059e+37
    %v842 = vand.u32 %v830, 2147483648
    %v843 = vor.u32 1.1754944e-38, %v842
    %v844 = vsel %vm841, %v843, %v839
    %v845 = vmul.f32 %v827, %v844
    %846 = vst.msk [vmem:[#allocation5] sm:$0x3] %vm820, %v845
    // Predicated region
    $region26: #{bcn_forward.9} parent=1 // pred_check
      _
    $region27: #{bcn_forward.9} parent=1 // pred_check_branch
      %848 = sbr.rel (0) target = $region29
    $region28: #{bcn_forward.9} parent=1 // pred_region
      %850 = vsyncadd [#allocation4], 0
      %s852 = sshll.u32 [#allocation3], 4
      %s853 = int_to_ptr.vmem [resolvable:$true] %s852
      %s854 = sshll.u32 %s6, 4
      %s855 = int_to_ptr.hbm [resolvable:$true] %s854
      %857 = dma.vmem_to_hbm [thread:$0]  %s853, 32, %s855, [#allocation4]
    $region29: #{bcn_forward.9} parent=1 // pred_fallthru
      _
    // Predicated region
    $region30: #{bcn_forward.9} parent=1 // pred_check
      _
    $region31: #{bcn_forward.9} parent=1 // pred_check_branch
      %859 = sbr.rel (0) target = $region33
    $region32: #{bcn_forward.9} parent=1 // pred_region
      %861 = vsyncadd [#allocation6], 0
      %s863 = sshll.u32 [#allocation5], 4
      %s864 = int_to_ptr.vmem [resolvable:$true] %s863
      %s865 = sshll.u32 %s7, 4
      %s866 = int_to_ptr.hbm [resolvable:$true] %s865
      %868 = dma.vmem_to_hbm [thread:$0]  %s864, 32, %s866, [#allocation6]
    $region33: #{bcn_forward.9} parent=1 // pred_fallthru
      _
    // Predicated region
    $region34: #{bcn_forward.9} parent=1 // pred_check
      _
    $region35: #{bcn_forward.9} parent=1 // pred_check_branch
      %870 = sbr.rel (0) target = $region37
    $region36: #{bcn_forward.9} parent=1 // pred_region
      %872 = dma.done [#allocation4], 32
    $region37: #{bcn_forward.9} parent=1 // pred_fallthru
      _
    // Predicated region
    $region38: #{bcn_forward.9} parent=1 // pred_check
      _
    $region39: #{bcn_forward.9} parent=1 // pred_check_branch
      %874 = sbr.rel (0) target = $region41
    $region40: #{bcn_forward.9} parent=1 // pred_region
      %876 = dma.done [#allocation6], 32
    $region41: #{bcn_forward.9} parent=1 // pred_fallthru
      _
    %877 = vsyncpa [#allocation4], 1
    %878 = vsyncpa [#allocation6], 1

</llo_original>
